<compile_context>
chip_gen: v7x
topology: tpu7x:2x2x1
jax: 0.10.0
libtpu: 0.0.40
codegen_flags: <defaults>
</compile_context>

<pallas_src>
import jax
import jax.numpy as jnp
from jax import lax
from jax.experimental import pallas as pl
from jax.experimental.pallas import tpu as pltpu


# ---------------------------------------------------------------------------
# Fused kernel: whole forward pass for ONE image per grid step.
# ---------------------------------------------------------------------------
def _cnn_fused_kernel(x_ref, m1_ref, b1_ref, m2_ref, b2_ref,
                      he1_ref, ho1_ref, we1_ref, wo1_ref,
                      he2_ref, ho2_ref, we2_ref, wo2_ref,
                      wfc1_ref, bfc1_ref, wfc2_ref, bfc2_ref,
                      o_ref):
    f32 = jnp.float32

    # --- conv1 + bias + ReLU: a1[oh, ow*6 + oc], shape [24, 144] ------------
    acc1 = jnp.dot(x_ref[0, 0:24, :], m1_ref[0], preferred_element_type=f32)
    for ki in range(1, 5):
        acc1 = acc1 + jnp.dot(x_ref[0, ki:ki + 24, :], m1_ref[ki],
                              preferred_element_type=f32)
    a1 = jnp.maximum(acc1 + b1_ref[...], 0.0)

    # --- 2x2 max pool: p1[h, w*6 + c], shape [12, 72] -----------------------
    c1 = jnp.maximum(jnp.dot(he1_ref[...], a1, preferred_element_type=f32),
                     jnp.dot(ho1_ref[...], a1, preferred_element_type=f32))
    p1 = jnp.maximum(jnp.dot(c1, we1_ref[...], preferred_element_type=f32),
                     jnp.dot(c1, wo1_ref[...], preferred_element_type=f32))

    # --- conv2 + bias + ReLU: a2[oh, ow*16 + oc], shape [8, 128] ------------
    acc2 = jnp.dot(p1[0:8, :], m2_ref[0], preferred_element_type=f32)
    for ki in range(1, 5):
        acc2 = acc2 + jnp.dot(p1[ki:ki + 8, :], m2_ref[ki],
                              preferred_element_type=f32)
    a2 = jnp.maximum(acc2 + b2_ref[...], 0.0)

    # --- 2x2 max pool: p2[i, j*16 + c], shape [4, 64] -----------------------
    c2 = jnp.maximum(jnp.dot(he2_ref[...], a2, preferred_element_type=f32),
                     jnp.dot(ho2_ref[...], a2, preferred_element_type=f32))
    p2 = jnp.maximum(jnp.dot(c2, we2_ref[...], preferred_element_type=f32),
                     jnp.dot(c2, wo2_ref[...], preferred_element_type=f32))

    # --- fc1 + ReLU (channel-major flatten folded into weight layout) -------
    h = jnp.dot(p2[0:1, :], wfc1_ref[0], preferred_element_type=f32)
    for i in range(1, 4):
        h = h + jnp.dot(p2[i:i + 1, :], wfc1_ref[i], preferred_element_type=f32)
    h = jnp.maximum(h + bfc1_ref[...], 0.0)

    # --- fc2 + ReLU ----------------------------------------------------------
    o = jnp.dot(h, wfc2_ref[...], preferred_element_type=f32) + bfc2_ref[...]
    o_ref[0] = jnp.maximum(o, 0.0)


# ---------------------------------------------------------------------------
# Host-side (one-time) weight / constant preparation.
# ---------------------------------------------------------------------------
def _band_conv_weights(w_oihw, in_w):
    """Banded (Toeplitz) matmul form of a valid stride-1 conv, per kernel row.

    Returns M of shape [KH, in_w*IC, out_w*OC] such that
        conv[oh, ow*OC + oc] = sum_ki  X[oh + ki, :] @ M[ki]
    where X[h, w*IC + ic] has channels innermost on the lane axis.
    """
    OC, IC, KH, KW = w_oihw.shape
    out_w = in_w - KW + 1
    kj = jnp.arange(in_w)[:, None] - jnp.arange(out_w)[None, :]      # [in_w, out_w]
    valid = (kj >= 0) & (kj < KW)
    kj_c = jnp.clip(kj, 0, KW - 1)
    wg = w_oihw[:, :, :, kj_c]                                       # [OC,IC,KH,in_w,out_w]
    wg = jnp.where(valid[None, None, None, :, :], wg, 0.0)
    wg = jnp.transpose(wg, (2, 3, 1, 4, 0))                          # [KH,in_w,IC,out_w,OC]
    return wg.reshape(KH, in_w * IC, out_w * OC).astype(jnp.float32)


def _row_pool_sel(out_h, offset):
    """[out_h, 2*out_h] 0/1 matrix selecting rows 2*i + offset."""
    r = jnp.arange(out_h)[:, None]
    c = jnp.arange(2 * out_h)[None, :]
    return (c == 2 * r + offset).astype(jnp.float32)


def _col_pool_sel(out_w, nc, offset):
    """[2*out_w*nc, out_w*nc] 0/1 matrix selecting lane groups (2j+offset)*nc+c."""
    m = (jnp.arange(2 * out_w)[:, None]
         == 2 * jnp.arange(out_w)[None, :] + offset).astype(jnp.float32)
    return jnp.kron(m, jnp.eye(nc, dtype=jnp.float32))


# ---------------------------------------------------------------------------
# Forward pass.
# ---------------------------------------------------------------------------
@jax.jit
def cnn_forward(params, x_nchw):
    B, C, H, W = x_nchw.shape
    assert (C, H, W) == (1, 28, 28), "LeNet-style Cnn expects 1x28x28 inputs"
    x = x_nchw[:, 0, :, :]                                       # [B, 28, 28]

    # Banded conv weights + lane-tiled biases (trivial one-time XLA prep).
    m1 = _band_conv_weights(params["w_conv1"], 28)               # [5, 28, 144]
    m2 = _band_conv_weights(params["w_conv2"], 12)               # [5, 72, 128]
    b1t = jnp.tile(params["b_conv1"], 24).reshape(1, 144)
    b2t = jnp.tile(params["b_conv2"], 8).reshape(1, 128)

    # 2x2 max-pool selection matrices.
    he1, ho1 = _row_pool_sel(12, 0), _row_pool_sel(12, 1)        # [12, 24]
    we1, wo1 = _col_pool_sel(12, 6, 0), _col_pool_sel(12, 6, 1)  # [144, 72]
    he2, ho2 = _row_pool_sel(4, 0), _row_pool_sel(4, 1)          # [4, 8]
    we2, wo2 = _col_pool_sel(4, 16, 0), _col_pool_sel(4, 16, 1)  # [128, 64]

    # fc1 weight: fold torch's channel-major flatten (index oc*16 + i*4 + j)
    # into layout [i, j*16 + oc, out_feature].
    wfc1 = params["w_fc1"].reshape(120, 16, 4, 4)                # [o, oc, i, j]
    wfc1 = jnp.transpose(wfc1, (2, 3, 1, 0)).reshape(4, 64, 120)
    bfc1 = params["b_fc1"].reshape(1, 120)
    wfc2 = params["w_fc2"].T                                     # [120, 84]
    bfc2 = params["b_fc2"].reshape(1, 84)

    full2 = lambda shape: pl.BlockSpec(shape, lambda b: (0, 0))
    full3 = lambda shape: pl.BlockSpec(shape, lambda b: (0, 0, 0))

    out = pl.pallas_call(
        _cnn_fused_kernel,
        out_shape=jax.ShapeDtypeStruct((B, 1, 84), jnp.float32),
        grid=(B,),
        in_specs=[
            pl.BlockSpec((1, 28, 28), lambda b: (b, 0, 0)),      # x (per image)
            full3((5, 28, 144)), full2((1, 144)),                # conv1
            full3((5, 72, 128)), full2((1, 128)),                # conv2
            full2((12, 24)), full2((12, 24)),                    # pool1 rows
            full2((144, 72)), full2((144, 72)),                  # pool1 cols
            full2((4, 8)), full2((4, 8)),                        # pool2 rows
            full2((128, 64)), full2((128, 64)),                  # pool2 cols
            full3((4, 64, 120)), full2((1, 120)),                # fc1
            full2((120, 84)), full2((1, 84)),                    # fc2
        ],
        out_specs=pl.BlockSpec((1, 1, 84), lambda b: (b, 0, 0)),
        compiler_params=pltpu.CompilerParams(
            dimension_semantics=("parallel",)),
    )(x, m1, b1t, m2, b2t, he1, ho1, we1, wo1, he2, ho2, we2, wo2,
      wfc1, bfc1, wfc2, bfc2)
    return out.reshape(B, 84)


# ---------------------------------------------------------------------------
# Parameters + pure-JAX reference (for a correctness self-check).
# ---------------------------------------------------------------------------
def init_params(key):
    ks = jax.random.split(key, 8)

    def u(k, shape, fan_in):
        bound = 1.0 / jnp.sqrt(jnp.float32(fan_in))
        return jax.random.uniform(k, shape, jnp.float32, -bound, bound)

    return {
        "w_conv1": u(ks[0], (6, 1, 5, 5), 1 * 25),
        "b_conv1": u(ks[1], (6,), 1 * 25),
        "w_conv2": u(ks[2], (16, 6, 5, 5), 6 * 25),
        "b_conv2": u(ks[3], (16,), 6 * 25),
        "w_fc1": u(ks[4], (120, 16 * 4 * 4), 16 * 4 * 4),
        "b_fc1": u(ks[5], (120,), 16 * 4 * 4),
        "w_fc2": u(ks[6], (84, 120), 120),
        "b_fc2": u(ks[7], (84,), 120),
        # NOTE: the PyTorch module defines fc3 but forward() never applies it.
    }


def _reference_forward(params, x_nchw):
    dn = ("NCHW", "OIHW", "NCHW")
    y = lax.conv_general_dilated(x_nchw, params["w_conv1"], (1, 1), "VALID",
                                 dimension_numbers=dn)
    y = jax.nn.relu(y + params["b_conv1"][None, :, None, None])
    y = lax.reduce_window(y, -jnp.inf, lax.max, (1, 1, 2, 2), (1, 1, 2, 2),
                          "VALID")
    y = lax.conv_general_dilated(y, params["w_conv2"], (1, 1), "VALID",
                                 dimension_numbers=dn)
    y = jax.nn.relu(y + params["b_conv2"][None, :, None, None])
    y = lax.reduce_window(y, -jnp.inf, lax.max, (1, 1, 2, 2), (1, 1, 2, 2),
                          "VALID")
    y = y.reshape(y.shape[0], -1)
    y = jax.nn.relu(y @ params["w_fc1"].T + params["b_fc1"])
    y = jax.nn.relu(y @ params["w_fc2"].T + params["b_fc2"])
    return y


if __name__ == "__main__":
    key = jax.random.PRNGKey(0)
    pkey, xkey = jax.random.split(key)
    params = init_params(pkey)
    # Input implied by fc1 (16*4*4 features): [B, 1, 28, 28] NCHW.
    x = jax.random.normal(xkey, (2, 1, 28, 28), dtype=jnp.float32)

    out = jax.block_until_ready(cnn_forward(params, x))
    assert out.shape == (2, 84), out.shape
    assert out.dtype == jnp.float32

    ref = jax.block_until_ready(_reference_forward(params, x))
    max_err = float(jnp.max(jnp.abs(out - ref)))
    assert jnp.allclose(out, ref, atol=2e-3, rtol=2e-3), max_err

    print("KERNEL_OK")
</pallas_src>

<mosaic_0001>
module attributes {stable_mosaic.version = 11 : i64} {
  func.func @_cnn_fused_kernel(%arg0: i32, %arg1: memref<1x28x28xf32, #tpu.memory_space<vmem>>, %arg2: memref<5x28x144xf32, #tpu.memory_space<vmem>>, %arg3: memref<1x144xf32, #tpu.memory_space<vmem>>, %arg4: memref<5x72x128xf32, #tpu.memory_space<vmem>>, %arg5: memref<1x128xf32, #tpu.memory_space<vmem>>, %arg6: memref<12x24xf32, #tpu.memory_space<vmem>>, %arg7: memref<12x24xf32, #tpu.memory_space<vmem>>, %arg8: memref<144x72xf32, #tpu.memory_space<vmem>>, %arg9: memref<144x72xf32, #tpu.memory_space<vmem>>, %arg10: memref<4x8xf32, #tpu.memory_space<vmem>>, %arg11: memref<4x8xf32, #tpu.memory_space<vmem>>, %arg12: memref<128x64xf32, #tpu.memory_space<vmem>>, %arg13: memref<128x64xf32, #tpu.memory_space<vmem>>, %arg14: memref<4x64x120xf32, #tpu.memory_space<vmem>>, %arg15: memref<1x120xf32, #tpu.memory_space<vmem>>, %arg16: memref<120x84xf32, #tpu.memory_space<vmem>>, %arg17: memref<1x84xf32, #tpu.memory_space<vmem>>, %arg18: memref<1x1x84xf32, #tpu.memory_space<vmem>>) attributes {dimension_semantics = [#tpu.dimension_semantics<parallel>], iteration_bounds = array<i64: 2>, scalar_prefetch = 0 : i64, scratch_operands = 0 : i64, tpu.core_type = #tpu.core_type<tc>, window_params = [{transform_indices = @transform_0, window_bounds = array<i64: 1, 28, 28>}, {pipeline_mode = #tpu.pipeline_mode<synchronous>, transform_indices = @transform_1, window_bounds = array<i64: 5, 28, 144>}, {pipeline_mode = #tpu.pipeline_mode<synchronous>, transform_indices = @transform_2, window_bounds = array<i64: 1, 144>}, {pipeline_mode = #tpu.pipeline_mode<synchronous>, transform_indices = @transform_3, window_bounds = array<i64: 5, 72, 128>}, {pipeline_mode = #tpu.pipeline_mode<synchronous>, transform_indices = @transform_4, window_bounds = array<i64: 1, 128>}, {pipeline_mode = #tpu.pipeline_mode<synchronous>, transform_indices = @transform_5, window_bounds = array<i64: 12, 24>}, {pipeline_mode = #tpu.pipeline_mode<synchronous>, transform_indices = @transform_6, window_bounds = array<i64: 12, 24>}, {pipeline_mode = #tpu.pipeline_mode<synchronous>, transform_indices = @transform_7, window_bounds = array<i64: 144, 72>}, {pipeline_mode = #tpu.pipeline_mode<synchronous>, transform_indices = @transform_8, window_bounds = array<i64: 144, 72>}, {pipeline_mode = #tpu.pipeline_mode<synchronous>, transform_indices = @transform_9, window_bounds = array<i64: 4, 8>}, {pipeline_mode = #tpu.pipeline_mode<synchronous>, transform_indices = @transform_10, window_bounds = array<i64: 4, 8>}, {pipeline_mode = #tpu.pipeline_mode<synchronous>, transform_indices = @transform_11, window_bounds = array<i64: 128, 64>}, {pipeline_mode = #tpu.pipeline_mode<synchronous>, transform_indices = @transform_12, window_bounds = array<i64: 128, 64>}, {pipeline_mode = #tpu.pipeline_mode<synchronous>, transform_indices = @transform_13, window_bounds = array<i64: 4, 64, 120>}, {pipeline_mode = #tpu.pipeline_mode<synchronous>, transform_indices = @transform_14, window_bounds = array<i64: 1, 120>}, {pipeline_mode = #tpu.pipeline_mode<synchronous>, transform_indices = @transform_15, window_bounds = array<i64: 120, 84>}, {pipeline_mode = #tpu.pipeline_mode<synchronous>, transform_indices = @transform_16, window_bounds = array<i64: 1, 84>}, {transform_indices = @transform_17, window_bounds = array<i64: 1, 1, 84>}]} {
    %c0 = arith.constant 0 : index
    %c0_0 = arith.constant 0 : index
    %c0_1 = arith.constant 0 : index
    %0 = vector.load %arg1[%c0, %c0_0, %c0_1] : memref<1x28x28xf32, #tpu.memory_space<vmem>>, vector<1x24x28xf32>
    %1 = vector.shape_cast %0 : vector<1x24x28xf32> to vector<24x28xf32>
    %c0_2 = arith.constant 0 : index
    %c0_3 = arith.constant 0 : index
    %c0_4 = arith.constant 0 : index
    %2 = vector.load %arg2[%c0_2, %c0_3, %c0_4] : memref<5x28x144xf32, #tpu.memory_space<vmem>>, vector<1x28x144xf32>
    %3 = vector.shape_cast %2 : vector<1x28x144xf32> to vector<28x144xf32>
    %cst = arith.constant dense<0.000000e+00> : vector<24x144xf32>
    %4 = tpu.matmul %1, %3, %cst {dimension_numbers = #tpu.dot_dimension_numbers<[1], [0], [0], [1], [0, 0, 1, 1], [], []>} : vector<24x28xf32>, vector<28x144xf32>, vector<24x144xf32> -> vector<24x144xf32>
    %c0_5 = arith.constant 0 : index
    %c1 = arith.constant 1 : index
    %c0_6 = arith.constant 0 : index
    %5 = vector.load %arg1[%c0_5, %c1, %c0_6] : memref<1x28x28xf32, #tpu.memory_space<vmem>>, vector<1x24x28xf32>
    %6 = vector.shape_cast %5 : vector<1x24x28xf32> to vector<24x28xf32>
    %c1_7 = arith.constant 1 : index
    %c0_8 = arith.constant 0 : index
    %c0_9 = arith.constant 0 : index
    %7 = vector.load %arg2[%c1_7, %c0_8, %c0_9] : memref<5x28x144xf32, #tpu.memory_space<vmem>>, vector<1x28x144xf32>
    %8 = vector.shape_cast %7 : vector<1x28x144xf32> to vector<28x144xf32>
    %cst_10 = arith.constant dense<0.000000e+00> : vector<24x144xf32>
    %9 = tpu.matmul %6, %8, %cst_10 {dimension_numbers = #tpu.dot_dimension_numbers<[1], [0], [0], [1], [0, 0, 1, 1], [], []>} : vector<24x28xf32>, vector<28x144xf32>, vector<24x144xf32> -> vector<24x144xf32>
    %10 = arith.addf %4, %9 : vector<24x144xf32>
    %c0_11 = arith.constant 0 : index
    %c2 = arith.constant 2 : index
    %c0_12 = arith.constant 0 : index
    %11 = vector.load %arg1[%c0_11, %c2, %c0_12] : memref<1x28x28xf32, #tpu.memory_space<vmem>>, vector<1x24x28xf32>
    %12 = vector.shape_cast %11 : vector<1x24x28xf32> to vector<24x28xf32>
    %c2_13 = arith.constant 2 : index
    %c0_14 = arith.constant 0 : index
    %c0_15 = arith.constant 0 : index
    %13 = vector.load %arg2[%c2_13, %c0_14, %c0_15] : memref<5x28x144xf32, #tpu.memory_space<vmem>>, vector<1x28x144xf32>
    %14 = vector.shape_cast %13 : vector<1x28x144xf32> to vector<28x144xf32>
    %cst_16 = arith.constant dense<0.000000e+00> : vector<24x144xf32>
    %15 = tpu.matmul %12, %14, %cst_16 {dimension_numbers = #tpu.dot_dimension_numbers<[1], [0], [0], [1], [0, 0, 1, 1], [], []>} : vector<24x28xf32>, vector<28x144xf32>, vector<24x144xf32> -> vector<24x144xf32>
    %16 = arith.addf %10, %15 : vector<24x144xf32>
    %c0_17 = arith.constant 0 : index
    %c3 = arith.constant 3 : index
    %c0_18 = arith.constant 0 : index
    %17 = vector.load %arg1[%c0_17, %c3, %c0_18] : memref<1x28x28xf32, #tpu.memory_space<vmem>>, vector<1x24x28xf32>
    %18 = vector.shape_cast %17 : vector<1x24x28xf32> to vector<24x28xf32>
    %c3_19 = arith.constant 3 : index
    %c0_20 = arith.constant 0 : index
    %c0_21 = arith.constant 0 : index
    %19 = vector.load %arg2[%c3_19, %c0_20, %c0_21] : memref<5x28x144xf32, #tpu.memory_space<vmem>>, vector<1x28x144xf32>
    %20 = vector.shape_cast %19 : vector<1x28x144xf32> to vector<28x144xf32>
    %cst_22 = arith.constant dense<0.000000e+00> : vector<24x144xf32>
    %21 = tpu.matmul %18, %20, %cst_22 {dimension_numbers = #tpu.dot_dimension_numbers<[1], [0], [0], [1], [0, 0, 1, 1], [], []>} : vector<24x28xf32>, vector<28x144xf32>, vector<24x144xf32> -> vector<24x144xf32>
    %22 = arith.addf %16, %21 : vector<24x144xf32>
    %c0_23 = arith.constant 0 : index
    %c4 = arith.constant 4 : index
    %c0_24 = arith.constant 0 : index
    %23 = vector.load %arg1[%c0_23, %c4, %c0_24] : memref<1x28x28xf32, #tpu.memory_space<vmem>>, vector<1x24x28xf32>
    %24 = vector.shape_cast %23 : vector<1x24x28xf32> to vector<24x28xf32>
    %c4_25 = arith.constant 4 : index
    %c0_26 = arith.constant 0 : index
    %c0_27 = arith.constant 0 : index
    %25 = vector.load %arg2[%c4_25, %c0_26, %c0_27] : memref<5x28x144xf32, #tpu.memory_space<vmem>>, vector<1x28x144xf32>
    %26 = vector.shape_cast %25 : vector<1x28x144xf32> to vector<28x144xf32>
    %cst_28 = arith.constant dense<0.000000e+00> : vector<24x144xf32>
    %27 = tpu.matmul %24, %26, %cst_28 {dimension_numbers = #tpu.dot_dimension_numbers<[1], [0], [0], [1], [0, 0, 1, 1], [], []>} : vector<24x28xf32>, vector<28x144xf32>, vector<24x144xf32> -> vector<24x144xf32>
    %28 = arith.addf %22, %27 : vector<24x144xf32>
    %c0_29 = arith.constant 0 : index
    %c0_30 = arith.constant 0 : index
    %29 = vector.load %arg3[%c0_29, %c0_30] : memref<1x144xf32, #tpu.memory_space<vmem>>, vector<1x144xf32>
    %30 = vector.broadcast %29 : vector<1x144xf32> to vector<24x144xf32>
    %31 = arith.addf %28, %30 : vector<24x144xf32>
    %cst_31 = arith.constant 0.000000e+00 : f32
    %32 = vector.broadcast %cst_31 : f32 to vector<24x144xf32>
    %33 = arith.maximumf %31, %32 : vector<24x144xf32>
    %c0_32 = arith.constant 0 : index
    %c0_33 = arith.constant 0 : index
    %34 = vector.load %arg6[%c0_32, %c0_33] : memref<12x24xf32, #tpu.memory_space<vmem>>, vector<12x24xf32>
    %cst_34 = arith.constant dense<0.000000e+00> : vector<12x144xf32>
    %35 = tpu.matmul %34, %33, %cst_34 {dimension_numbers = #tpu.dot_dimension_numbers<[1], [0], [0], [1], [0, 0, 1, 1], [], []>} : vector<12x24xf32>, vector<24x144xf32>, vector<12x144xf32> -> vector<12x144xf32>
    %c0_35 = arith.constant 0 : index
    %c0_36 = arith.constant 0 : index
    %36 = vector.load %arg7[%c0_35, %c0_36] : memref<12x24xf32, #tpu.memory_space<vmem>>, vector<12x24xf32>
    %cst_37 = arith.constant dense<0.000000e+00> : vector<12x144xf32>
    %37 = tpu.matmul %36, %33, %cst_37 {dimension_numbers = #tpu.dot_dimension_numbers<[1], [0], [0], [1], [0, 0, 1, 1], [], []>} : vector<12x24xf32>, vector<24x144xf32>, vector<12x144xf32> -> vector<12x144xf32>
    %38 = arith.maximumf %35, %37 : vector<12x144xf32>
    %c0_38 = arith.constant 0 : index
    %c0_39 = arith.constant 0 : index
    %39 = vector.load %arg8[%c0_38, %c0_39] : memref<144x72xf32, #tpu.memory_space<vmem>>, vector<144x72xf32>
    %cst_40 = arith.constant dense<0.000000e+00> : vector<12x72xf32>
    %40 = tpu.matmul %38, %39, %cst_40 {dimension_numbers = #tpu.dot_dimension_numbers<[1], [0], [0], [1], [0, 0, 1, 1], [], []>} : vector<12x144xf32>, vector<144x72xf32>, vector<12x72xf32> -> vector<12x72xf32>
    %c0_41 = arith.constant 0 : index
    %c0_42 = arith.constant 0 : index
    %41 = vector.load %arg9[%c0_41, %c0_42] : memref<144x72xf32, #tpu.memory_space<vmem>>, vector<144x72xf32>
    %cst_43 = arith.constant dense<0.000000e+00> : vector<12x72xf32>
    %42 = tpu.matmul %38, %41, %cst_43 {dimension_numbers = #tpu.dot_dimension_numbers<[1], [0], [0], [1], [0, 0, 1, 1], [], []>} : vector<12x144xf32>, vector<144x72xf32>, vector<12x72xf32> -> vector<12x72xf32>
    %43 = arith.maximumf %40, %42 : vector<12x72xf32>
    %44 = vector.extract_strided_slice %43 {offsets = [0, 0], sizes = [8, 72], strides = [1, 1]} : vector<12x72xf32> to vector<8x72xf32>
    %c0_44 = arith.constant 0 : index
    %c0_45 = arith.constant 0 : index
    %c0_46 = arith.constant 0 : index
    %45 = vector.load %arg4[%c0_44, %c0_45, %c0_46] : memref<5x72x128xf32, #tpu.memory_space<vmem>>, vector<1x72x128xf32>
    %46 = vector.shape_cast %45 : vector<1x72x128xf32> to vector<72x128xf32>
    %cst_47 = arith.constant dense<0.000000e+00> : vector<8x128xf32>
    %47 = tpu.matmul %44, %46, %cst_47 {dimension_numbers = #tpu.dot_dimension_numbers<[1], [0], [0], [1], [0, 0, 1, 1], [], []>} : vector<8x72xf32>, vector<72x128xf32>, vector<8x128xf32> -> vector<8x128xf32>
    %48 = vector.extract_strided_slice %43 {offsets = [1, 0], sizes = [8, 72], strides = [1, 1]} : vector<12x72xf32> to vector<8x72xf32>
    %c1_48 = arith.constant 1 : index
    %c0_49 = arith.constant 0 : index
    %c0_50 = arith.constant 0 : index
    %49 = vector.load %arg4[%c1_48, %c0_49, %c0_50] : memref<5x72x128xf32, #tpu.memory_space<vmem>>, vector<1x72x128xf32>
    %50 = vector.shape_cast %49 : vector<1x72x128xf32> to vector<72x128xf32>
    %cst_51 = arith.constant dense<0.000000e+00> : vector<8x128xf32>
    %51 = tpu.matmul %48, %50, %cst_51 {dimension_numbers = #tpu.dot_dimension_numbers<[1], [0], [0], [1], [0, 0, 1, 1], [], []>} : vector<8x72xf32>, vector<72x128xf32>, vector<8x128xf32> -> vector<8x128xf32>
    %52 = arith.addf %47, %51 : vector<8x128xf32>
    %53 = vector.extract_strided_slice %43 {offsets = [2, 0], sizes = [8, 72], strides = [1, 1]} : vector<12x72xf32> to vector<8x72xf32>
    %c2_52 = arith.constant 2 : index
    %c0_53 = arith.constant 0 : index
    %c0_54 = arith.constant 0 : index
    %54 = vector.load %arg4[%c2_52, %c0_53, %c0_54] : memref<5x72x128xf32, #tpu.memory_space<vmem>>, vector<1x72x128xf32>
    %55 = vector.shape_cast %54 : vector<1x72x128xf32> to vector<72x128xf32>
    %cst_55 = arith.constant dense<0.000000e+00> : vector<8x128xf32>
    %56 = tpu.matmul %53, %55, %cst_55 {dimension_numbers = #tpu.dot_dimension_numbers<[1], [0], [0], [1], [0, 0, 1, 1], [], []>} : vector<8x72xf32>, vector<72x128xf32>, vector<8x128xf32> -> vector<8x128xf32>
    %57 = arith.addf %52, %56 : vector<8x128xf32>
    %58 = vector.extract_strided_slice %43 {offsets = [3, 0], sizes = [8, 72], strides = [1, 1]} : vector<12x72xf32> to vector<8x72xf32>
    %c3_56 = arith.constant 3 : index
    %c0_57 = arith.constant 0 : index
    %c0_58 = arith.constant 0 : index
    %59 = vector.load %arg4[%c3_56, %c0_57, %c0_58] : memref<5x72x128xf32, #tpu.memory_space<vmem>>, vector<1x72x128xf32>
    %60 = vector.shape_cast %59 : vector<1x72x128xf32> to vector<72x128xf32>
    %cst_59 = arith.constant dense<0.000000e+00> : vector<8x128xf32>
    %61 = tpu.matmul %58, %60, %cst_59 {dimension_numbers = #tpu.dot_dimension_numbers<[1], [0], [0], [1], [0, 0, 1, 1], [], []>} : vector<8x72xf32>, vector<72x128xf32>, vector<8x128xf32> -> vector<8x128xf32>
    %62 = arith.addf %57, %61 : vector<8x128xf32>
    %63 = vector.extract_strided_slice %43 {offsets = [4, 0], sizes = [8, 72], strides = [1, 1]} : vector<12x72xf32> to vector<8x72xf32>
    %c4_60 = arith.constant 4 : index
    %c0_61 = arith.constant 0 : index
    %c0_62 = arith.constant 0 : index
    %64 = vector.load %arg4[%c4_60, %c0_61, %c0_62] : memref<5x72x128xf32, #tpu.memory_space<vmem>>, vector<1x72x128xf32>
    %65 = vector.shape_cast %64 : vector<1x72x128xf32> to vector<72x128xf32>
    %cst_63 = arith.constant dense<0.000000e+00> : vector<8x128xf32>
    %66 = tpu.matmul %63, %65, %cst_63 {dimension_numbers = #tpu.dot_dimension_numbers<[1], [0], [0], [1], [0, 0, 1, 1], [], []>} : vector<8x72xf32>, vector<72x128xf32>, vector<8x128xf32> -> vector<8x128xf32>
    %67 = arith.addf %62, %66 : vector<8x128xf32>
    %c0_64 = arith.constant 0 : index
    %c0_65 = arith.constant 0 : index
    %68 = vector.load %arg5[%c0_64, %c0_65] : memref<1x128xf32, #tpu.memory_space<vmem>>, vector<1x128xf32>
    %69 = vector.broadcast %68 : vector<1x128xf32> to vector<8x128xf32>
    %70 = arith.addf %67, %69 : vector<8x128xf32>
    %cst_66 = arith.constant 0.000000e+00 : f32
    %71 = vector.broadcast %cst_66 : f32 to vector<8x128xf32>
    %72 = arith.maximumf %70, %71 : vector<8x128xf32>
    %c0_67 = arith.constant 0 : index
    %c0_68 = arith.constant 0 : index
    %73 = vector.load %arg10[%c0_67, %c0_68] : memref<4x8xf32, #tpu.memory_space<vmem>>, vector<4x8xf32>
    %cst_69 = arith.constant dense<0.000000e+00> : vector<4x128xf32>
    %74 = tpu.matmul %73, %72, %cst_69 {dimension_numbers = #tpu.dot_dimension_numbers<[1], [0], [0], [1], [0, 0, 1, 1], [], []>} : vector<4x8xf32>, vector<8x128xf32>, vector<4x128xf32> -> vector<4x128xf32>
    %c0_70 = arith.constant 0 : index
    %c0_71 = arith.constant 0 : index
    %75 = vector.load %arg11[%c0_70, %c0_71] : memref<4x8xf32, #tpu.memory_space<vmem>>, vector<4x8xf32>
    %cst_72 = arith.constant dense<0.000000e+00> : vector<4x128xf32>
    %76 = tpu.matmul %75, %72, %cst_72 {dimension_numbers = #tpu.dot_dimension_numbers<[1], [0], [0], [1], [0, 0, 1, 1], [], []>} : vector<4x8xf32>, vector<8x128xf32>, vector<4x128xf32> -> vector<4x128xf32>
    %77 = arith.maximumf %74, %76 : vector<4x128xf32>
    %c0_73 = arith.constant 0 : index
    %c0_74 = arith.constant 0 : index
    %78 = vector.load %arg12[%c0_73, %c0_74] : memref<128x64xf32, #tpu.memory_space<vmem>>, vector<128x64xf32>
    %cst_75 = arith.constant dense<0.000000e+00> : vector<4x64xf32>
    %79 = tpu.matmul %77, %78, %cst_75 {dimension_numbers = #tpu.dot_dimension_numbers<[1], [0], [0], [1], [0, 0, 1, 1], [], []>} : vector<4x128xf32>, vector<128x64xf32>, vector<4x64xf32> -> vector<4x64xf32>
    %c0_76 = arith.constant 0 : index
    %c0_77 = arith.constant 0 : index
    %80 = vector.load %arg13[%c0_76, %c0_77] : memref<128x64xf32, #tpu.memory_space<vmem>>, vector<128x64xf32>
    %cst_78 = arith.constant dense<0.000000e+00> : vector<4x64xf32>
    %81 = tpu.matmul %77, %80, %cst_78 {dimension_numbers = #tpu.dot_dimension_numbers<[1], [0], [0], [1], [0, 0, 1, 1], [], []>} : vector<4x128xf32>, vector<128x64xf32>, vector<4x64xf32> -> vector<4x64xf32>
    %82 = arith.maximumf %79, %81 : vector<4x64xf32>
    %83 = vector.extract_strided_slice %82 {offsets = [0, 0], sizes = [1, 64], strides = [1, 1]} : vector<4x64xf32> to vector<1x64xf32>
    %c0_79 = arith.constant 0 : index
    %c0_80 = arith.constant 0 : index
    %c0_81 = arith.constant 0 : index
    %84 = vector.load %arg14[%c0_79, %c0_80, %c0_81] : memref<4x64x120xf32, #tpu.memory_space<vmem>>, vector<1x64x120xf32>
    %85 = vector.shape_cast %84 : vector<1x64x120xf32> to vector<64x120xf32>
    %cst_82 = arith.constant dense<0.000000e+00> : vector<1x120xf32>
    %86 = tpu.matmul %83, %85, %cst_82 {dimension_numbers = #tpu.dot_dimension_numbers<[1], [0], [0], [1], [0, 0, 1, 1], [], []>} : vector<1x64xf32>, vector<64x120xf32>, vector<1x120xf32> -> vector<1x120xf32>
    %87 = vector.extract_strided_slice %82 {offsets = [1, 0], sizes = [1, 64], strides = [1, 1]} : vector<4x64xf32> to vector<1x64xf32>
    %c1_83 = arith.constant 1 : index
    %c0_84 = arith.constant 0 : index
    %c0_85 = arith.constant 0 : index
    %88 = vector.load %arg14[%c1_83, %c0_84, %c0_85] : memref<4x64x120xf32, #tpu.memory_space<vmem>>, vector<1x64x120xf32>
    %89 = vector.shape_cast %88 : vector<1x64x120xf32> to vector<64x120xf32>
    %cst_86 = arith.constant dense<0.000000e+00> : vector<1x120xf32>
    %90 = tpu.matmul %87, %89, %cst_86 {dimension_numbers = #tpu.dot_dimension_numbers<[1], [0], [0], [1], [0, 0, 1, 1], [], []>} : vector<1x64xf32>, vector<64x120xf32>, vector<1x120xf32> -> vector<1x120xf32>
    %91 = arith.addf %86, %90 : vector<1x120xf32>
    %92 = vector.extract_strided_slice %82 {offsets = [2, 0], sizes = [1, 64], strides = [1, 1]} : vector<4x64xf32> to vector<1x64xf32>
    %c2_87 = arith.constant 2 : index
    %c0_88 = arith.constant 0 : index
    %c0_89 = arith.constant 0 : index
    %93 = vector.load %arg14[%c2_87, %c0_88, %c0_89] : memref<4x64x120xf32, #tpu.memory_space<vmem>>, vector<1x64x120xf32>
    %94 = vector.shape_cast %93 : vector<1x64x120xf32> to vector<64x120xf32>
    %cst_90 = arith.constant dense<0.000000e+00> : vector<1x120xf32>
    %95 = tpu.matmul %92, %94, %cst_90 {dimension_numbers = #tpu.dot_dimension_numbers<[1], [0], [0], [1], [0, 0, 1, 1], [], []>} : vector<1x64xf32>, vector<64x120xf32>, vector<1x120xf32> -> vector<1x120xf32>
    %96 = arith.addf %91, %95 : vector<1x120xf32>
    %97 = vector.extract_strided_slice %82 {offsets = [3, 0], sizes = [1, 64], strides = [1, 1]} : vector<4x64xf32> to vector<1x64xf32>
    %c3_91 = arith.constant 3 : index
    %c0_92 = arith.constant 0 : index
    %c0_93 = arith.constant 0 : index
    %98 = vector.load %arg14[%c3_91, %c0_92, %c0_93] : memref<4x64x120xf32, #tpu.memory_space<vmem>>, vector<1x64x120xf32>
    %99 = vector.shape_cast %98 : vector<1x64x120xf32> to vector<64x120xf32>
    %cst_94 = arith.constant dense<0.000000e+00> : vector<1x120xf32>
    %100 = tpu.matmul %97, %99, %cst_94 {dimension_numbers = #tpu.dot_dimension_numbers<[1], [0], [0], [1], [0, 0, 1, 1], [], []>} : vector<1x64xf32>, vector<64x120xf32>, vector<1x120xf32> -> vector<1x120xf32>
    %101 = arith.addf %96, %100 : vector<1x120xf32>
    %c0_95 = arith.constant 0 : index
    %c0_96 = arith.constant 0 : index
    %102 = vector.load %arg15[%c0_95, %c0_96] : memref<1x120xf32, #tpu.memory_space<vmem>>, vector<1x120xf32>
    %103 = arith.addf %101, %102 : vector<1x120xf32>
    %cst_97 = arith.constant 0.000000e+00 : f32
    %104 = vector.broadcast %cst_97 : f32 to vector<1x120xf32>
    %105 = arith.maximumf %103, %104 : vector<1x120xf32>
    %c0_98 = arith.constant 0 : index
    %c0_99 = arith.constant 0 : index
    %106 = vector.load %arg16[%c0_98, %c0_99] : memref<120x84xf32, #tpu.memory_space<vmem>>, vector<120x84xf32>
    %cst_100 = arith.constant dense<0.000000e+00> : vector<1x84xf32>
    %107 = tpu.matmul %105, %106, %cst_100 {dimension_numbers = #tpu.dot_dimension_numbers<[1], [0], [0], [1], [0, 0, 1, 1], [], []>} : vector<1x120xf32>, vector<120x84xf32>, vector<1x84xf32> -> vector<1x84xf32>
    %c0_101 = arith.constant 0 : index
    %c0_102 = arith.constant 0 : index
    %108 = vector.load %arg17[%c0_101, %c0_102] : memref<1x84xf32, #tpu.memory_space<vmem>>, vector<1x84xf32>
    %109 = arith.addf %107, %108 : vector<1x84xf32>
    %cst_103 = arith.constant 0.000000e+00 : f32
    %110 = vector.broadcast %cst_103 : f32 to vector<1x84xf32>
    %111 = arith.maximumf %109, %110 : vector<1x84xf32>
    %c0_104 = arith.constant 0 : index
    %c0_105 = arith.constant 0 : index
    %c0_106 = arith.constant 0 : index
    %112 = vector.load %arg18[%c0_104, %c0_105, %c0_106] : memref<1x1x84xf32, #tpu.memory_space<vmem>>, vector<1x1x84xf32>
    %113 = vector.shape_cast %112 : vector<1x1x84xf32> to vector<1x84xf32>
    %114 = vector.shape_cast %111 : vector<1x84xf32> to vector<1x1x84xf32>
    tpu.vector_store %arg18[%c0_104, %c0_105, %c0_106], %114 {strides = array<i32>} : memref<1x1x84xf32, #tpu.memory_space<vmem>>, vector<1x1x84xf32>,
    return
  }
  func.func @transform_0(%arg0: i32) -> (i32, i32, i32) {
    %c0_i32 = arith.constant 0 : i32
    %c0_i32_0 = arith.constant 0 : i32
    %c0_i32_1 = arith.constant 0 : i32
    return %arg0, %c0_i32, %c0_i32_0 : i32, i32, i32
  }
  func.func @transform_1(%arg0: i32) -> (i32, i32, i32) {
    %c0_i32 = arith.constant 0 : i32
    %c0_i32_0 = arith.constant 0 : i32
    %c0_i32_1 = arith.constant 0 : i32
    %c0_i32_2 = arith.constant 0 : i32
    return %c0_i32, %c0_i32_0, %c0_i32_1 : i32, i32, i32
  }
  func.func @transform_2(%arg0: i32) -> (i32, i32) {
    %c0_i32 = arith.constant 0 : i32
    %c0_i32_0 = arith.constant 0 : i32
    %c0_i32_1 = arith.constant 0 : i32
    return %c0_i32, %c0_i32_0 : i32, i32
  }
  func.func @transform_3(%arg0: i32) -> (i32, i32, i32) {
    %c0_i32 = arith.constant 0 : i32
    %c0_i32_0 = arith.constant 0 : i32
    %c0_i32_1 = arith.constant 0 : i32
    %c0_i32_2 = arith.constant 0 : i32
    return %c0_i32, %c0_i32_0, %c0_i32_1 : i32, i32, i32
  }
  func.func @transform_4(%arg0: i32) -> (i32, i32) {
    %c0_i32 = arith.constant 0 : i32
    %c0_i32_0 = arith.constant 0 : i32
    %c0_i32_1 = arith.constant 0 : i32
    return %c0_i32, %c0_i32_0 : i32, i32
  }
  func.func @transform_5(%arg0: i32) -> (i32, i32) {
    %c0_i32 = arith.constant 0 : i32
    %c0_i32_0 = arith.constant 0 : i32
    %c0_i32_1 = arith.constant 0 : i32
    return %c0_i32, %c0_i32_0 : i32, i32
  }
  func.func @transform_6(%arg0: i32) -> (i32, i32) {
    %c0_i32 = arith.constant 0 : i32
    %c0_i32_0 = arith.constant 0 : i32
    %c0_i32_1 = arith.constant 0 : i32
    return %c0_i32, %c0_i32_0 : i32, i32
  }
  func.func @transform_7(%arg0: i32) -> (i32, i32) {
    %c0_i32 = arith.constant 0 : i32
    %c0_i32_0 = arith.constant 0 : i32
    %c0_i32_1 = arith.constant 0 : i32
    return %c0_i32, %c0_i32_0 : i32, i32
  }
  func.func @transform_8(%arg0: i32) -> (i32, i32) {
    %c0_i32 = arith.constant 0 : i32
    %c0_i32_0 = arith.constant 0 : i32
    %c0_i32_1 = arith.constant 0 : i32
    return %c0_i32, %c0_i32_0 : i32, i32
  }
  func.func @transform_9(%arg0: i32) -> (i32, i32) {
    %c0_i32 = arith.constant 0 : i32
    %c0_i32_0 = arith.constant 0 : i32
    %c0_i32_1 = arith.constant 0 : i32
    return %c0_i32, %c0_i32_0 : i32, i32
  }
  func.func @transform_10(%arg0: i32) -> (i32, i32) {
    %c0_i32 = arith.constant 0 : i32
    %c0_i32_0 = arith.constant 0 : i32
    %c0_i32_1 = arith.constant 0 : i32
    return %c0_i32, %c0_i32_0 : i32, i32
  }
  func.func @transform_11(%arg0: i32) -> (i32, i32) {
    %c0_i32 = arith.constant 0 : i32
    %c0_i32_0 = arith.constant 0 : i32
    %c0_i32_1 = arith.constant 0 : i32
    return %c0_i32, %c0_i32_0 : i32, i32
  }
  func.func @transform_12(%arg0: i32) -> (i32, i32) {
    %c0_i32 = arith.constant 0 : i32
    %c0_i32_0 = arith.constant 0 : i32
    %c0_i32_1 = arith.constant 0 : i32
    return %c0_i32, %c0_i32_0 : i32, i32
  }
  func.func @transform_13(%arg0: i32) -> (i32, i32, i32) {
    %c0_i32 = arith.constant 0 : i32
    %c0_i32_0 = arith.constant 0 : i32
    %c0_i32_1 = arith.constant 0 : i32
    %c0_i32_2 = arith.constant 0 : i32
    return %c0_i32, %c0_i32_0, %c0_i32_1 : i32, i32, i32
  }
  func.func @transform_14(%arg0: i32) -> (i32, i32) {
    %c0_i32 = arith.constant 0 : i32
    %c0_i32_0 = arith.constant 0 : i32
    %c0_i32_1 = arith.constant 0 : i32
    return %c0_i32, %c0_i32_0 : i32, i32
  }
  func.func @transform_15(%arg0: i32) -> (i32, i32) {
    %c0_i32 = arith.constant 0 : i32
    %c0_i32_0 = arith.constant 0 : i32
    %c0_i32_1 = arith.constant 0 : i32
    return %c0_i32, %c0_i32_0 : i32, i32
  }
  func.func @transform_16(%arg0: i32) -> (i32, i32) {
    %c0_i32 = arith.constant 0 : i32
    %c0_i32_0 = arith.constant 0 : i32
    %c0_i32_1 = arith.constant 0 : i32
    return %c0_i32, %c0_i32_0 : i32, i32
  }
  func.func @transform_17(%arg0: i32) -> (i32, i32, i32) {
    %c0_i32 = arith.constant 0 : i32
    %c0_i32_0 = arith.constant 0 : i32
    %c0_i32_1 = arith.constant 0 : i32
    return %arg0, %c0_i32, %c0_i32_0 : i32, i32, i32
  }
}

</mosaic_0001>

<llo_original>
// kernel: tile.13
$region0: #{tile.13}
  #allocation0 [shape = 's32[1]{0}', space=sflag, size = 0x4, scoped, tag = 'scoped memory for tile.13']
  %s0 = inlined_call_operand.vmem [shape: f32[6], index: 0, kind: input, shape index: {}]
  %s1 = inlined_call_operand.vmem [shape: f32[24,6], index: 1, kind: output, shape index: {}]
  // Predicated region
  $region2: #{tile.13} parent=0 // pred_check
    _
  $region3: #{tile.13} parent=0 // pred_check_branch
    %3 = sbr.rel (0) target = $region5
  $region4: #{tile.13} parent=0 // pred_region
    _
  $region5: #{tile.13} parent=0 // pred_fallthru
    _
  %v4 = vld [vmem:[%s0] ss:$0 sm:$0xff]
  %5 = vst [vmem:[%s1] sm:$0xff] %v4
  %s6 = scalar_lea.vmem %s1, 8
  %7 = vst [vmem:[%s6] sm:$0xff] %v4
  %s8 = scalar_lea.vmem %s1, 16
  %9 = vst [vmem:[%s8] sm:$0xff] %v4

// kernel: tile.14
$region0: #{tile.14}
  %s0 = inlined_call_operand.vmem [shape: f32[24,6], index: 0, kind: input, shape index: {}]
  %s1 = inlined_call_operand.vmem [shape: f32[1,144], index: 1, kind: output, shape index: {}]
  $region1: #{tile.14} parent=0
    #allocation0 [shape = 'u8[8192]{0}', space=vmem, size = 0x2000, scoped, tag = 'scoped mem for output reshape']
    %v2 = vld [vmem:[%s0] sm:$0x1]
    %vm3 = vcmask 48128
    %4 = vst.msk [vmem:[#allocation0] sm:$0x1] %vm3, %v2
    %s5 = scalar_lea.vmem %s0, 21
    %v6 = vld [vmem:[%s5] sm:$0x1]
    %s7 = scalar_lea.vmem %s0, 21
    %v8 = vld [vmem:[%s7] sm:$0x1]
    %vm9 = vcmask 15360
    %v10 = vsel %vm9, %v8, %v6
    %11 = vrot.lane.b32.xlu0 %v10, 126
    %v12 = vpop.permute.xlu0 %11
    %vm13 = vcmask 31744
    %s14 = scalar_lea.vmem [#allocation0], 8
    %15 = vst.msk [vmem:[%s14] sm:$0x1] %vm13, %v12
    %vm16 = vcmask 1048560
    %17 = vst.msk [vmem:[#allocation0] sm:$0x1] %vm16, %v12
    %s18 = scalar_lea.vmem %s0, 20
    %v19 = vld [vmem:[%s18] sm:$0x1]
    %20 = vrot.lane.b32.xlu0 %v19, 120
    %v21 = vpop.permute.xlu0 %20
    %vm22 = vcmask 1032128
    %23 = vst.msk [vmem:[#allocation0] sm:$0x1] %vm22, %v21
    %s24 = scalar_lea.vmem %s0, 19
    %v25 = vld [vmem:[%s24] sm:$0x1]
    %26 = vrot.lane.b32.xlu0 %v25, 114
    %v27 = vpop.permute.xlu0 %26
    %vm28 = vcmask 982928
    %29 = vst.msk [vmem:[#allocation0] sm:$0x1] %vm28, %v27
    %s30 = scalar_lea.vmem %s0, 18
    %v31 = vld [vmem:[%s30] sm:$0x1]
    %32 = vrot.lane.b32.xlu0 %v31, 108
    %v33 = vpop.permute.xlu0 %32
    %vm34 = vcmask 933728
    %35 = vst.msk [vmem:[#allocation0] sm:$0x1] %vm34, %v33
    %s36 = scalar_lea.vmem %s0, 17
    %v37 = vld [vmem:[%s36] sm:$0x1]
    %38 = vrot.lane.b32.xlu0 %v37, 102
    %v39 = vpop.permute.xlu0 %38
    %vm40 = vcmask 884528
    %41 = vst.msk [vmem:[#allocation0] sm:$0x1] %vm40, %v39
    %s42 = scalar_lea.vmem %s0, 16
    %v43 = vld [vmem:[%s42] sm:$0x1]
    %44 = vrot.lane.b32.xlu0 %v43, 96
    %v45 = vpop.permute.xlu0 %44
    %vm46 = vcmask 835328
    %47 = vst.msk [vmem:[#allocation0] sm:$0x1] %vm46, %v45
    %s48 = scalar_lea.vmem %s0, 15
    %v49 = vld [vmem:[%s48] sm:$0x1]
    %50 = vrot.lane.b32.xlu0 %v49, 90
    %v51 = vpop.permute.xlu0 %50
    %vm52 = vcmask 786128
    %53 = vst.msk [vmem:[#allocation0] sm:$0x1] %vm52, %v51
    %s54 = scalar_lea.vmem %s0, 14
    %v55 = vld [vmem:[%s54] sm:$0x1]
    %56 = vrot.lane.b32.xlu0 %v55, 84
    %v57 = vpop.permute.xlu0 %56
    %vm58 = vcmask 736928
    %59 = vst.msk [vmem:[#allocation0] sm:$0x1] %vm58, %v57
    %s60 = scalar_lea.vmem %s0, 13
    %v61 = vld [vmem:[%s60] sm:$0x1]
    %62 = vrot.lane.b32.xlu0 %v61, 78
    %v63 = vpop.permute.xlu0 %62
    %vm64 = vcmask 687728
    %65 = vst.msk [vmem:[#allocation0] sm:$0x1] %vm64, %v63
    %s66 = scalar_lea.vmem %s0, 12
    %v67 = vld [vmem:[%s66] sm:$0x1]
    %68 = vrot.lane.b32.xlu0 %v67, 72
    %v69 = vpop.permute.xlu0 %68
    %vm70 = vcmask 638528
    %71 = vst.msk [vmem:[#allocation0] sm:$0x1] %vm70, %v69
    %s72 = scalar_lea.vmem %s0, 11
    %v73 = vld [vmem:[%s72] sm:$0x1]
    %74 = vrot.lane.b32.xlu0 %v73, 66
    %v75 = vpop.permute.xlu0 %74
    %vm76 = vcmask 589328
    %77 = vst.msk [vmem:[#allocation0] sm:$0x1] %vm76, %v75
    %s78 = scalar_lea.vmem %s0, 10
    %v79 = vld [vmem:[%s78] sm:$0x1]
    %80 = vrot.lane.b32.xlu0 %v79, 60
    %v81 = vpop.permute.xlu0 %80
    %vm82 = vcmask 540128
    %83 = vst.msk [vmem:[#allocation0] sm:$0x1] %vm82, %v81
    %s84 = scalar_lea.vmem %s0, 9
    %v85 = vld [vmem:[%s84] sm:$0x1]
    %86 = vrot.lane.b32.xlu0 %v85, 54
    %v87 = vpop.permute.xlu0 %86
    %vm88 = vcmask 490928
    %89 = vst.msk [vmem:[#allocation0] sm:$0x1] %vm88, %v87
    %s90 = scalar_lea.vmem %s0, 8
    %v91 = vld [vmem:[%s90] sm:$0x1]
    %92 = vrot.lane.b32.xlu0 %v91, 48
    %v93 = vpop.permute.xlu0 %92
    %vm94 = vcmask 441728
    %95 = vst.msk [vmem:[#allocation0] sm:$0x1] %vm94, %v93
    %s96 = scalar_lea.vmem %s0, 7
    %v97 = vld [vmem:[%s96] sm:$0x1]
    %98 = vrot.lane.b32.xlu0 %v97, 42
    %v99 = vpop.permute.xlu0 %98
    %vm100 = vcmask 392528
    %101 = vst.msk [vmem:[#allocation0] sm:$0x1] %vm100, %v99
    %s102 = scalar_lea.vmem %s0, 6
    %v103 = vld [vmem:[%s102] sm:$0x1]
    %104 = vrot.lane.b32.xlu0 %v103, 36
    %v105 = vpop.permute.xlu0 %104
    %vm106 = vcmask 343328
    %107 = vst.msk [vmem:[#allocation0] sm:$0x1] %vm106, %v105
    %s108 = scalar_lea.vmem %s0, 5
    %v109 = vld [vmem:[%s108] sm:$0x1]
    %110 = vrot.lane.b32.xlu0 %v109, 30
    %v111 = vpop.permute.xlu0 %110
    %vm112 = vcmask 294128
    %113 = vst.msk [vmem:[#allocation0] sm:$0x1] %vm112, %v111
    %s114 = scalar_lea.vmem %s0, 4
    %v115 = vld [vmem:[%s114] sm:$0x1]
    %116 = vrot.lane.b32.xlu0 %v115, 24
    %v117 = vpop.permute.xlu0 %116
    %vm118 = vcmask 244928
    %119 = vst.msk [vmem:[#allocation0] sm:$0x1] %vm118, %v117
    %s120 = scalar_lea.vmem %s0, 3
    %v121 = vld [vmem:[%s120] sm:$0x1]
    %122 = vrot.lane.b32.xlu0 %v121, 18
    %v123 = vpop.permute.xlu0 %122
    %vm124 = vcmask 195728
    %125 = vst.msk [vmem:[#allocation0] sm:$0x1] %vm124, %v123
    %s126 = scalar_lea.vmem %s0, 2
    %v127 = vld [vmem:[%s126] sm:$0x1]
    %128 = vrot.lane.b32.xlu0 %v127, 12
    %v129 = vpop.permute.xlu0 %128
    %vm130 = vcmask 146528
    %131 = vst.msk [vmem:[#allocation0] sm:$0x1] %vm130, %v129
    %s132 = scalar_lea.vmem %s0, 23
    %v133 = vld [vmem:[%s132] sm:$0x1]
    %134 = vrot.lane.b32.xlu0 %v133, 10
    %v135 = vpop.permute.xlu0 %134
    %vm136 = vcmask 130128
    %s137 = scalar_lea.vmem [#allocation0], 8
    %138 = vst.msk [vmem:[%s137] sm:$0x1] %vm136, %v135
    %s139 = scalar_lea.vmem %s0, 1
    %v140 = vld [vmem:[%s139] sm:$0x1]
    %141 = vrot.lane.b32.xlu0 %v140, 6
    %v142 = vpop.permute.xlu0 %141
    %vm143 = vcmask 97328
    %144 = vst.msk [vmem:[#allocation0] sm:$0x1] %vm143, %v142
    %s145 = scalar_lea.vmem %s0, 22
    %v146 = vld [vmem:[%s145] sm:$0x1]
    %147 = vrot.lane.b32.xlu0 %v146, 4
    %v148 = vpop.permute.xlu0 %147
    %vm149 = vcmask 80928
    %s150 = scalar_lea.vmem [#allocation0], 8
    %151 = vst.msk [vmem:[%s150] sm:$0x1] %vm149, %v148
    %s153 = sshllo.u32 0, 1
    %v155 = vld [vmem:[#allocation0] sm:%s153]
    %s156 = sshllo.u32 0, 1
    %157 = vst [vmem:[%s1] sm:%s156] %v155
    %s158 = scalar_lea.vmem [#allocation0], 8
    %v159 = vld [vmem:[%s158] sm:%s153]
    %s160 = sshllo.u32 0, 1
    %s161 = scalar_lea.vmem %s1, 1
    %162 = vst [vmem:[%s161] sm:%s160] %v159

// kernel: tile.18
$region0: #{tile.18}
  #allocation0 [shape = 's32[1]{0}', space=sflag, size = 0x4, scoped, tag = 'scoped memory for tile.18']
  %s0 = inlined_call_operand.vmem [shape: f32[16], index: 0, kind: input, shape index: {}]
  %s1 = inlined_call_operand.vmem [shape: f32[8,16], index: 1, kind: output, shape index: {}]
  // Predicated region
  $region2: #{tile.18} parent=0 // pred_check
    _
  $region3: #{tile.18} parent=0 // pred_check_branch
    %3 = sbr.rel (0) target = $region5
  $region4: #{tile.18} parent=0 // pred_region
    _
  $region5: #{tile.18} parent=0 // pred_fallthru
    _
  %v4 = vld [vmem:[%s0] ss:$0 sm:$0xff]
  %5 = vst [vmem:[%s1] sm:$0xff] %v4

// kernel: tile.19
$region0: #{tile.19}
  %s0 = inlined_call_operand.vmem [shape: f32[8,16], index: 0, kind: input, shape index: {}]
  %s1 = inlined_call_operand.vmem [shape: f32[1,128], index: 1, kind: output, shape index: {}]
  $region1: #{tile.19} parent=0
    #allocation0 [shape = 'u8[4096]{0}', space=vmem, size = 0x1000, scoped, tag = 'scoped mem for output reshape']
    %v2 = vld [vmem:[%s0] sm:$0x1]
    %vm3 = vcmask 130048
    %4 = vst.msk [vmem:[#allocation0] sm:$0x1] %vm3, %v2
    %s5 = scalar_lea.vmem %s0, 7
    %v6 = vld [vmem:[%s5] sm:$0x1]
    %7 = vrot.lane.b32.xlu0 %v6, 112
    %v8 = vpop.permute.xlu0 %7
    %vm9 = vcmask 1048448
    %10 = vst.msk [vmem:[#allocation0] sm:$0x1] %vm9, %v8
    %s11 = scalar_lea.vmem %s0, 6
    %v12 = vld [vmem:[%s11] sm:$0x1]
    %13 = vrot.lane.b32.xlu0 %v12, 96
    %v14 = vpop.permute.xlu0 %13
    %vm15 = vcmask 917248
    %16 = vst.msk [vmem:[#allocation0] sm:$0x1] %vm15, %v14
    %s17 = scalar_lea.vmem %s0, 5
    %v18 = vld [vmem:[%s17] sm:$0x1]
    %19 = vrot.lane.b32.xlu0 %v18, 80
    %v20 = vpop.permute.xlu0 %19
    %vm21 = vcmask 786048
    %22 = vst.msk [vmem:[#allocation0] sm:$0x1] %vm21, %v20
    %s23 = scalar_lea.vmem %s0, 4
    %v24 = vld [vmem:[%s23] sm:$0x1]
    %25 = vrot.lane.b32.xlu0 %v24, 64
    %v26 = vpop.permute.xlu0 %25
    %vm27 = vcmask 654848
    %28 = vst.msk [vmem:[#allocation0] sm:$0x1] %vm27, %v26
    %s29 = scalar_lea.vmem %s0, 3
    %v30 = vld [vmem:[%s29] sm:$0x1]
    %31 = vrot.lane.b32.xlu0 %v30, 48
    %v32 = vpop.permute.xlu0 %31
    %vm33 = vcmask 523648
    %34 = vst.msk [vmem:[#allocation0] sm:$0x1] %vm33, %v32
    %s35 = scalar_lea.vmem %s0, 2
    %v36 = vld [vmem:[%s35] sm:$0x1]
    %37 = vrot.lane.b32.xlu0 %v36, 32
    %v38 = vpop.permute.xlu0 %37
    %vm39 = vcmask 392448
    %40 = vst.msk [vmem:[#allocation0] sm:$0x1] %vm39, %v38
    %s41 = scalar_lea.vmem %s0, 1
    %v42 = vld [vmem:[%s41] sm:$0x1]
    %43 = vrot.lane.b32.xlu0 %v42, 16
    %v44 = vpop.permute.xlu0 %43
    %vm45 = vcmask 261248
    %46 = vst.msk [vmem:[#allocation0] sm:$0x1] %vm45, %v44
    %s48 = sshllo.u32 0, 1
    %v50 = vld [vmem:[#allocation0] sm:%s48]
    %s51 = sshllo.u32 0, 1
    %52 = vst [vmem:[%s1] sm:%s51] %v50

// kernel: cnn_forward.1
$region0: #{cnn_forward.1}
  #allocation0 [shape = 'u32[]', space=smem, size = 0x4, offset = 0x4, fixed_abs, tag = 'smem constant byte address 0x4 - core index']
  #allocation1 [shape = 'u32[144,128]{1,0:T(1,128)}', space=vmem, size = 0x12000, scoped, tag = 'internal scratch']
  %s0 = inlined_call_operand.vmem [shape: f32[2,28,28], index: 0, kind: input, shape index: {}]
  %s1 = inlined_call_operand.vmem [shape: f32[5,28,144], index: 1, kind: input, shape index: {}]
  %s2 = inlined_call_operand.vmem [shape: f32[1,144], index: 2, kind: input, shape index: {}]
  %s3 = inlined_call_operand.vmem [shape: f32[5,72,128], index: 3, kind: input, shape index: {}]
  %s4 = inlined_call_operand.vmem [shape: f32[1,128], index: 4, kind: input, shape index: {}]
  %s5 = inlined_call_operand.vmem [shape: f32[12,24], index: 5, kind: input, shape index: {}]
  %s6 = inlined_call_operand.vmem [shape: f32[12,24], index: 6, kind: input, shape index: {}]
  %s7 = inlined_call_operand.vmem [shape: f32[144,72], index: 7, kind: input, shape index: {}]
  %s8 = inlined_call_operand.vmem [shape: f32[144,72], index: 8, kind: input, shape index: {}]
  %s9 = inlined_call_operand.vmem [shape: f32[4,8], index: 9, kind: input, shape index: {}]
  %s10 = inlined_call_operand.vmem [shape: f32[4,8], index: 10, kind: input, shape index: {}]
  %s11 = inlined_call_operand.vmem [shape: f32[128,64], index: 11, kind: input, shape index: {}]
  %s12 = inlined_call_operand.vmem [shape: f32[128,64], index: 12, kind: input, shape index: {}]
  %s13 = inlined_call_operand.vmem [shape: f32[4,64,120], index: 13, kind: input, shape index: {}]
  %s14 = inlined_call_operand.vmem [shape: f32[1,120], index: 14, kind: input, shape index: {}]
  %s15 = inlined_call_operand.vmem [shape: f32[120,84], index: 15, kind: input, shape index: {}]
  %s16 = inlined_call_operand.vmem [shape: f32[1,84], index: 16, kind: input, shape index: {}]
  %s17 = inlined_call_operand.hbm [shape: f32[2,1,84], index: 17, kind: output, shape index: {}]
  %s18 = sld [smem:[#allocation0]]
  $region101: #{cnn_forward.1} parent=0
    _
  %s20 = ssub.s32 1, %s18
  %s21 = scalar_select 0, %s20, %s18
  $region1: #{cnn_forward.1} parent=0
    #allocation2 [shape = 'u8[1024]{0}', space=vmem, size = 0x400, scoped, tag = 'output window, operand 0']
    #allocation3 [shape = 's32[2]{0}', space=sflag, size = 0x8, scoped, tag = 'scoped memory for cnn_forward.1']
    %22 = vsyncpa [#allocation3], 0
    %s23 = scalar_lea.sflag [#allocation3], 1
    %24 = vsyncpa %s23, 0
    loop: start=0, step=1, limit=4
    $region2: #{cnn_forward.1} parent=1 // loop_pre_header
      _
    $region3: #{cnn_forward.1} parent=1 // loop_header
      %s26 = sphi 0, %s30
      %p27 = scmp.ge.s32.totalorder %s26, 4
      %s36 = sphi 0, %s38
      %s39 = sphi 0, %s36
      %s40 = sphi 0, %s39
      %s56 = sphi 0, %s40
      %s60 = sphi 0, %s60
      %s62 = sphi 0, %s60
      %s63 = sphi 0, %s62
      %s77 = sphi 0, %s63
      %s81 = sphi 0, %s81
      %s83 = sphi 0, %s81
      %s84 = sphi 0, %s83
      %s98 = sphi 0, %s84
      %s102 = sphi 0, %s102
      %s104 = sphi 0, %s102
      %s105 = sphi 0, %s104
      %s119 = sphi 0, %s105
      %s123 = sphi 0, %s123
      %s125 = sphi 0, %s123
      %s126 = sphi 0, %s125
      %s140 = sphi 0, %s126
      %s144 = sphi 0, %s144
      %s146 = sphi 0, %s144
      %s147 = sphi 0, %s146
      %s161 = sphi 0, %s147
      %s165 = sphi 0, %s165
      %s167 = sphi 0, %s165
      %s168 = sphi 0, %s167
      %s182 = sphi 0, %s168
      %s186 = sphi 0, %s186
      %s188 = sphi 0, %s186
      %s189 = sphi 0, %s188
      %s203 = sphi 0, %s189
      %s207 = sphi 0, %s207
      %s209 = sphi 0, %s207
      %s210 = sphi 0, %s209
      %s224 = sphi 0, %s210
      %s228 = sphi 0, %s228
      %s230 = sphi 0, %s228
      %s231 = sphi 0, %s230
      %s245 = sphi 0, %s231
      %s249 = sphi 0, %s249
      %s251 = sphi 0, %s249
      %s252 = sphi 0, %s251
      %s266 = sphi 0, %s252
      %s270 = sphi 0, %s270
      %s272 = sphi 0, %s270
      %s273 = sphi 0, %s272
      %s287 = sphi 0, %s273
      %s291 = sphi 0, %s291
      %s293 = sphi 0, %s291
      %s294 = sphi 0, %s293
      %s308 = sphi 0, %s294
      %s312 = sphi 0, %s312
      %s314 = sphi 0, %s312
      %s315 = sphi 0, %s314
      %s329 = sphi 0, %s315
      %s333 = sphi 0, %s333
      %s335 = sphi 0, %s333
      %s336 = sphi 0, %s335
      %s350 = sphi 0, %s336
      %s354 = sphi 0, %s354
      %s356 = sphi 0, %s354
      %s357 = sphi 0, %s356
      %s371 = sphi 0, %s357
      %s375 = sphi 0, %s375
      %s377 = sphi 0, %s375
      %s378 = sphi 0, %s377
      %s392 = sphi 0, %s378
      %s398 = sphi 0, %s400
      %s401 = sphi 0, %s398
      %s402 = sphi 0, %s401
      %s418 = sphi 0, %s402
    $region4: #{cnn_forward.1} parent=1 // loop_header_branch
      %29 = sbr.rel (%p27) target = $region8
    $region5: #{cnn_forward.1} parent=1 // loop_body
      %s31 = ssub.s32 %s26, 1
      %s32 = ssub.s32 %s26, 2
      %s33 = sadd.s32 %s26, 1
      %s34 = ssub.s32 %s26, %s33
      %p35 = scmp.eq.s32.totalorder %s34, 0
      %s37 = sadd.s32 %s36, 1
      %s38 = scalar_select %p35, %s36, %s37
      %p41 = pneg %p35
      %p42 = scmp.eq.s32.totalorder %s26, 1
      %p43 = por %p41, %p42
      %p44 = scmp.ne.s32.totalorder %s36, %s39
      %p45 = scmp.eq.s32.totalorder %s26, 0
      %p46 = por %p44, %p45
      %p47 = scmp.ne.s32.totalorder %s36, %s39
      %p48 = scmp.eq.s32.totalorder %s31, 1
      %p49 = por %p47, %p48
      %p50 = scmp.ne.s32.totalorder %s39, %s40
      %p51 = scmp.eq.s32.totalorder %s31, 0
      %p52 = por %p50, %p51
      %p53 = scmp.ne.s32.totalorder %s39, %s40
      %p54 = scmp.eq.s32.totalorder %s32, 1
      %p55 = por %p53, %p54
      %p57 = scmp.ne.s32.totalorder %s40, %s56
      %p58 = scmp.eq.s32.totalorder %s32, 0
      %p59 = por %p57, %p58
      %s61 = sadd.s32 %s60, 1
      %p64 = scmp.eq.s32.totalorder %s26, 1
      %p65 = scmp.ne.s32.totalorder %s60, %s62
      %p66 = scmp.eq.s32.totalorder %s26, 0
      %p67 = por %p65, %p66
      %p68 = scmp.ne.s32.totalorder %s60, %s62
      %p69 = scmp.eq.s32.totalorder %s31, 1
      %p70 = por %p68, %p69
      %p71 = scmp.ne.s32.totalorder %s62, %s63
      %p72 = scmp.eq.s32.totalorder %s31, 0
      %p73 = por %p71, %p72
      %p74 = scmp.ne.s32.totalorder %s62, %s63
      %p75 = scmp.eq.s32.totalorder %s32, 1
      %p76 = por %p74, %p75
      %p78 = scmp.ne.s32.totalorder %s63, %s77
      %p79 = scmp.eq.s32.totalorder %s32, 0
      %p80 = por %p78, %p79
      %s82 = sadd.s32 %s81, 1
      %p85 = scmp.eq.s32.totalorder %s26, 1
      %p86 = scmp.ne.s32.totalorder %s81, %s83
      %p87 = scmp.eq.s32.totalorder %s26, 0
      %p88 = por %p86, %p87
      %p89 = scmp.ne.s32.totalorder %s81, %s83
      %p90 = scmp.eq.s32.totalorder %s31, 1
      %p91 = por %p89, %p90
      %p92 = scmp.ne.s32.totalorder %s83, %s84
      %p93 = scmp.eq.s32.totalorder %s31, 0
      %p94 = por %p92, %p93
      %p95 = scmp.ne.s32.totalorder %s83, %s84
      %p96 = scmp.eq.s32.totalorder %s32, 1
      %p97 = por %p95, %p96
      %p99 = scmp.ne.s32.totalorder %s84, %s98
      %p100 = scmp.eq.s32.totalorder %s32, 0
      %p101 = por %p99, %p100
      %s103 = sadd.s32 %s102, 1
      %p106 = scmp.eq.s32.totalorder %s26, 1
      %p107 = scmp.ne.s32.totalorder %s102, %s104
      %p108 = scmp.eq.s32.totalorder %s26, 0
      %p109 = por %p107, %p108
      %p110 = scmp.ne.s32.totalorder %s102, %s104
      %p111 = scmp.eq.s32.totalorder %s31, 1
      %p112 = por %p110, %p111
      %p113 = scmp.ne.s32.totalorder %s104, %s105
      %p114 = scmp.eq.s32.totalorder %s31, 0
      %p115 = por %p113, %p114
      %p116 = scmp.ne.s32.totalorder %s104, %s105
      %p117 = scmp.eq.s32.totalorder %s32, 1
      %p118 = por %p116, %p117
      %p120 = scmp.ne.s32.totalorder %s105, %s119
      %p121 = scmp.eq.s32.totalorder %s32, 0
      %p122 = por %p120, %p121
      %s124 = sadd.s32 %s123, 1
      %p127 = scmp.eq.s32.totalorder %s26, 1
      %p128 = scmp.ne.s32.totalorder %s123, %s125
      %p129 = scmp.eq.s32.totalorder %s26, 0
      %p130 = por %p128, %p129
      %p131 = scmp.ne.s32.totalorder %s123, %s125
      %p132 = scmp.eq.s32.totalorder %s31, 1
      %p133 = por %p131, %p132
      %p134 = scmp.ne.s32.totalorder %s125, %s126
      %p135 = scmp.eq.s32.totalorder %s31, 0
      %p136 = por %p134, %p135
      %p137 = scmp.ne.s32.totalorder %s125, %s126
      %p138 = scmp.eq.s32.totalorder %s32, 1
      %p139 = por %p137, %p138
      %p141 = scmp.ne.s32.totalorder %s126, %s140
      %p142 = scmp.eq.s32.totalorder %s32, 0
      %p143 = por %p141, %p142
      %s145 = sadd.s32 %s144, 1
      %p148 = scmp.eq.s32.totalorder %s26, 1
      %p149 = scmp.ne.s32.totalorder %s144, %s146
      %p150 = scmp.eq.s32.totalorder %s26, 0
      %p151 = por %p149, %p150
      %p152 = scmp.ne.s32.totalorder %s144, %s146
      %p153 = scmp.eq.s32.totalorder %s31, 1
      %p154 = por %p152, %p153
      %p155 = scmp.ne.s32.totalorder %s146, %s147
      %p156 = scmp.eq.s32.totalorder %s31, 0
      %p157 = por %p155, %p156
      %p158 = scmp.ne.s32.totalorder %s146, %s147
      %p159 = scmp.eq.s32.totalorder %s32, 1
      %p160 = por %p158, %p159
      %p162 = scmp.ne.s32.totalorder %s147, %s161
      %p163 = scmp.eq.s32.totalorder %s32, 0
      %p164 = por %p162, %p163
      %s166 = sadd.s32 %s165, 1
      %p169 = scmp.eq.s32.totalorder %s26, 1
      %p170 = scmp.ne.s32.totalorder %s165, %s167
      %p171 = scmp.eq.s32.totalorder %s26, 0
      %p172 = por %p170, %p171
      %p173 = scmp.ne.s32.totalorder %s165, %s167
      %p174 = scmp.eq.s32.totalorder %s31, 1
      %p175 = por %p173, %p174
      %p176 = scmp.ne.s32.totalorder %s167, %s168
      %p177 = scmp.eq.s32.totalorder %s31, 0
      %p178 = por %p176, %p177
      %p179 = scmp.ne.s32.totalorder %s167, %s168
      %p180 = scmp.eq.s32.totalorder %s32, 1
      %p181 = por %p179, %p180
      %p183 = scmp.ne.s32.totalorder %s168, %s182
      %p184 = scmp.eq.s32.totalorder %s32, 0
      %p185 = por %p183, %p184
      %s187 = sadd.s32 %s186, 1
      %p190 = scmp.eq.s32.totalorder %s26, 1
      %p191 = scmp.ne.s32.totalorder %s186, %s188
      %p192 = scmp.eq.s32.totalorder %s26, 0
      %p193 = por %p191, %p192
      %p194 = scmp.ne.s32.totalorder %s186, %s188
      %p195 = scmp.eq.s32.totalorder %s31, 1
      %p196 = por %p194, %p195
      %p197 = scmp.ne.s32.totalorder %s188, %s189
      %p198 = scmp.eq.s32.totalorder %s31, 0
      %p199 = por %p197, %p198
      %p200 = scmp.ne.s32.totalorder %s188, %s189
      %p201 = scmp.eq.s32.totalorder %s32, 1
      %p202 = por %p200, %p201
      %p204 = scmp.ne.s32.totalorder %s189, %s203
      %p205 = scmp.eq.s32.totalorder %s32, 0
      %p206 = por %p204, %p205
      %s208 = sadd.s32 %s207, 1
      %p211 = scmp.eq.s32.totalorder %s26, 1
      %p212 = scmp.ne.s32.totalorder %s207, %s209
      %p213 = scmp.eq.s32.totalorder %s26, 0
      %p214 = por %p212, %p213
      %p215 = scmp.ne.s32.totalorder %s207, %s209
      %p216 = scmp.eq.s32.totalorder %s31, 1
      %p217 = por %p215, %p216
      %p218 = scmp.ne.s32.totalorder %s209, %s210
      %p219 = scmp.eq.s32.totalorder %s31, 0
      %p220 = por %p218, %p219
      %p221 = scmp.ne.s32.totalorder %s209, %s210
      %p222 = scmp.eq.s32.totalorder %s32, 1
      %p223 = por %p221, %p222
      %p225 = scmp.ne.s32.totalorder %s210, %s224
      %p226 = scmp.eq.s32.totalorder %s32, 0
      %p227 = por %p225, %p226
      %s229 = sadd.s32 %s228, 1
      %p232 = scmp.eq.s32.totalorder %s26, 1
      %p233 = scmp.ne.s32.totalorder %s228, %s230
      %p234 = scmp.eq.s32.totalorder %s26, 0
      %p235 = por %p233, %p234
      %p236 = scmp.ne.s32.totalorder %s228, %s230
      %p237 = scmp.eq.s32.totalorder %s31, 1
      %p238 = por %p236, %p237
      %p239 = scmp.ne.s32.totalorder %s230, %s231
      %p240 = scmp.eq.s32.totalorder %s31, 0
      %p241 = por %p239, %p240
      %p242 = scmp.ne.s32.totalorder %s230, %s231
      %p243 = scmp.eq.s32.totalorder %s32, 1
      %p244 = por %p242, %p243
      %p246 = scmp.ne.s32.totalorder %s231, %s245
      %p247 = scmp.eq.s32.totalorder %s32, 0
      %p248 = por %p246, %p247
      %s250 = sadd.s32 %s249, 1
      %p253 = scmp.eq.s32.totalorder %s26, 1
      %p254 = scmp.ne.s32.totalorder %s249, %s251
      %p255 = scmp.eq.s32.totalorder %s26, 0
      %p256 = por %p254, %p255
      %p257 = scmp.ne.s32.totalorder %s249, %s251
      %p258 = scmp.eq.s32.totalorder %s31, 1
      %p259 = por %p257, %p258
      %p260 = scmp.ne.s32.totalorder %s251, %s252
      %p261 = scmp.eq.s32.totalorder %s31, 0
      %p262 = por %p260, %p261
      %p263 = scmp.ne.s32.totalorder %s251, %s252
      %p264 = scmp.eq.s32.totalorder %s32, 1
      %p265 = por %p263, %p264
      %p267 = scmp.ne.s32.totalorder %s252, %s266
      %p268 = scmp.eq.s32.totalorder %s32, 0
      %p269 = por %p267, %p268
      %s271 = sadd.s32 %s270, 1
      %p274 = scmp.eq.s32.totalorder %s26, 1
      %p275 = scmp.ne.s32.totalorder %s270, %s272
      %p276 = scmp.eq.s32.totalorder %s26, 0
      %p277 = por %p275, %p276
      %p278 = scmp.ne.s32.totalorder %s270, %s272
      %p279 = scmp.eq.s32.totalorder %s31, 1
      %p280 = por %p278, %p279
      %p281 = scmp.ne.s32.totalorder %s272, %s273
      %p282 = scmp.eq.s32.totalorder %s31, 0
      %p283 = por %p281, %p282
      %p284 = scmp.ne.s32.totalorder %s272, %s273
      %p285 = scmp.eq.s32.totalorder %s32, 1
      %p286 = por %p284, %p285
      %p288 = scmp.ne.s32.totalorder %s273, %s287
      %p289 = scmp.eq.s32.totalorder %s32, 0
      %p290 = por %p288, %p289
      %s292 = sadd.s32 %s291, 1
      %p295 = scmp.eq.s32.totalorder %s26, 1
      %p296 = scmp.ne.s32.totalorder %s291, %s293
      %p297 = scmp.eq.s32.totalorder %s26, 0
      %p298 = por %p296, %p297
      %p299 = scmp.ne.s32.totalorder %s291, %s293
      %p300 = scmp.eq.s32.totalorder %s31, 1
      %p301 = por %p299, %p300
      %p302 = scmp.ne.s32.totalorder %s293, %s294
      %p303 = scmp.eq.s32.totalorder %s31, 0
      %p304 = por %p302, %p303
      %p305 = scmp.ne.s32.totalorder %s293, %s294
      %p306 = scmp.eq.s32.totalorder %s32, 1
      %p307 = por %p305, %p306
      %p309 = scmp.ne.s32.totalorder %s294, %s308
      %p310 = scmp.eq.s32.totalorder %s32, 0
      %p311 = por %p309, %p310
      %s313 = sadd.s32 %s312, 1
      %p316 = scmp.eq.s32.totalorder %s26, 1
      %p317 = scmp.ne.s32.totalorder %s312, %s314
      %p318 = scmp.eq.s32.totalorder %s26, 0
      %p319 = por %p317, %p318
      %p320 = scmp.ne.s32.totalorder %s312, %s314
      %p321 = scmp.eq.s32.totalorder %s31, 1
      %p322 = por %p320, %p321
      %p323 = scmp.ne.s32.totalorder %s314, %s315
      %p324 = scmp.eq.s32.totalorder %s31, 0
      %p325 = por %p323, %p324
      %p326 = scmp.ne.s32.totalorder %s314, %s315
      %p327 = scmp.eq.s32.totalorder %s32, 1
      %p328 = por %p326, %p327
      %p330 = scmp.ne.s32.totalorder %s315, %s329
      %p331 = scmp.eq.s32.totalorder %s32, 0
      %p332 = por %p330, %p331
      %s334 = sadd.s32 %s333, 1
      %p337 = scmp.eq.s32.totalorder %s26, 1
      %p338 = scmp.ne.s32.totalorder %s333, %s335
      %p339 = scmp.eq.s32.totalorder %s26, 0
      %p340 = por %p338, %p339
      %p341 = scmp.ne.s32.totalorder %s333, %s335
      %p342 = scmp.eq.s32.totalorder %s31, 1
      %p343 = por %p341, %p342
      %p344 = scmp.ne.s32.totalorder %s335, %s336
      %p345 = scmp.eq.s32.totalorder %s31, 0
      %p346 = por %p344, %p345
      %p347 = scmp.ne.s32.totalorder %s335, %s336
      %p348 = scmp.eq.s32.totalorder %s32, 1
      %p349 = por %p347, %p348
      %p351 = scmp.ne.s32.totalorder %s336, %s350
      %p352 = scmp.eq.s32.totalorder %s32, 0
      %p353 = por %p351, %p352
      %s355 = sadd.s32 %s354, 1
      %p358 = scmp.eq.s32.totalorder %s26, 1
      %p359 = scmp.ne.s32.totalorder %s354, %s356
      %p360 = scmp.eq.s32.totalorder %s26, 0
      %p361 = por %p359, %p360
      %p362 = scmp.ne.s32.totalorder %s354, %s356
      %p363 = scmp.eq.s32.totalorder %s31, 1
      %p364 = por %p362, %p363
      %p365 = scmp.ne.s32.totalorder %s356, %s357
      %p366 = scmp.eq.s32.totalorder %s31, 0
      %p367 = por %p365, %p366
      %p368 = scmp.ne.s32.totalorder %s356, %s357
      %p369 = scmp.eq.s32.totalorder %s32, 1
      %p370 = por %p368, %p369
      %p372 = scmp.ne.s32.totalorder %s357, %s371
      %p373 = scmp.eq.s32.totalorder %s32, 0
      %p374 = por %p372, %p373
      %s376 = sadd.s32 %s375, 1
      %p379 = scmp.eq.s32.totalorder %s26, 1
      %p380 = scmp.ne.s32.totalorder %s375, %s377
      %p381 = scmp.eq.s32.totalorder %s26, 0
      %p382 = por %p380, %p381
      %p383 = scmp.ne.s32.totalorder %s375, %s377
      %p384 = scmp.eq.s32.totalorder %s31, 1
      %p385 = por %p383, %p384
      %p386 = scmp.ne.s32.totalorder %s377, %s378
      %p387 = scmp.eq.s32.totalorder %s31, 0
      %p388 = por %p386, %p387
      %p389 = scmp.ne.s32.totalorder %s377, %s378
      %p390 = scmp.eq.s32.totalorder %s32, 1
      %p391 = por %p389, %p390
      %p393 = scmp.ne.s32.totalorder %s378, %s392
      %p394 = scmp.eq.s32.totalorder %s32, 0
      %p395 = por %p393, %p394
      %s396 = ssub.s32 %s26, %s33
      %p397 = scmp.eq.s32.totalorder %s396, 0
      %s399 = sadd.s32 %s398, 1
      %s400 = scalar_select %p397, %s398, %s399
      %p403 = pneg %p397
      %p404 = scmp.eq.s32.totalorder %s26, 1
      %p405 = por %p403, %p404
      %p406 = scmp.ne.s32.totalorder %s398, %s401
      %p407 = scmp.eq.s32.totalorder %s26, 0
      %p408 = por %p406, %p407
      %p409 = scmp.ne.s32.totalorder %s398, %s401
      %p410 = scmp.eq.s32.totalorder %s31, 1
      %p411 = por %p409, %p410
      %p412 = scmp.ne.s32.totalorder %s401, %s402
      %p413 = scmp.eq.s32.totalorder %s31, 0
      %p414 = por %p412, %p413
      %p415 = scmp.ne.s32.totalorder %s401, %s402
      %p416 = scmp.eq.s32.totalorder %s32, 1
      %p417 = por %p415, %p416
      %p419 = scmp.ne.s32.totalorder %s402, %s418
      %p420 = scmp.eq.s32.totalorder %s32, 0
      %p421 = por %p419, %p420
      %p422 = scmp.le.s32.totalorder 1, %s26
      %p423 = scmp.lt.s32.totalorder %s26, 3
      %p424 = pnand %p422, %p423
      %p425 = pneg %p424
      // Predicated region
      $region9: #{cnn_forward.1} parent=5 // pred_check
        _
      $region10: #{cnn_forward.1} parent=5 // pred_check_branch
        %427 = sbr.rel (%p424) target = $region12
      $region11: #{cnn_forward.1} parent=5 // pred_region
        %s428 = ssub.s32 %s26, 1
        // Predicated region
        $region13: #{cnn_forward.1} parent=11 // pred_check
          %p429 = pneg %p73
        $region14: #{cnn_forward.1} parent=11 // pred_check_branch
          %431 = sbr.rel (%p429) target = $region16
        $region15: #{cnn_forward.1} parent=11 // pred_region
          _
        $region16: #{cnn_forward.1} parent=11 // pred_fallthru
          _
        // Predicated region
        $region17: #{cnn_forward.1} parent=11 // pred_check
          %p432 = pneg %p94
        $region18: #{cnn_forward.1} parent=11 // pred_check_branch
          %434 = sbr.rel (%p432) target = $region20
        $region19: #{cnn_forward.1} parent=11 // pred_region
          _
        $region20: #{cnn_forward.1} parent=11 // pred_fallthru
          _
        // Predicated region
        $region21: #{cnn_forward.1} parent=11 // pred_check
          %p435 = pneg %p115
        $region22: #{cnn_forward.1} parent=11 // pred_check_branch
          %437 = sbr.rel (%p435) target = $region24
        $region23: #{cnn_forward.1} parent=11 // pred_region
          _
        $region24: #{cnn_forward.1} parent=11 // pred_fallthru
          _
        // Predicated region
        $region25: #{cnn_forward.1} parent=11 // pred_check
          %p438 = pneg %p136
        $region26: #{cnn_forward.1} parent=11 // pred_check_branch
          %440 = sbr.rel (%p438) target = $region28
        $region27: #{cnn_forward.1} parent=11 // pred_region
          _
        $region28: #{cnn_forward.1} parent=11 // pred_fallthru
          _
        // Predicated region
        $region29: #{cnn_forward.1} parent=11 // pred_check
          %p441 = pneg %p157
        $region30: #{cnn_forward.1} parent=11 // pred_check_branch
          %443 = sbr.rel (%p441) target = $region32
        $region31: #{cnn_forward.1} parent=11 // pred_region
          _
        $region32: #{cnn_forward.1} parent=11 // pred_fallthru
          _
        // Predicated region
        $region33: #{cnn_forward.1} parent=11 // pred_check
          %p444 = pneg %p178
        $region34: #{cnn_forward.1} parent=11 // pred_check_branch
          %446 = sbr.rel (%p444) target = $region36
        $region35: #{cnn_forward.1} parent=11 // pred_region
          _
        $region36: #{cnn_forward.1} parent=11 // pred_fallthru
          _
        // Predicated region
        $region37: #{cnn_forward.1} parent=11 // pred_check
          %p447 = pneg %p199
        $region38: #{cnn_forward.1} parent=11 // pred_check_branch
          %449 = sbr.rel (%p447) target = $region40
        $region39: #{cnn_forward.1} parent=11 // pred_region
          _
        $region40: #{cnn_forward.1} parent=11 // pred_fallthru
          _
        // Predicated region
        $region41: #{cnn_forward.1} parent=11 // pred_check
          %p450 = pneg %p220
        $region42: #{cnn_forward.1} parent=11 // pred_check_branch
          %452 = sbr.rel (%p450) target = $region44
        $region43: #{cnn_forward.1} parent=11 // pred_region
          _
        $region44: #{cnn_forward.1} parent=11 // pred_fallthru
          _
        // Predicated region
        $region45: #{cnn_forward.1} parent=11 // pred_check
          %p453 = pneg %p241
        $region46: #{cnn_forward.1} parent=11 // pred_check_branch
          %455 = sbr.rel (%p453) target = $region48
        $region47: #{cnn_forward.1} parent=11 // pred_region
          _
        $region48: #{cnn_forward.1} parent=11 // pred_fallthru
          _
        // Predicated region
        $region49: #{cnn_forward.1} parent=11 // pred_check
          %p456 = pneg %p262
        $region50: #{cnn_forward.1} parent=11 // pred_check_branch
          %458 = sbr.rel (%p456) target = $region52
        $region51: #{cnn_forward.1} parent=11 // pred_region
          _
        $region52: #{cnn_forward.1} parent=11 // pred_fallthru
          _
        // Predicated region
        $region53: #{cnn_forward.1} parent=11 // pred_check
          %p459 = pneg %p283
        $region54: #{cnn_forward.1} parent=11 // pred_check_branch
          %461 = sbr.rel (%p459) target = $region56
        $region55: #{cnn_forward.1} parent=11 // pred_region
          _
        $region56: #{cnn_forward.1} parent=11 // pred_fallthru
          _
        // Predicated region
        $region57: #{cnn_forward.1} parent=11 // pred_check
          %p462 = pneg %p304
        $region58: #{cnn_forward.1} parent=11 // pred_check_branch
          %464 = sbr.rel (%p462) target = $region60
        $region59: #{cnn_forward.1} parent=11 // pred_region
          _
        $region60: #{cnn_forward.1} parent=11 // pred_fallthru
          _
        // Predicated region
        $region61: #{cnn_forward.1} parent=11 // pred_check
          %p465 = pneg %p325
        $region62: #{cnn_forward.1} parent=11 // pred_check_branch
          %467 = sbr.rel (%p465) target = $region64
        $region63: #{cnn_forward.1} parent=11 // pred_region
          _
        $region64: #{cnn_forward.1} parent=11 // pred_fallthru
          _
        // Predicated region
        $region65: #{cnn_forward.1} parent=11 // pred_check
          %p468 = pneg %p346
        $region66: #{cnn_forward.1} parent=11 // pred_check_branch
          %470 = sbr.rel (%p468) target = $region68
        $region67: #{cnn_forward.1} parent=11 // pred_region
          _
        $region68: #{cnn_forward.1} parent=11 // pred_fallthru
          _
        // Predicated region
        $region69: #{cnn_forward.1} parent=11 // pred_check
          %p471 = pneg %p367
        $region70: #{cnn_forward.1} parent=11 // pred_check_branch
          %473 = sbr.rel (%p471) target = $region72
        $region71: #{cnn_forward.1} parent=11 // pred_region
          _
        $region72: #{cnn_forward.1} parent=11 // pred_fallthru
          _
        // Predicated region
        $region73: #{cnn_forward.1} parent=11 // pred_check
          %p474 = pneg %p388
        $region74: #{cnn_forward.1} parent=11 // pred_check_branch
          %476 = sbr.rel (%p474) target = $region76
        $region75: #{cnn_forward.1} parent=11 // pred_region
          _
        $region76: #{cnn_forward.1} parent=11 // pred_fallthru
          _
      $region12: #{cnn_forward.1} parent=5 // pred_fallthru
        _
      %p477 = scmp.lt.s32.totalorder %s26, 2
      // Predicated region
      $region77: #{cnn_forward.1} parent=5 // pred_check
        %p478 = pneg %p477
      $region78: #{cnn_forward.1} parent=5 // pred_check_branch
        %480 = sbr.rel (%p478) target = $region80
      $region79: #{cnn_forward.1} parent=5 // pred_region
        // Predicated region
        $region81: #{cnn_forward.1} parent=79 // pred_check
          %p481 = pneg %p46
        $region82: #{cnn_forward.1} parent=79 // pred_check_branch
          %483 = sbr.rel (%p481) target = $region84
        $region83: #{cnn_forward.1} parent=79 // pred_region
          %p484 = scmp.lt.s32.totalorder %s26, 1
          %s485 = scalar_select %p484, %s26, 1
          %s486 = smul.addr %s485, 4
          %s487 = smul.addr %s486, 8
          %s488 = scalar_lea.vmem %s0, %s487
        $region84: #{cnn_forward.1} parent=79 // pred_fallthru
          _
      $region80: #{cnn_forward.1} parent=5 // pred_fallthru
        _
      %p489 = scmp.le.s32.totalorder 1, %s26
      %p490 = scmp.lt.s32.totalorder %s26, 3
      %p491 = pnand %p489, %p490
      %p492 = pneg %p491
      // Predicated region
      $region85: #{cnn_forward.1} parent=5 // pred_check
        _
      $region86: #{cnn_forward.1} parent=5 // pred_check_branch
        %494 = sbr.rel (%p491) target = $region88
      $region87: #{cnn_forward.1} parent=5 // pred_region
        %s495 = ssub.s32 %s26, 1
        %p496 = scmp.lt.s32.totalorder %s31, 1
        %s497 = scalar_select %p496, %s31, 1
        %s498 = smul.addr %s497, 4
        %s499 = smul.addr %s498, 8
        %s500 = scalar_lea.vmem %s0, %s499
        %p501 = pneg %p52
        %p502 = pneg %p49
        %p503 = pneg %p73
        %p504 = pneg %p70
        %p505 = pneg %p94
        %p506 = pneg %p91
        %p507 = pneg %p115
        %p508 = pneg %p112
        %p509 = pneg %p136
        %p510 = pneg %p133
        %p511 = pneg %p157
        %p512 = pneg %p154
        %p513 = pneg %p178
        %p514 = pneg %p175
        %p515 = pneg %p199
        %p516 = pneg %p196
        %p517 = pneg %p220
        %p518 = pneg %p217
        %p519 = pneg %p241
        %p520 = pneg %p238
        %p521 = pneg %p262
        %p522 = pneg %p259
        %p523 = pneg %p283
        %p524 = pneg %p280
        %p525 = pneg %p304
        %p526 = pneg %p301
        %p527 = pneg %p325
        %p528 = pneg %p322
        %p529 = pneg %p346
        %p530 = pneg %p343
        %p531 = pneg %p367
        %p532 = pneg %p364
        %p533 = pneg %p388
        %p534 = pneg %p385
        %p535 = pneg %p414
        %p536 = pneg %p411
        %s537 = sand.u32 %s401, 1
        %s538 = scalar_lea.sflag [#allocation3], %s537
        %s539 = sand.u32 %s401, 1
        %s540 = scalar_lea.vmem [#allocation2], %s539
        %p541 = scmp.lt.s32.totalorder %s31, 1
        %s542 = scalar_select %p541, %s31, 1
        %s543 = smul.addr %s542, 4
        %s544 = smul.addr %s543, 8
        %s545 = scalar_lea.vmem %s0, %s544
        %v546 = vld [vmem:[%s545] sm:$0xff]
        %v547 = vld [vmem:[%s545 + $0x8] sm:$0xff]
        %v548 = vld [vmem:[%s545 + $0x10] sm:$0xff]
        %v549 = vld [vmem:[%s1] sm:$0xff]
        %v550 = vld [vmem:[%s1 + $0x8] sm:$0xff]
        %v551 = vld [vmem:[%s1 + $0x10] sm:$0xff]
        %v552 = vld [vmem:[%s1 + $0x18] sm:$0xff]
        %v553 = vld [vmem:[%s1 + $0x20] sm:$0xff]
        %v554 = vld [vmem:[%s1 + $0x28] sm:$0xff]
        %v555 = vld [vmem:[%s1 + $0x30] sm:$0xf]
        %v556 = vld [vmem:[%s1 + $0x38] sm:$0xf]
        %v557 = vld [vmem:[%s545 + $0x1] sm:$0xff]
        %v558 = vld [vmem:[%s545 + $0x9] sm:$0xff]
        %v559 = vld [vmem:[%s545 + $0x11] sm:$0xff]
        %s560 = scalar_lea.vmem %s1, 64
        %v561 = vld [vmem:[%s560] sm:$0xff]
        %v562 = vld [vmem:[%s560 + $0x8] sm:$0xff]
        %v563 = vld [vmem:[%s560 + $0x10] sm:$0xff]
        %v564 = vld [vmem:[%s560 + $0x18] sm:$0xff]
        %v565 = vld [vmem:[%s560 + $0x20] sm:$0xff]
        %v566 = vld [vmem:[%s560 + $0x28] sm:$0xff]
        %v567 = vld [vmem:[%s560 + $0x30] sm:$0xf]
        %v568 = vld [vmem:[%s560 + $0x38] sm:$0xf]
        %vm569 = vcmask 228352
        %v571 = vsel %vm569, %v557, 0
        %v574 = vsel %vm569, %v558, 0
        %v577 = vsel %vm569, %v559, 0
        %vm579 = vcmask 1043456
        %v581 = vsel %vm579, %v567, 0
        %v584 = vsel %vm579, %v568, 0
        %586 = vmatprep.subr.mxu0 %v562
        %587 = vmatpush1.msra.mxu0 %v561
        %588 = vmatprep.subr.mxu0 %v564
        %589 = vmatpush1.msra.mxu0 %v563
        %590 = vmatprep.subr.mxu0 %v566
        %591 = vmatpush1.msra.mxu0 %v565
        %592 = vmatprep.subr.mxu0 %v584
        %593 = vmatpush1.msra.mxu0 %v581
        %594 = vmatprep.subr.mxu0 0.0
        %595 = vmatpush1.msra.mxu0 0.0
        %596 = vmatprep.subr.mxu0 0.0
        %597 = vmatpush1.msra.mxu0 0.0
        %598 = vmatprep.subr.mxu0 0.0
        %599 = vmatpush1.msra.mxu0 0.0
        %600 = vmatprep.subr.mxu0 0.0
        %601 = vmatpush1.msra.mxu0 0.0
        %602 = vmatprep.subr.mxu0 0.0
        %603 = vmatpush1.msra.mxu0 0.0
        %604 = vmatprep.subr.mxu0 0.0
        %605 = vmatpush1.msra.mxu0 0.0
        %606 = vmatprep.subr.mxu0 0.0
        %607 = vmatpush1.msra.mxu0 0.0
        %608 = vmatprep.subr.mxu0 0.0
        %609 = vmatpush1.msra.mxu0 0.0
        %610 = vmatprep.subr.mxu0 0.0
        %611 = vmatpush1.msra.mxu0 0.0
        %612 = vmatprep.subr.mxu0 0.0
        %613 = vmatpush1.msra.mxu0 0.0
        %614 = vmatprep.subr.mxu0 0.0
        %615 = vmatpush1.msra.mxu0 0.0
        %616 = vmatprep.subr.mxu0 0.0
        %617 = vmatpush1.msra.mxu0 0.0
        %618 = vmatprep.subr.mxu0 0.0
        %619 = vmatpush1.msra.mxu0 0.0
        %620 = vmatprep.subr.mxu0 0.0
        %621 = vmatpush1.msra.mxu0 0.0
        %622 = vmatprep.subr.mxu0 0.0
        %623 = vmatpush1.msra.mxu0 0.0
        %624 = vmatprep.subr.mxu0 0.0
        %625 = vmatpush1.msra.mxu0 0.0
        %626 = vmatprep.subr.mxu0 0.0
        %627 = vmatpush1.msra.mxu0 0.0
        %628 = vmatprep.subr.mxu0 0.0
        %629 = vmatpush1.msra.mxu0 0.0
        %630 = vmatprep.subr.mxu0 0.0
        %631 = vmatpush1.msra.mxu0 0.0
        %632 = vmatprep.subr.mxu0 0.0
        %633 = vmatpush1.msra.mxu0 0.0
        %634 = vmatprep.subr.mxu0 0.0
        %635 = vmatpush1.msra.mxu0 0.0
        %636 = vmatprep.subr.mxu0 0.0
        %637 = vmatpush1.msra.mxu0 0.0
        %638 = vmatprep.subr.mxu0 0.0
        %639 = vmatpush1.msra.mxu0 0.0
        %640 = vmatprep.subr.mxu0 0.0
        %641 = vmatpush1.msra.mxu0 0.0
        %642 = vmatprep.subr.mxu0 0.0
        %643 = vmatpush1.msra.mxu0 0.0
        %644 = vmatprep.subr.mxu0 0.0
        %645 = vmatpush1.msra.mxu0 0.0
        %646 = vmatprep.subr.mxu0 0.0
        %647 = vmatpush1.msra.mxu0 0.0
        %648 = vmatprep.subr.mxu0 0.0
        %649 = vmatpush1.msra.mxu0 0.0
        %650 = vmatprep.mubr.f32.mxu0 0.0
        %651 = vmatmul.mubr.f32.gmra.mrb[0].mxu0 %v571
        %v652 = vpop.f32.mrb[0].mxu0
        %v653 = vadd.f32 0.0, %v652
        %v654 = vpop.f32.mrb[0].mxu0
        %v655 = vadd.f32 0.0, %v654
        %656 = vmatprep.mubr.f32.mxu0 0.0
        %657 = vmatmul.mubr.f32.gmra.mrb[0].mxu0 %v574
        %v658 = vpop.f32.mrb[0].mxu0
        %v659 = vadd.f32 0.0, %v658
        %v660 = vpop.f32.mrb[0].mxu0
        %v661 = vadd.f32 0.0, %v660
        %662 = vmatprep.mubr.f32.mxu0 0.0
        %663 = vmatmul.mubr.f32.gmra.mrb[0].mxu0 %v577
        %v664 = vpop.f32.mrb[0].mxu0
        %v665 = vadd.f32 0.0, %v664
        %v666 = vpop.f32.mrb[0].mxu0
        %v667 = vadd.f32 0.0, %v666
        %668 = vdwg.mxu0
        %v670 = vsel %vm569, %v546, 0
        %v673 = vsel %vm569, %v547, 0
        %v676 = vsel %vm569, %v548, 0
        %v679 = vsel %vm579, %v555, 0
        %v682 = vsel %vm579, %v556, 0
        %684 = vmatprep.subr.mxu0 %v550
        %685 = vmatpush1.msra.mxu0 %v549
        %686 = vmatprep.subr.mxu0 %v552
        %687 = vmatpush1.msra.mxu0 %v551
        %688 = vmatprep.subr.mxu0 %v554
        %689 = vmatpush1.msra.mxu0 %v553
        %690 = vmatprep.subr.mxu0 %v682
        %691 = vmatpush1.msra.mxu0 %v679
        %692 = vmatprep.subr.mxu0 0.0
        %693 = vmatpush1.msra.mxu0 0.0
        %694 = vmatprep.subr.mxu0 0.0
        %695 = vmatpush1.msra.mxu0 0.0
        %696 = vmatprep.subr.mxu0 0.0
        %697 = vmatpush1.msra.mxu0 0.0
        %698 = vmatprep.subr.mxu0 0.0
        %699 = vmatpush1.msra.mxu0 0.0
        %700 = vmatprep.subr.mxu0 0.0
        %701 = vmatpush1.msra.mxu0 0.0
        %702 = vmatprep.subr.mxu0 0.0
        %703 = vmatpush1.msra.mxu0 0.0
        %704 = vmatprep.subr.mxu0 0.0
        %705 = vmatpush1.msra.mxu0 0.0
        %706 = vmatprep.subr.mxu0 0.0
        %707 = vmatpush1.msra.mxu0 0.0
        %708 = vmatprep.subr.mxu0 0.0
        %709 = vmatpush1.msra.mxu0 0.0
        %710 = vmatprep.subr.mxu0 0.0
        %711 = vmatpush1.msra.mxu0 0.0
        %712 = vmatprep.subr.mxu0 0.0
        %713 = vmatpush1.msra.mxu0 0.0
        %714 = vmatprep.subr.mxu0 0.0
        %715 = vmatpush1.msra.mxu0 0.0
        %716 = vmatprep.subr.mxu0 0.0
        %717 = vmatpush1.msra.mxu0 0.0
        %718 = vmatprep.subr.mxu0 0.0
        %719 = vmatpush1.msra.mxu0 0.0
        %720 = vmatprep.subr.mxu0 0.0
        %721 = vmatpush1.msra.mxu0 0.0
        %722 = vmatprep.subr.mxu0 0.0
        %723 = vmatpush1.msra.mxu0 0.0
        %724 = vmatprep.subr.mxu0 0.0
        %725 = vmatpush1.msra.mxu0 0.0
        %726 = vmatprep.subr.mxu0 0.0
        %727 = vmatpush1.msra.mxu0 0.0
        %728 = vmatprep.subr.mxu0 0.0
        %729 = vmatpush1.msra.mxu0 0.0
        %730 = vmatprep.subr.mxu0 0.0
        %731 = vmatpush1.msra.mxu0 0.0
        %732 = vmatprep.subr.mxu0 0.0
        %733 = vmatpush1.msra.mxu0 0.0
        %734 = vmatprep.subr.mxu0 0.0
        %735 = vmatpush1.msra.mxu0 0.0
        %736 = vmatprep.subr.mxu0 0.0
        %737 = vmatpush1.msra.mxu0 0.0
        %738 = vmatprep.subr.mxu0 0.0
        %739 = vmatpush1.msra.mxu0 0.0
        %740 = vmatprep.subr.mxu0 0.0
        %741 = vmatpush1.msra.mxu0 0.0
        %742 = vmatprep.subr.mxu0 0.0
        %743 = vmatpush1.msra.mxu0 0.0
        %744 = vmatprep.subr.mxu0 0.0
        %745 = vmatpush1.msra.mxu0 0.0
        %746 = vmatprep.subr.mxu0 0.0
        %747 = vmatpush1.msra.mxu0 0.0
        %748 = vmatprep.mubr.f32.mxu0 0.0
        %749 = vmatmul.mubr.f32.gmra.mrb[0].mxu0 %v670
        %v750 = vpop.f32.mrb[0].mxu0
        %v751 = vadd.f32 %v653, %v750
        %v752 = vpop.f32.mrb[0].mxu0
        %v753 = vadd.f32 %v655, %v752
        %754 = vmatprep.mubr.f32.mxu0 0.0
        %755 = vmatmul.mubr.f32.gmra.mrb[0].mxu0 %v673
        %v756 = vpop.f32.mrb[0].mxu0
        %v757 = vadd.f32 %v659, %v756
        %v758 = vpop.f32.mrb[0].mxu0
        %v759 = vadd.f32 %v661, %v758
        %760 = vmatprep.mubr.f32.mxu0 0.0
        %761 = vmatmul.mubr.f32.gmra.mrb[0].mxu0 %v676
        %v762 = vpop.f32.mrb[0].mxu0
        %v763 = vadd.f32 %v665, %v762
        %v764 = vpop.f32.mrb[0].mxu0
        %v765 = vadd.f32 %v667, %v764
        %766 = vdwg.mxu0
        %v767 = vld [vmem:[%s545 + $0x2] sm:$0xff]
        %v768 = vld [vmem:[%s545 + $0xa] sm:$0xff]
        %v769 = vld [vmem:[%s545 + $0x12] sm:$0xff]
        %s770 = scalar_lea.vmem %s1, 128
        %v771 = vld [vmem:[%s770] sm:$0xff]
        %v772 = vld [vmem:[%s770 + $0x8] sm:$0xff]
        %v773 = vld [vmem:[%s770 + $0x10] sm:$0xff]
        %v774 = vld [vmem:[%s770 + $0x18] sm:$0xff]
        %v775 = vld [vmem:[%s770 + $0x20] sm:$0xff]
        %v776 = vld [vmem:[%s770 + $0x28] sm:$0xff]
        %v777 = vld [vmem:[%s770 + $0x30] sm:$0xf]
        %v778 = vld [vmem:[%s770 + $0x38] sm:$0xf]
        %v780 = vsel %vm569, %v767, 0
        %v783 = vsel %vm569, %v768, 0
        %v786 = vsel %vm569, %v769, 0
        %v789 = vsel %vm579, %v777, 0
        %v792 = vsel %vm579, %v778, 0
        %794 = vmatprep.subr.mxu0 %v772
        %795 = vmatpush1.msra.mxu0 %v771
        %796 = vmatprep.subr.mxu0 %v774
        %797 = vmatpush1.msra.mxu0 %v773
        %798 = vmatprep.subr.mxu0 %v776
        %799 = vmatpush1.msra.mxu0 %v775
        %800 = vmatprep.subr.mxu0 %v792
        %801 = vmatpush1.msra.mxu0 %v789
        %802 = vmatprep.subr.mxu0 0.0
        %803 = vmatpush1.msra.mxu0 0.0
        %804 = vmatprep.subr.mxu0 0.0
        %805 = vmatpush1.msra.mxu0 0.0
        %806 = vmatprep.subr.mxu0 0.0
        %807 = vmatpush1.msra.mxu0 0.0
        %808 = vmatprep.subr.mxu0 0.0
        %809 = vmatpush1.msra.mxu0 0.0
        %810 = vmatprep.subr.mxu0 0.0
        %811 = vmatpush1.msra.mxu0 0.0
        %812 = vmatprep.subr.mxu0 0.0
        %813 = vmatpush1.msra.mxu0 0.0
        %814 = vmatprep.subr.mxu0 0.0
        %815 = vmatpush1.msra.mxu0 0.0
        %816 = vmatprep.subr.mxu0 0.0
        %817 = vmatpush1.msra.mxu0 0.0
        %818 = vmatprep.subr.mxu0 0.0
        %819 = vmatpush1.msra.mxu0 0.0
        %820 = vmatprep.subr.mxu0 0.0
        %821 = vmatpush1.msra.mxu0 0.0
        %822 = vmatprep.subr.mxu0 0.0
        %823 = vmatpush1.msra.mxu0 0.0
        %824 = vmatprep.subr.mxu0 0.0
        %825 = vmatpush1.msra.mxu0 0.0
        %826 = vmatprep.subr.mxu0 0.0
        %827 = vmatpush1.msra.mxu0 0.0
        %828 = vmatprep.subr.mxu0 0.0
        %829 = vmatpush1.msra.mxu0 0.0
        %830 = vmatprep.subr.mxu0 0.0
        %831 = vmatpush1.msra.mxu0 0.0
        %832 = vmatprep.subr.mxu0 0.0
        %833 = vmatpush1.msra.mxu0 0.0
        %834 = vmatprep.subr.mxu0 0.0
        %835 = vmatpush1.msra.mxu0 0.0
        %836 = vmatprep.subr.mxu0 0.0
        %837 = vmatpush1.msra.mxu0 0.0
        %838 = vmatprep.subr.mxu0 0.0
        %839 = vmatpush1.msra.mxu0 0.0
        %840 = vmatprep.subr.mxu0 0.0
        %841 = vmatpush1.msra.mxu0 0.0
        %842 = vmatprep.subr.mxu0 0.0
        %843 = vmatpush1.msra.mxu0 0.0
        %844 = vmatprep.subr.mxu0 0.0
        %845 = vmatpush1.msra.mxu0 0.0
        %846 = vmatprep.subr.mxu0 0.0
        %847 = vmatpush1.msra.mxu0 0.0
        %848 = vmatprep.subr.mxu0 0.0
        %849 = vmatpush1.msra.mxu0 0.0
        %850 = vmatprep.subr.mxu0 0.0
        %851 = vmatpush1.msra.mxu0 0.0
        %852 = vmatprep.subr.mxu0 0.0
        %853 = vmatpush1.msra.mxu0 0.0
        %854 = vmatprep.subr.mxu0 0.0
        %855 = vmatpush1.msra.mxu0 0.0
        %856 = vmatprep.subr.mxu0 0.0
        %857 = vmatpush1.msra.mxu0 0.0
        %858 = vmatprep.mubr.f32.mxu0 0.0
        %859 = vmatmul.mubr.f32.gmra.mrb[0].mxu0 %v780
        %v860 = vpop.f32.mrb[0].mxu0
        %v861 = vadd.f32 0.0, %v860
        %v862 = vpop.f32.mrb[0].mxu0
        %v863 = vadd.f32 0.0, %v862
        %864 = vmatprep.mubr.f32.mxu0 0.0
        %865 = vmatmul.mubr.f32.gmra.mrb[0].mxu0 %v783
        %v866 = vpop.f32.mrb[0].mxu0
        %v867 = vadd.f32 0.0, %v866
        %v868 = vpop.f32.mrb[0].mxu0
        %v869 = vadd.f32 0.0, %v868
        %870 = vmatprep.mubr.f32.mxu0 0.0
        %871 = vmatmul.mubr.f32.gmra.mrb[0].mxu0 %v786
        %v872 = vpop.f32.mrb[0].mxu0
        %v873 = vadd.f32 0.0, %v872
        %v874 = vpop.f32.mrb[0].mxu0
        %v875 = vadd.f32 0.0, %v874
        %876 = vdwg.mxu0
        %v877 = vadd.f32 %v751, %v861
        %v878 = vadd.f32 %v753, %v863
        %v879 = vadd.f32 %v757, %v867
        %v880 = vadd.f32 %v759, %v869
        %v881 = vadd.f32 %v763, %v873
        %v882 = vadd.f32 %v765, %v875
        %v883 = vld [vmem:[%s545 + $0x3] sm:$0xff]
        %v884 = vld [vmem:[%s545 + $0xb] sm:$0xff]
        %v885 = vld [vmem:[%s545 + $0x13] sm:$0xff]
        %s886 = scalar_lea.vmem %s1, 192
        %v887 = vld [vmem:[%s886] sm:$0xff]
        %v888 = vld [vmem:[%s886 + $0x8] sm:$0xff]
        %v889 = vld [vmem:[%s886 + $0x10] sm:$0xff]
        %v890 = vld [vmem:[%s886 + $0x18] sm:$0xff]
        %v891 = vld [vmem:[%s886 + $0x20] sm:$0xff]
        %v892 = vld [vmem:[%s886 + $0x28] sm:$0xff]
        %v893 = vld [vmem:[%s886 + $0x30] sm:$0xf]
        %v894 = vld [vmem:[%s886 + $0x38] sm:$0xf]
        %v896 = vsel %vm569, %v883, 0
        %v899 = vsel %vm569, %v884, 0
        %v902 = vsel %vm569, %v885, 0
        %v905 = vsel %vm579, %v893, 0
        %v908 = vsel %vm579, %v894, 0
        %910 = vmatprep.subr.mxu0 %v888
        %911 = vmatpush1.msra.mxu0 %v887
        %912 = vmatprep.subr.mxu0 %v890
        %913 = vmatpush1.msra.mxu0 %v889
        %914 = vmatprep.subr.mxu0 %v892
        %915 = vmatpush1.msra.mxu0 %v891
        %916 = vmatprep.subr.mxu0 %v908
        %917 = vmatpush1.msra.mxu0 %v905
        %918 = vmatprep.subr.mxu0 0.0
        %919 = vmatpush1.msra.mxu0 0.0
        %920 = vmatprep.subr.mxu0 0.0
        %921 = vmatpush1.msra.mxu0 0.0
        %922 = vmatprep.subr.mxu0 0.0
        %923 = vmatpush1.msra.mxu0 0.0
        %924 = vmatprep.subr.mxu0 0.0
        %925 = vmatpush1.msra.mxu0 0.0
        %926 = vmatprep.subr.mxu0 0.0
        %927 = vmatpush1.msra.mxu0 0.0
        %928 = vmatprep.subr.mxu0 0.0
        %929 = vmatpush1.msra.mxu0 0.0
        %930 = vmatprep.subr.mxu0 0.0
        %931 = vmatpush1.msra.mxu0 0.0
        %932 = vmatprep.subr.mxu0 0.0
        %933 = vmatpush1.msra.mxu0 0.0
        %934 = vmatprep.subr.mxu0 0.0
        %935 = vmatpush1.msra.mxu0 0.0
        %936 = vmatprep.subr.mxu0 0.0
        %937 = vmatpush1.msra.mxu0 0.0
        %938 = vmatprep.subr.mxu0 0.0
        %939 = vmatpush1.msra.mxu0 0.0
        %940 = vmatprep.subr.mxu0 0.0
        %941 = vmatpush1.msra.mxu0 0.0
        %942 = vmatprep.subr.mxu0 0.0
        %943 = vmatpush1.msra.mxu0 0.0
        %944 = vmatprep.subr.mxu0 0.0
        %945 = vmatpush1.msra.mxu0 0.0
        %946 = vmatprep.subr.mxu0 0.0
        %947 = vmatpush1.msra.mxu0 0.0
        %948 = vmatprep.subr.mxu0 0.0
        %949 = vmatpush1.msra.mxu0 0.0
        %950 = vmatprep.subr.mxu0 0.0
        %951 = vmatpush1.msra.mxu0 0.0
        %952 = vmatprep.subr.mxu0 0.0
        %953 = vmatpush1.msra.mxu0 0.0
        %954 = vmatprep.subr.mxu0 0.0
        %955 = vmatpush1.msra.mxu0 0.0
        %956 = vmatprep.subr.mxu0 0.0
        %957 = vmatpush1.msra.mxu0 0.0
        %958 = vmatprep.subr.mxu0 0.0
        %959 = vmatpush1.msra.mxu0 0.0
        %960 = vmatprep.subr.mxu0 0.0
        %961 = vmatpush1.msra.mxu0 0.0
        %962 = vmatprep.subr.mxu0 0.0
        %963 = vmatpush1.msra.mxu0 0.0
        %964 = vmatprep.subr.mxu0 0.0
        %965 = vmatpush1.msra.mxu0 0.0
        %966 = vmatprep.subr.mxu0 0.0
        %967 = vmatpush1.msra.mxu0 0.0
        %968 = vmatprep.subr.mxu0 0.0
        %969 = vmatpush1.msra.mxu0 0.0
        %970 = vmatprep.subr.mxu0 0.0
        %971 = vmatpush1.msra.mxu0 0.0
        %972 = vmatprep.subr.mxu0 0.0
        %973 = vmatpush1.msra.mxu0 0.0
        %974 = vmatprep.mubr.f32.mxu0 0.0
        %975 = vmatmul.mubr.f32.gmra.mrb[0].mxu0 %v896
        %v976 = vpop.f32.mrb[0].mxu0
        %v977 = vadd.f32 0.0, %v976
        %v978 = vpop.f32.mrb[0].mxu0
        %v979 = vadd.f32 0.0, %v978
        %980 = vmatprep.mubr.f32.mxu0 0.0
        %981 = vmatmul.mubr.f32.gmra.mrb[0].mxu0 %v899
        %v982 = vpop.f32.mrb[0].mxu0
        %v983 = vadd.f32 0.0, %v982
        %v984 = vpop.f32.mrb[0].mxu0
        %v985 = vadd.f32 0.0, %v984
        %986 = vmatprep.mubr.f32.mxu0 0.0
        %987 = vmatmul.mubr.f32.gmra.mrb[0].mxu0 %v902
        %v988 = vpop.f32.mrb[0].mxu0
        %v989 = vadd.f32 0.0, %v988
        %v990 = vpop.f32.mrb[0].mxu0
        %v991 = vadd.f32 0.0, %v990
        %992 = vdwg.mxu0
        %v993 = vadd.f32 %v877, %v977
        %v994 = vadd.f32 %v878, %v979
        %v995 = vadd.f32 %v879, %v983
        %v996 = vadd.f32 %v880, %v985
        %v997 = vadd.f32 %v881, %v989
        %v998 = vadd.f32 %v882, %v991
        %v999 = vld [vmem:[%s545 + $0x4] sm:$0xff]
        %v1000 = vld [vmem:[%s545 + $0xc] sm:$0xff]
        %v1001 = vld [vmem:[%s545 + $0x14] sm:$0xff]
        %s1002 = scalar_lea.vmem %s1, 256
        %v1003 = vld [vmem:[%s1002] sm:$0xff]
        %v1004 = vld [vmem:[%s1002 + $0x8] sm:$0xff]
        %v1005 = vld [vmem:[%s1002 + $0x10] sm:$0xff]
        %v1006 = vld [vmem:[%s1002 + $0x18] sm:$0xff]
        %v1007 = vld [vmem:[%s1002 + $0x20] sm:$0xff]
        %v1008 = vld [vmem:[%s1002 + $0x28] sm:$0xff]
        %v1009 = vld [vmem:[%s1002 + $0x30] sm:$0xf]
        %v1010 = vld [vmem:[%s1002 + $0x38] sm:$0xf]
        %v1012 = vsel %vm569, %v999, 0
        %v1015 = vsel %vm569, %v1000, 0
        %v1018 = vsel %vm569, %v1001, 0
        %v1021 = vsel %vm579, %v1009, 0
        %v1024 = vsel %vm579, %v1010, 0
        %1026 = vmatprep.subr.mxu0 %v1004
        %1027 = vmatpush1.msra.mxu0 %v1003
        %1028 = vmatprep.subr.mxu0 %v1006
        %1029 = vmatpush1.msra.mxu0 %v1005
        %1030 = vmatprep.subr.mxu0 %v1008
        %1031 = vmatpush1.msra.mxu0 %v1007
        %1032 = vmatprep.subr.mxu0 %v1024
        %1033 = vmatpush1.msra.mxu0 %v1021
        %1034 = vmatprep.subr.mxu0 0.0
        %1035 = vmatpush1.msra.mxu0 0.0
        %1036 = vmatprep.subr.mxu0 0.0
        %1037 = vmatpush1.msra.mxu0 0.0
        %1038 = vmatprep.subr.mxu0 0.0
        %1039 = vmatpush1.msra.mxu0 0.0
        %1040 = vmatprep.subr.mxu0 0.0
        %1041 = vmatpush1.msra.mxu0 0.0
        %1042 = vmatprep.subr.mxu0 0.0
        %1043 = vmatpush1.msra.mxu0 0.0
        %1044 = vmatprep.subr.mxu0 0.0
        %1045 = vmatpush1.msra.mxu0 0.0
        %1046 = vmatprep.subr.mxu0 0.0
        %1047 = vmatpush1.msra.mxu0 0.0
        %1048 = vmatprep.subr.mxu0 0.0
        %1049 = vmatpush1.msra.mxu0 0.0
        %1050 = vmatprep.subr.mxu0 0.0
        %1051 = vmatpush1.msra.mxu0 0.0
        %1052 = vmatprep.subr.mxu0 0.0
        %1053 = vmatpush1.msra.mxu0 0.0
        %1054 = vmatprep.subr.mxu0 0.0
        %1055 = vmatpush1.msra.mxu0 0.0
        %1056 = vmatprep.subr.mxu0 0.0
        %1057 = vmatpush1.msra.mxu0 0.0
        %1058 = vmatprep.subr.mxu0 0.0
        %1059 = vmatpush1.msra.mxu0 0.0
        %1060 = vmatprep.subr.mxu0 0.0
        %1061 = vmatpush1.msra.mxu0 0.0
        %1062 = vmatprep.subr.mxu0 0.0
        %1063 = vmatpush1.msra.mxu0 0.0
        %1064 = vmatprep.subr.mxu0 0.0
        %1065 = vmatpush1.msra.mxu0 0.0
        %1066 = vmatprep.subr.mxu0 0.0
        %1067 = vmatpush1.msra.mxu0 0.0
        %1068 = vmatprep.subr.mxu0 0.0
        %1069 = vmatpush1.msra.mxu0 0.0
        %1070 = vmatprep.subr.mxu0 0.0
        %1071 = vmatpush1.msra.mxu0 0.0
        %1072 = vmatprep.subr.mxu0 0.0
        %1073 = vmatpush1.msra.mxu0 0.0
        %1074 = vmatprep.subr.mxu0 0.0
        %1075 = vmatpush1.msra.mxu0 0.0
        %1076 = vmatprep.subr.mxu0 0.0
        %1077 = vmatpush1.msra.mxu0 0.0
        %1078 = vmatprep.subr.mxu0 0.0
        %1079 = vmatpush1.msra.mxu0 0.0
        %1080 = vmatprep.subr.mxu0 0.0
        %1081 = vmatpush1.msra.mxu0 0.0
        %1082 = vmatprep.subr.mxu0 0.0
        %1083 = vmatpush1.msra.mxu0 0.0
        %1084 = vmatprep.subr.mxu0 0.0
        %1085 = vmatpush1.msra.mxu0 0.0
        %1086 = vmatprep.subr.mxu0 0.0
        %1087 = vmatpush1.msra.mxu0 0.0
        %1088 = vmatprep.subr.mxu0 0.0
        %1089 = vmatpush1.msra.mxu0 0.0
        %1090 = vmatprep.mubr.f32.mxu0 0.0
        %1091 = vmatmul.mubr.f32.gmra.mrb[0].mxu0 %v1012
        %v1092 = vpop.f32.mrb[0].mxu0
        %v1093 = vadd.f32 0.0, %v1092
        %v1094 = vpop.f32.mrb[0].mxu0
        %v1095 = vadd.f32 0.0, %v1094
        %1096 = vmatprep.mubr.f32.mxu0 0.0
        %1097 = vmatmul.mubr.f32.gmra.mrb[0].mxu0 %v1015
        %v1098 = vpop.f32.mrb[0].mxu0
        %v1099 = vadd.f32 0.0, %v1098
        %v1100 = vpop.f32.mrb[0].mxu0
        %v1101 = vadd.f32 0.0, %v1100
        %1102 = vmatprep.mubr.f32.mxu0 0.0
        %1103 = vmatmul.mubr.f32.gmra.mrb[0].mxu0 %v1018
        %v1104 = vpop.f32.mrb[0].mxu0
        %v1105 = vadd.f32 0.0, %v1104
        %v1106 = vpop.f32.mrb[0].mxu0
        %v1107 = vadd.f32 0.0, %v1106
        %1108 = vdwg.mxu0
        %v1109 = vadd.f32 %v993, %v1093
        %v1110 = vadd.f32 %v994, %v1095
        %v1111 = vadd.f32 %v995, %v1099
        %v1112 = vadd.f32 %v996, %v1101
        %v1113 = vadd.f32 %v997, %v1105
        %v1114 = vadd.f32 %v998, %v1107
        %v1115 = vld [vmem:[%s2] sm:$0x3]
        %v1117 = vlaneseq
        %v1118 = vshrl.u32 %v1117, 7
        %v1119 = vsub.s32 0, %v1118
        %v1120 = vrot.slane %v1115, %v1119
        %v1121 = vlaneseq
        %v1122 = vshrl.u32 %v1121, 7
        %v1123 = vsub.s32 1, %v1122
        %v1124 = vrot.slane %v1115, %v1123
        %v1127 = vadd.f32 %v1109, %v1120
        %v1128 = vadd.f32 %v1110, %v1124
        %v1129 = vadd.f32 %v1111, %v1120
        %v1130 = vadd.f32 %v1112, %v1124
        %v1131 = vadd.f32 %v1113, %v1120
        %v1132 = vadd.f32 %v1114, %v1124
        %v1133 = vmax.f32 %v1127, 0.0
        %v1134 = vmax.f32 %v1128, 0.0
        %v1135 = vmax.f32 %v1129, 0.0
        %v1136 = vmax.f32 %v1130, 0.0
        %v1137 = vmax.f32 %v1131, 0.0
        %v1138 = vmax.f32 %v1132, 0.0
        %v1139 = vld [vmem:[%s5] sm:$0xff]
        %v1140 = vld [vmem:[%s5 + $0x8] sm:$0xf]
        %vm1141 = vcmask 195584
        %v1143 = vsel %vm1141, %v1139, 0
        %v1146 = vsel %vm1141, %v1140, 0
        %1148 = vmatprep.subr.mxu0 %v1134
        %1149 = vmatpush1.msra.mxu0 %v1133
        %1150 = vmatprep.subr.mxu0 %v1136
        %1151 = vmatpush1.msra.mxu0 %v1135
        %1152 = vmatprep.subr.mxu0 %v1138
        %1153 = vmatpush1.msra.mxu0 %v1137
        %1154 = vmatprep.subr.mxu0 0.0
        %1155 = vmatpush1.msra.mxu0 0.0
        %1156 = vmatprep.subr.mxu0 0.0
        %1157 = vmatpush1.msra.mxu0 0.0
        %1158 = vmatprep.subr.mxu0 0.0
        %1159 = vmatpush1.msra.mxu0 0.0
        %1160 = vmatprep.subr.mxu0 0.0
        %1161 = vmatpush1.msra.mxu0 0.0
        %1162 = vmatprep.subr.mxu0 0.0
        %1163 = vmatpush1.msra.mxu0 0.0
        %1164 = vmatprep.subr.mxu0 0.0
        %1165 = vmatpush1.msra.mxu0 0.0
        %1166 = vmatprep.subr.mxu0 0.0
        %1167 = vmatpush1.msra.mxu0 0.0
        %1168 = vmatprep.subr.mxu0 0.0
        %1169 = vmatpush1.msra.mxu0 0.0
        %1170 = vmatprep.subr.mxu0 0.0
        %1171 = vmatpush1.msra.mxu0 0.0
        %1172 = vmatprep.subr.mxu0 0.0
        %1173 = vmatpush1.msra.mxu0 0.0
        %1174 = vmatprep.subr.mxu0 0.0
        %1175 = vmatpush1.msra.mxu0 0.0
        %1176 = vmatprep.subr.mxu0 0.0
        %1177 = vmatpush1.msra.mxu0 0.0
        %1178 = vmatprep.subr.mxu0 0.0
        %1179 = vmatpush1.msra.mxu0 0.0
        %1180 = vmatprep.subr.mxu0 0.0
        %1181 = vmatpush1.msra.mxu0 0.0
        %1182 = vmatprep.subr.mxu0 0.0
        %1183 = vmatpush1.msra.mxu0 0.0
        %1184 = vmatprep.subr.mxu0 0.0
        %1185 = vmatpush1.msra.mxu0 0.0
        %1186 = vmatprep.subr.mxu0 0.0
        %1187 = vmatpush1.msra.mxu0 0.0
        %1188 = vmatprep.subr.mxu0 0.0
        %1189 = vmatpush1.msra.mxu0 0.0
        %1190 = vmatprep.subr.mxu0 0.0
        %1191 = vmatpush1.msra.mxu0 0.0
        %1192 = vmatprep.subr.mxu0 0.0
        %1193 = vmatpush1.msra.mxu0 0.0
        %1194 = vmatprep.subr.mxu0 0.0
        %1195 = vmatpush1.msra.mxu0 0.0
        %1196 = vmatprep.subr.mxu0 0.0
        %1197 = vmatpush1.msra.mxu0 0.0
        %1198 = vmatprep.subr.mxu0 0.0
        %1199 = vmatpush1.msra.mxu0 0.0
        %1200 = vmatprep.subr.mxu0 0.0
        %1201 = vmatpush1.msra.mxu0 0.0
        %1202 = vmatprep.subr.mxu0 0.0
        %1203 = vmatpush1.msra.mxu0 0.0
        %1204 = vmatprep.subr.mxu0 0.0
        %1205 = vmatpush1.msra.mxu0 0.0
        %1206 = vmatprep.subr.mxu0 0.0
        %1207 = vmatpush1.msra.mxu0 0.0
        %1208 = vmatprep.subr.mxu0 0.0
        %1209 = vmatpush1.msra.mxu0 0.0
        %1210 = vmatprep.subr.mxu0 0.0
        %1211 = vmatpush1.msra.mxu0 0.0
        %1212 = vmatprep.mubr.f32.mxu0 0.0
        %1213 = vmatmul.mubr.f32.gmra.mrb[0].mxu0 %v1143
        %v1214 = vpop.f32.mrb[0].mxu0
        %v1215 = vadd.f32 0.0, %v1214
        %v1216 = vpop.f32.mrb[0].mxu0
        %v1217 = vadd.f32 0.0, %v1216
        %1218 = vmatprep.mubr.f32.mxu0 0.0
        %1219 = vmatmul.mubr.f32.gmra.mrb[0].mxu0 %v1146
        %v1220 = vpop.f32.mrb[0].mxu0
        %v1221 = vadd.f32 0.0, %v1220
        %v1222 = vpop.f32.mrb[0].mxu0
        %v1223 = vadd.f32 0.0, %v1222
        %1224 = vdwg.mxu0
        %v1225 = vld [vmem:[%s6] sm:$0xff]
        %v1226 = vld [vmem:[%s6 + $0x8] sm:$0xf]
        %v1228 = vsel %vm1141, %v1225, 0
        %v1231 = vsel %vm1141, %v1226, 0
        %1233 = vmatprep.subr.mxu0 %v1134
        %1234 = vmatpush1.msra.mxu0 %v1133
        %1235 = vmatprep.subr.mxu0 %v1136
        %1236 = vmatpush1.msra.mxu0 %v1135
        %1237 = vmatprep.subr.mxu0 %v1138
        %1238 = vmatpush1.msra.mxu0 %v1137
        %1239 = vmatprep.subr.mxu0 0.0
        %1240 = vmatpush1.msra.mxu0 0.0
        %1241 = vmatprep.subr.mxu0 0.0
        %1242 = vmatpush1.msra.mxu0 0.0
        %1243 = vmatprep.subr.mxu0 0.0
        %1244 = vmatpush1.msra.mxu0 0.0
        %1245 = vmatprep.subr.mxu0 0.0
        %1246 = vmatpush1.msra.mxu0 0.0
        %1247 = vmatprep.subr.mxu0 0.0
        %1248 = vmatpush1.msra.mxu0 0.0
        %1249 = vmatprep.subr.mxu0 0.0
        %1250 = vmatpush1.msra.mxu0 0.0
        %1251 = vmatprep.subr.mxu0 0.0
        %1252 = vmatpush1.msra.mxu0 0.0
        %1253 = vmatprep.subr.mxu0 0.0
        %1254 = vmatpush1.msra.mxu0 0.0
        %1255 = vmatprep.subr.mxu0 0.0
        %1256 = vmatpush1.msra.mxu0 0.0
        %1257 = vmatprep.subr.mxu0 0.0
        %1258 = vmatpush1.msra.mxu0 0.0
        %1259 = vmatprep.subr.mxu0 0.0
        %1260 = vmatpush1.msra.mxu0 0.0
        %1261 = vmatprep.subr.mxu0 0.0
        %1262 = vmatpush1.msra.mxu0 0.0
        %1263 = vmatprep.subr.mxu0 0.0
        %1264 = vmatpush1.msra.mxu0 0.0
        %1265 = vmatprep.subr.mxu0 0.0
        %1266 = vmatpush1.msra.mxu0 0.0
        %1267 = vmatprep.subr.mxu0 0.0
        %1268 = vmatpush1.msra.mxu0 0.0
        %1269 = vmatprep.subr.mxu0 0.0
        %1270 = vmatpush1.msra.mxu0 0.0
        %1271 = vmatprep.subr.mxu0 0.0
        %1272 = vmatpush1.msra.mxu0 0.0
        %1273 = vmatprep.subr.mxu0 0.0
        %1274 = vmatpush1.msra.mxu0 0.0
        %1275 = vmatprep.subr.mxu0 0.0
        %1276 = vmatpush1.msra.mxu0 0.0
        %1277 = vmatprep.subr.mxu0 0.0
        %1278 = vmatpush1.msra.mxu0 0.0
        %1279 = vmatprep.subr.mxu0 0.0
        %1280 = vmatpush1.msra.mxu0 0.0
        %1281 = vmatprep.subr.mxu0 0.0
        %1282 = vmatpush1.msra.mxu0 0.0
        %1283 = vmatprep.subr.mxu0 0.0
        %1284 = vmatpush1.msra.mxu0 0.0
        %1285 = vmatprep.subr.mxu0 0.0
        %1286 = vmatpush1.msra.mxu0 0.0
        %1287 = vmatprep.subr.mxu0 0.0
        %1288 = vmatpush1.msra.mxu0 0.0
        %1289 = vmatprep.subr.mxu0 0.0
        %1290 = vmatpush1.msra.mxu0 0.0
        %1291 = vmatprep.subr.mxu0 0.0
        %1292 = vmatpush1.msra.mxu0 0.0
        %1293 = vmatprep.subr.mxu0 0.0
        %1294 = vmatpush1.msra.mxu0 0.0
        %1295 = vmatprep.subr.mxu0 0.0
        %1296 = vmatpush1.msra.mxu0 0.0
        %1297 = vmatprep.mubr.f32.mxu0 0.0
        %1298 = vmatmul.mubr.f32.gmra.mrb[0].mxu0 %v1228
        %v1299 = vpop.f32.mrb[0].mxu0
        %v1300 = vadd.f32 0.0, %v1299
        %v1301 = vpop.f32.mrb[0].mxu0
        %v1302 = vadd.f32 0.0, %v1301
        %1303 = vmatprep.mubr.f32.mxu0 0.0
        %1304 = vmatmul.mubr.f32.gmra.mrb[0].mxu0 %v1231
        %v1305 = vpop.f32.mrb[0].mxu0
        %v1306 = vadd.f32 0.0, %v1305
        %v1307 = vpop.f32.mrb[0].mxu0
        %v1308 = vadd.f32 0.0, %v1307
        %1309 = vdwg.mxu0
        %v1310 = vmax.f32 %v1215, %v1300
        %v1311 = vmax.f32 %v1217, %v1302
        %v1312 = vmax.f32 %v1221, %v1306
        %v1313 = vmax.f32 %v1223, %v1308
        %v1314 = vld [vmem:[%s7] sm:$0xff]
        %v1315 = vld [vmem:[%s7 + $0x8] sm:$0xff]
        %v1316 = vld [vmem:[%s7 + $0x10] sm:$0xff]
        %v1317 = vld [vmem:[%s7 + $0x18] sm:$0xff]
        %v1318 = vld [vmem:[%s7 + $0x20] sm:$0xff]
        %v1319 = vld [vmem:[%s7 + $0x28] sm:$0xff]
        %v1320 = vld [vmem:[%s7 + $0x30] sm:$0xff]
        %v1321 = vld [vmem:[%s7 + $0x38] sm:$0xff]
        %v1322 = vld [vmem:[%s7 + $0x40] sm:$0xff]
        %v1323 = vld [vmem:[%s7 + $0x48] sm:$0xff]
        %v1324 = vld [vmem:[%s7 + $0x50] sm:$0xff]
        %v1325 = vld [vmem:[%s7 + $0x58] sm:$0xff]
        %v1326 = vld [vmem:[%s7 + $0x60] sm:$0xff]
        %v1327 = vld [vmem:[%s7 + $0x68] sm:$0xff]
        %v1328 = vld [vmem:[%s7 + $0x70] sm:$0xff]
        %v1329 = vld [vmem:[%s7 + $0x78] sm:$0xff]
        %v1330 = vld [vmem:[%s7 + $0x80] sm:$0xff]
        %v1331 = vld [vmem:[%s7 + $0x88] sm:$0xff]
        %vm1332 = vcmask 130048
        %v1334 = vsel %vm1332, %v1311, 0
        %v1337 = vsel %vm1332, %v1313, 0
        %1339 = vmatprep.subr.mxu0 0.0
        %1340 = vmatpush1.msra.mxu0 %v1314
        %1341 = vmatprep.subr.mxu0 0.0
        %1342 = vmatpush1.msra.mxu0 %v1315
        %1343 = vmatprep.subr.mxu0 0.0
        %1344 = vmatpush1.msra.mxu0 %v1316
        %1345 = vmatprep.subr.mxu0 0.0
        %1346 = vmatpush1.msra.mxu0 %v1317
        %1347 = vmatprep.subr.mxu0 0.0
        %1348 = vmatpush1.msra.mxu0 %v1318
        %1349 = vmatprep.subr.mxu0 0.0
        %1350 = vmatpush1.msra.mxu0 %v1319
        %1351 = vmatprep.subr.mxu0 0.0
        %1352 = vmatpush1.msra.mxu0 %v1320
        %1353 = vmatprep.subr.mxu0 0.0
        %1354 = vmatpush1.msra.mxu0 %v1321
        %1355 = vmatprep.subr.mxu0 0.0
        %1356 = vmatpush1.msra.mxu0 %v1322
        %1357 = vmatprep.subr.mxu0 0.0
        %1358 = vmatpush1.msra.mxu0 %v1323
        %1359 = vmatprep.subr.mxu0 0.0
        %1360 = vmatpush1.msra.mxu0 %v1324
        %1361 = vmatprep.subr.mxu0 0.0
        %1362 = vmatpush1.msra.mxu0 %v1325
        %1363 = vmatprep.subr.mxu0 0.0
        %1364 = vmatpush1.msra.mxu0 %v1326
        %1365 = vmatprep.subr.mxu0 0.0
        %1366 = vmatpush1.msra.mxu0 %v1327
        %1367 = vmatprep.subr.mxu0 0.0
        %1368 = vmatpush1.msra.mxu0 %v1328
        %1369 = vmatprep.subr.mxu0 0.0
        %1370 = vmatpush1.msra.mxu0 %v1329
        %1371 = vmatprep.subr.mxu0 0.0
        %1372 = vmatpush1.msra.mxu0 %v1330
        %1373 = vmatprep.subr.mxu0 0.0
        %1374 = vmatpush1.msra.mxu0 %v1331
        %1375 = vmatprep.subr.mxu0 0.0
        %1376 = vmatpush1.msra.mxu0 0.0
        %1377 = vmatprep.subr.mxu0 0.0
        %1378 = vmatpush1.msra.mxu0 0.0
        %1379 = vmatprep.subr.mxu0 0.0
        %1380 = vmatpush1.msra.mxu0 0.0
        %1381 = vmatprep.subr.mxu0 0.0
        %1382 = vmatpush1.msra.mxu0 0.0
        %1383 = vmatprep.subr.mxu0 0.0
        %1384 = vmatpush1.msra.mxu0 0.0
        %1385 = vmatprep.subr.mxu0 0.0
        %1386 = vmatpush1.msra.mxu0 0.0
        %1387 = vmatprep.subr.mxu0 0.0
        %1388 = vmatpush1.msra.mxu0 0.0
        %1389 = vmatprep.subr.mxu0 0.0
        %1390 = vmatpush1.msra.mxu0 0.0
        %1391 = vmatprep.subr.mxu0 0.0
        %1392 = vmatpush1.msra.mxu0 0.0
        %1393 = vmatprep.subr.mxu0 0.0
        %1394 = vmatpush1.msra.mxu0 0.0
        %1395 = vmatprep.subr.mxu0 0.0
        %1396 = vmatpush1.msra.mxu0 0.0
        %1397 = vmatprep.subr.mxu0 0.0
        %1398 = vmatpush1.msra.mxu0 0.0
        %1399 = vmatprep.subr.mxu0 0.0
        %1400 = vmatpush1.msra.mxu0 0.0
        %1401 = vmatprep.subr.mxu0 0.0
        %1402 = vmatpush1.msra.mxu0 0.0
        %1403 = vmatprep.mubr.f32.mxu0 %v1334
        %1404 = vmatmul.mubr.f32.gmra.mrb[0].mxu0 %v1310
        %v1405 = vpop.f32.mrb[0].mxu0
        %v1406 = vadd.f32 0.0, %v1405
        %v1407 = vpop.f32.mrb[0].mxu0
        %1408 = vmatprep.mubr.f32.mxu0 %v1337
        %1409 = vmatmul.mubr.f32.gmra.mrb[0].mxu0 %v1312
        %v1410 = vpop.f32.mrb[0].mxu0
        %v1411 = vadd.f32 0.0, %v1410
        %v1412 = vpop.f32.mrb[0].mxu0
        %1413 = vdwg.mxu0
        %v1414 = vld [vmem:[%s8] sm:$0xff]
        %v1415 = vld [vmem:[%s8 + $0x8] sm:$0xff]
        %v1416 = vld [vmem:[%s8 + $0x10] sm:$0xff]
        %v1417 = vld [vmem:[%s8 + $0x18] sm:$0xff]
        %v1418 = vld [vmem:[%s8 + $0x20] sm:$0xff]
        %v1419 = vld [vmem:[%s8 + $0x28] sm:$0xff]
        %v1420 = vld [vmem:[%s8 + $0x30] sm:$0xff]
        %v1421 = vld [vmem:[%s8 + $0x38] sm:$0xff]
        %v1422 = vld [vmem:[%s8 + $0x40] sm:$0xff]
        %v1423 = vld [vmem:[%s8 + $0x48] sm:$0xff]
        %v1424 = vld [vmem:[%s8 + $0x50] sm:$0xff]
        %v1425 = vld [vmem:[%s8 + $0x58] sm:$0xff]
        %v1426 = vld [vmem:[%s8 + $0x60] sm:$0xff]
        %v1427 = vld [vmem:[%s8 + $0x68] sm:$0xff]
        %v1428 = vld [vmem:[%s8 + $0x70] sm:$0xff]
        %v1429 = vld [vmem:[%s8 + $0x78] sm:$0xff]
        %v1430 = vld [vmem:[%s8 + $0x80] sm:$0xff]
        %v1431 = vld [vmem:[%s8 + $0x88] sm:$0xff]
        %1432 = vmatprep.subr.mxu0 0.0
        %1433 = vmatpush1.msra.mxu0 %v1414
        %1434 = vmatprep.subr.mxu0 0.0
        %1435 = vmatpush1.msra.mxu0 %v1415
        %1436 = vmatprep.subr.mxu0 0.0
        %1437 = vmatpush1.msra.mxu0 %v1416
        %1438 = vmatprep.subr.mxu0 0.0
        %1439 = vmatpush1.msra.mxu0 %v1417
        %1440 = vmatprep.subr.mxu0 0.0
        %1441 = vmatpush1.msra.mxu0 %v1418
        %1442 = vmatprep.subr.mxu0 0.0
        %1443 = vmatpush1.msra.mxu0 %v1419
        %1444 = vmatprep.subr.mxu0 0.0
        %1445 = vmatpush1.msra.mxu0 %v1420
        %1446 = vmatprep.subr.mxu0 0.0
        %1447 = vmatpush1.msra.mxu0 %v1421
        %1448 = vmatprep.subr.mxu0 0.0
        %1449 = vmatpush1.msra.mxu0 %v1422
        %1450 = vmatprep.subr.mxu0 0.0
        %1451 = vmatpush1.msra.mxu0 %v1423
        %1452 = vmatprep.subr.mxu0 0.0
        %1453 = vmatpush1.msra.mxu0 %v1424
        %1454 = vmatprep.subr.mxu0 0.0
        %1455 = vmatpush1.msra.mxu0 %v1425
        %1456 = vmatprep.subr.mxu0 0.0
        %1457 = vmatpush1.msra.mxu0 %v1426
        %1458 = vmatprep.subr.mxu0 0.0
        %1459 = vmatpush1.msra.mxu0 %v1427
        %1460 = vmatprep.subr.mxu0 0.0
        %1461 = vmatpush1.msra.mxu0 %v1428
        %1462 = vmatprep.subr.mxu0 0.0
        %1463 = vmatpush1.msra.mxu0 %v1429
        %1464 = vmatprep.subr.mxu0 0.0
        %1465 = vmatpush1.msra.mxu0 %v1430
        %1466 = vmatprep.subr.mxu0 0.0
        %1467 = vmatpush1.msra.mxu0 %v1431
        %1468 = vmatprep.subr.mxu0 0.0
        %1469 = vmatpush1.msra.mxu0 0.0
        %1470 = vmatprep.subr.mxu0 0.0
        %1471 = vmatpush1.msra.mxu0 0.0
        %1472 = vmatprep.subr.mxu0 0.0
        %1473 = vmatpush1.msra.mxu0 0.0
        %1474 = vmatprep.subr.mxu0 0.0
        %1475 = vmatpush1.msra.mxu0 0.0
        %1476 = vmatprep.subr.mxu0 0.0
        %1477 = vmatpush1.msra.mxu0 0.0
        %1478 = vmatprep.subr.mxu0 0.0
        %1479 = vmatpush1.msra.mxu0 0.0
        %1480 = vmatprep.subr.mxu0 0.0
        %1481 = vmatpush1.msra.mxu0 0.0
        %1482 = vmatprep.subr.mxu0 0.0
        %1483 = vmatpush1.msra.mxu0 0.0
        %1484 = vmatprep.subr.mxu0 0.0
        %1485 = vmatpush1.msra.mxu0 0.0
        %1486 = vmatprep.subr.mxu0 0.0
        %1487 = vmatpush1.msra.mxu0 0.0
        %1488 = vmatprep.subr.mxu0 0.0
        %1489 = vmatpush1.msra.mxu0 0.0
        %1490 = vmatprep.subr.mxu0 0.0
        %1491 = vmatpush1.msra.mxu0 0.0
        %1492 = vmatprep.subr.mxu0 0.0
        %1493 = vmatpush1.msra.mxu0 0.0
        %1494 = vmatprep.subr.mxu0 0.0
        %1495 = vmatpush1.msra.mxu0 0.0
        %1496 = vmatprep.mubr.f32.mxu0 %v1334
        %1497 = vmatmul.mubr.f32.gmra.mrb[0].mxu0 %v1310
        %v1498 = vpop.f32.mrb[0].mxu0
        %v1499 = vadd.f32 0.0, %v1498
        %v1500 = vpop.f32.mrb[0].mxu0
        %1501 = vmatprep.mubr.f32.mxu0 %v1337
        %1502 = vmatmul.mubr.f32.gmra.mrb[0].mxu0 %v1312
        %v1503 = vpop.f32.mrb[0].mxu0
        %v1504 = vadd.f32 0.0, %v1503
        %v1505 = vpop.f32.mrb[0].mxu0
        %1506 = vdwg.mxu0
        %v1507 = vmax.f32 %v1406, %v1499
        %v1508 = vmax.f32 %v1411, %v1504
        %v1509 = vld [vmem:[%s3] sm:$0xff]
        %v1510 = vld [vmem:[%s3 + $0x8] sm:$0xff]
        %v1511 = vld [vmem:[%s3 + $0x10] sm:$0xff]
        %v1512 = vld [vmem:[%s3 + $0x18] sm:$0xff]
        %v1513 = vld [vmem:[%s3 + $0x20] sm:$0xff]
        %v1514 = vld [vmem:[%s3 + $0x28] sm:$0xff]
        %v1515 = vld [vmem:[%s3 + $0x30] sm:$0xff]
        %v1516 = vld [vmem:[%s3 + $0x38] sm:$0xff]
        %v1517 = vld [vmem:[%s3 + $0x40] sm:$0xff]
        %s1518 = scalar_lea.vmem %s3, 72
        %v1519 = vld [vmem:[%s1518] sm:$0xff]
        %v1520 = vld [vmem:[%s1518 + $0x8] sm:$0xff]
        %v1521 = vld [vmem:[%s1518 + $0x10] sm:$0xff]
        %v1522 = vld [vmem:[%s1518 + $0x18] sm:$0xff]
        %v1523 = vld [vmem:[%s1518 + $0x20] sm:$0xff]
        %v1524 = vld [vmem:[%s1518 + $0x28] sm:$0xff]
        %v1525 = vld [vmem:[%s1518 + $0x30] sm:$0xff]
        %v1526 = vld [vmem:[%s1518 + $0x38] sm:$0xff]
        %v1527 = vld [vmem:[%s1518 + $0x40] sm:$0xff]
        %vm1530 = vcmask 1046528
        %v1531 = vrot.slane %v1507, 1
        %v1532 = vrot.slane %v1508, 1
        %v1533 = vsel %vm1530, %v1531, %v1532
        %vm1534 = vcmask 588800
        %v1535 = vsel %vm1534, %v1533, 0
        %1537 = vmatprep.subr.mxu0 0.0
        %1538 = vmatpush1.msra.mxu0 %v1519
        %1539 = vmatprep.subr.mxu0 0.0
        %1540 = vmatpush1.msra.mxu0 %v1520
        %1541 = vmatprep.subr.mxu0 0.0
        %1542 = vmatpush1.msra.mxu0 %v1521
        %1543 = vmatprep.subr.mxu0 0.0
        %1544 = vmatpush1.msra.mxu0 %v1522
        %1545 = vmatprep.subr.mxu0 0.0
        %1546 = vmatpush1.msra.mxu0 %v1523
        %1547 = vmatprep.subr.mxu0 0.0
        %1548 = vmatpush1.msra.mxu0 %v1524
        %1549 = vmatprep.subr.mxu0 0.0
        %1550 = vmatpush1.msra.mxu0 %v1525
        %1551 = vmatprep.subr.mxu0 0.0
        %1552 = vmatpush1.msra.mxu0 %v1526
        %1553 = vmatprep.subr.mxu0 0.0
        %1554 = vmatpush1.msra.mxu0 %v1527
        %1555 = vmatprep.subr.mxu0 0.0
        %1556 = vmatpush1.msra.mxu0 0.0
        %1557 = vmatprep.subr.mxu0 0.0
        %1558 = vmatpush1.msra.mxu0 0.0
        %1559 = vmatprep.subr.mxu0 0.0
        %1560 = vmatpush1.msra.mxu0 0.0
        %1561 = vmatprep.subr.mxu0 0.0
        %1562 = vmatpush1.msra.mxu0 0.0
        %1563 = vmatprep.subr.mxu0 0.0
        %1564 = vmatpush1.msra.mxu0 0.0
        %1565 = vmatprep.subr.mxu0 0.0
        %1566 = vmatpush1.msra.mxu0 0.0
        %1567 = vmatprep.subr.mxu0 0.0
        %1568 = vmatpush1.msra.mxu0 0.0
        %1569 = vmatprep.subr.mxu0 0.0
        %1570 = vmatpush1.msra.mxu0 0.0
        %1571 = vmatprep.subr.mxu0 0.0
        %1572 = vmatpush1.msra.mxu0 0.0
        %1573 = vmatprep.subr.mxu0 0.0
        %1574 = vmatpush1.msra.mxu0 0.0
        %1575 = vmatprep.subr.mxu0 0.0
        %1576 = vmatpush1.msra.mxu0 0.0
        %1577 = vmatprep.subr.mxu0 0.0
        %1578 = vmatpush1.msra.mxu0 0.0
        %1579 = vmatprep.subr.mxu0 0.0
        %1580 = vmatpush1.msra.mxu0 0.0
        %1581 = vmatprep.subr.mxu0 0.0
        %1582 = vmatpush1.msra.mxu0 0.0
        %1583 = vmatprep.subr.mxu0 0.0
        %1584 = vmatpush1.msra.mxu0 0.0
        %1585 = vmatprep.subr.mxu0 0.0
        %1586 = vmatpush1.msra.mxu0 0.0
        %1587 = vmatprep.subr.mxu0 0.0
        %1588 = vmatpush1.msra.mxu0 0.0
        %1589 = vmatprep.subr.mxu0 0.0
        %1590 = vmatpush1.msra.mxu0 0.0
        %1591 = vmatprep.subr.mxu0 0.0
        %1592 = vmatpush1.msra.mxu0 0.0
        %1593 = vmatprep.subr.mxu0 0.0
        %1594 = vmatpush1.msra.mxu0 0.0
        %1595 = vmatprep.subr.mxu0 0.0
        %1596 = vmatpush1.msra.mxu0 0.0
        %1597 = vmatprep.subr.mxu0 0.0
        %1598 = vmatpush1.msra.mxu0 0.0
        %1599 = vmatprep.subr.mxu0 0.0
        %1600 = vmatpush1.msra.mxu0 0.0
        %1601 = vmatprep.mubr.f32.mxu0 0.0
        %1602 = vmatmul.mubr.f32.gmra.mrb[0].mxu0 %v1535
        %v1603 = vpop.f32.mrb[0].mxu0
        %v1604 = vadd.f32 0.0, %v1603
        %v1605 = vpop.f32.mrb[0].mxu0
        %1606 = vdwg.mxu0
        %v1607 = vsel %vm1534, %v1507, 0
        %1609 = vmatprep.subr.mxu0 0.0
        %1610 = vmatpush1.msra.mxu0 %v1509
        %1611 = vmatprep.subr.mxu0 0.0
        %1612 = vmatpush1.msra.mxu0 %v1510
        %1613 = vmatprep.subr.mxu0 0.0
        %1614 = vmatpush1.msra.mxu0 %v1511
        %1615 = vmatprep.subr.mxu0 0.0
        %1616 = vmatpush1.msra.mxu0 %v1512
        %1617 = vmatprep.subr.mxu0 0.0
        %1618 = vmatpush1.msra.mxu0 %v1513
        %1619 = vmatprep.subr.mxu0 0.0
        %1620 = vmatpush1.msra.mxu0 %v1514
        %1621 = vmatprep.subr.mxu0 0.0
        %1622 = vmatpush1.msra.mxu0 %v1515
        %1623 = vmatprep.subr.mxu0 0.0
        %1624 = vmatpush1.msra.mxu0 %v1516
        %1625 = vmatprep.subr.mxu0 0.0
        %1626 = vmatpush1.msra.mxu0 %v1517
        %1627 = vmatprep.subr.mxu0 0.0
        %1628 = vmatpush1.msra.mxu0 0.0
        %1629 = vmatprep.subr.mxu0 0.0
        %1630 = vmatpush1.msra.mxu0 0.0
        %1631 = vmatprep.subr.mxu0 0.0
        %1632 = vmatpush1.msra.mxu0 0.0
        %1633 = vmatprep.subr.mxu0 0.0
        %1634 = vmatpush1.msra.mxu0 0.0
        %1635 = vmatprep.subr.mxu0 0.0
        %1636 = vmatpush1.msra.mxu0 0.0
        %1637 = vmatprep.subr.mxu0 0.0
        %1638 = vmatpush1.msra.mxu0 0.0
        %1639 = vmatprep.subr.mxu0 0.0
        %1640 = vmatpush1.msra.mxu0 0.0
        %1641 = vmatprep.subr.mxu0 0.0
        %1642 = vmatpush1.msra.mxu0 0.0
        %1643 = vmatprep.subr.mxu0 0.0
        %1644 = vmatpush1.msra.mxu0 0.0
        %1645 = vmatprep.subr.mxu0 0.0
        %1646 = vmatpush1.msra.mxu0 0.0
        %1647 = vmatprep.subr.mxu0 0.0
        %1648 = vmatpush1.msra.mxu0 0.0
        %1649 = vmatprep.subr.mxu0 0.0
        %1650 = vmatpush1.msra.mxu0 0.0
        %1651 = vmatprep.subr.mxu0 0.0
        %1652 = vmatpush1.msra.mxu0 0.0
        %1653 = vmatprep.subr.mxu0 0.0
        %1654 = vmatpush1.msra.mxu0 0.0
        %1655 = vmatprep.subr.mxu0 0.0
        %1656 = vmatpush1.msra.mxu0 0.0
        %1657 = vmatprep.subr.mxu0 0.0
        %1658 = vmatpush1.msra.mxu0 0.0
        %1659 = vmatprep.subr.mxu0 0.0
        %1660 = vmatpush1.msra.mxu0 0.0
        %1661 = vmatprep.subr.mxu0 0.0
        %1662 = vmatpush1.msra.mxu0 0.0
        %1663 = vmatprep.subr.mxu0 0.0
        %1664 = vmatpush1.msra.mxu0 0.0
        %1665 = vmatprep.subr.mxu0 0.0
        %1666 = vmatpush1.msra.mxu0 0.0
        %1667 = vmatprep.subr.mxu0 0.0
        %1668 = vmatpush1.msra.mxu0 0.0
        %1669 = vmatprep.subr.mxu0 0.0
        %1670 = vmatpush1.msra.mxu0 0.0
        %1671 = vmatprep.subr.mxu0 0.0
        %1672 = vmatpush1.msra.mxu0 0.0
        %1673 = vmatprep.mubr.f32.mxu0 0.0
        %1674 = vmatmul.mubr.f32.gmra.mrb[0].mxu0 %v1607
        %v1675 = vpop.f32.mrb[0].mxu0
        %v1676 = vadd.f32 %v1604, %v1675
        %v1677 = vpop.f32.mrb[0].mxu0
        %1678 = vdwg.mxu0
        %s1679 = scalar_lea.vmem %s3, 144
        %v1680 = vld [vmem:[%s1679] sm:$0xff]
        %v1681 = vld [vmem:[%s1679 + $0x8] sm:$0xff]
        %v1682 = vld [vmem:[%s1679 + $0x10] sm:$0xff]
        %v1683 = vld [vmem:[%s1679 + $0x18] sm:$0xff]
        %v1684 = vld [vmem:[%s1679 + $0x20] sm:$0xff]
        %v1685 = vld [vmem:[%s1679 + $0x28] sm:$0xff]
        %v1686 = vld [vmem:[%s1679 + $0x30] sm:$0xff]
        %v1687 = vld [vmem:[%s1679 + $0x38] sm:$0xff]
        %v1688 = vld [vmem:[%s1679 + $0x40] sm:$0xff]
        %vm1689 = vcmask 1045504
        %v1690 = vrot.slane %v1507, 2
        %v1691 = vrot.slane %v1508, 2
        %v1692 = vsel %vm1689, %v1690, %v1691
        %v1693 = vsel %vm1534, %v1692, 0
        %1695 = vmatprep.subr.mxu0 0.0
        %1696 = vmatpush1.msra.mxu0 %v1680
        %1697 = vmatprep.subr.mxu0 0.0
        %1698 = vmatpush1.msra.mxu0 %v1681
        %1699 = vmatprep.subr.mxu0 0.0
        %1700 = vmatpush1.msra.mxu0 %v1682
        %1701 = vmatprep.subr.mxu0 0.0
        %1702 = vmatpush1.msra.mxu0 %v1683
        %1703 = vmatprep.subr.mxu0 0.0
        %1704 = vmatpush1.msra.mxu0 %v1684
        %1705 = vmatprep.subr.mxu0 0.0
        %1706 = vmatpush1.msra.mxu0 %v1685
        %1707 = vmatprep.subr.mxu0 0.0
        %1708 = vmatpush1.msra.mxu0 %v1686
        %1709 = vmatprep.subr.mxu0 0.0
        %1710 = vmatpush1.msra.mxu0 %v1687
        %1711 = vmatprep.subr.mxu0 0.0
        %1712 = vmatpush1.msra.mxu0 %v1688
        %1713 = vmatprep.subr.mxu0 0.0
        %1714 = vmatpush1.msra.mxu0 0.0
        %1715 = vmatprep.subr.mxu0 0.0
        %1716 = vmatpush1.msra.mxu0 0.0
        %1717 = vmatprep.subr.mxu0 0.0
        %1718 = vmatpush1.msra.mxu0 0.0
        %1719 = vmatprep.subr.mxu0 0.0
        %1720 = vmatpush1.msra.mxu0 0.0
        %1721 = vmatprep.subr.mxu0 0.0
        %1722 = vmatpush1.msra.mxu0 0.0
        %1723 = vmatprep.subr.mxu0 0.0
        %1724 = vmatpush1.msra.mxu0 0.0
        %1725 = vmatprep.subr.mxu0 0.0
        %1726 = vmatpush1.msra.mxu0 0.0
        %1727 = vmatprep.subr.mxu0 0.0
        %1728 = vmatpush1.msra.mxu0 0.0
        %1729 = vmatprep.subr.mxu0 0.0
        %1730 = vmatpush1.msra.mxu0 0.0
        %1731 = vmatprep.subr.mxu0 0.0
        %1732 = vmatpush1.msra.mxu0 0.0
        %1733 = vmatprep.subr.mxu0 0.0
        %1734 = vmatpush1.msra.mxu0 0.0
        %1735 = vmatprep.subr.mxu0 0.0
        %1736 = vmatpush1.msra.mxu0 0.0
        %1737 = vmatprep.subr.mxu0 0.0
        %1738 = vmatpush1.msra.mxu0 0.0
        %1739 = vmatprep.subr.mxu0 0.0
        %1740 = vmatpush1.msra.mxu0 0.0
        %1741 = vmatprep.subr.mxu0 0.0
        %1742 = vmatpush1.msra.mxu0 0.0
        %1743 = vmatprep.subr.mxu0 0.0
        %1744 = vmatpush1.msra.mxu0 0.0
        %1745 = vmatprep.subr.mxu0 0.0
        %1746 = vmatpush1.msra.mxu0 0.0
        %1747 = vmatprep.subr.mxu0 0.0
        %1748 = vmatpush1.msra.mxu0 0.0
        %1749 = vmatprep.subr.mxu0 0.0
        %1750 = vmatpush1.msra.mxu0 0.0
        %1751 = vmatprep.subr.mxu0 0.0
        %1752 = vmatpush1.msra.mxu0 0.0
        %1753 = vmatprep.subr.mxu0 0.0
        %1754 = vmatpush1.msra.mxu0 0.0
        %1755 = vmatprep.subr.mxu0 0.0
        %1756 = vmatpush1.msra.mxu0 0.0
        %1757 = vmatprep.subr.mxu0 0.0
        %1758 = vmatpush1.msra.mxu0 0.0
        %1759 = vmatprep.mubr.f32.mxu0 0.0
        %1760 = vmatmul.mubr.f32.gmra.mrb[0].mxu0 %v1693
        %v1761 = vpop.f32.mrb[0].mxu0
        %v1762 = vadd.f32 0.0, %v1761
        %v1763 = vpop.f32.mrb[0].mxu0
        %1764 = vdwg.mxu0
        %v1765 = vadd.f32 %v1676, %v1762
        %s1766 = scalar_lea.vmem %s3, 216
        %v1767 = vld [vmem:[%s1766] sm:$0xff]
        %v1768 = vld [vmem:[%s1766 + $0x8] sm:$0xff]
        %v1769 = vld [vmem:[%s1766 + $0x10] sm:$0xff]
        %v1770 = vld [vmem:[%s1766 + $0x18] sm:$0xff]
        %v1771 = vld [vmem:[%s1766 + $0x20] sm:$0xff]
        %v1772 = vld [vmem:[%s1766 + $0x28] sm:$0xff]
        %v1773 = vld [vmem:[%s1766 + $0x30] sm:$0xff]
        %v1774 = vld [vmem:[%s1766 + $0x38] sm:$0xff]
        %v1775 = vld [vmem:[%s1766 + $0x40] sm:$0xff]
        %vm1776 = vcmask 1044480
        %v1777 = vrot.slane %v1507, 3
        %v1778 = vrot.slane %v1508, 3
        %v1779 = vsel %vm1776, %v1777, %v1778
        %v1780 = vsel %vm1534, %v1779, 0
        %1782 = vmatprep.subr.mxu0 0.0
        %1783 = vmatpush1.msra.mxu0 %v1767
        %1784 = vmatprep.subr.mxu0 0.0
        %1785 = vmatpush1.msra.mxu0 %v1768
        %1786 = vmatprep.subr.mxu0 0.0
        %1787 = vmatpush1.msra.mxu0 %v1769
        %1788 = vmatprep.subr.mxu0 0.0
        %1789 = vmatpush1.msra.mxu0 %v1770
        %1790 = vmatprep.subr.mxu0 0.0
        %1791 = vmatpush1.msra.mxu0 %v1771
        %1792 = vmatprep.subr.mxu0 0.0
        %1793 = vmatpush1.msra.mxu0 %v1772
        %1794 = vmatprep.subr.mxu0 0.0
        %1795 = vmatpush1.msra.mxu0 %v1773
        %1796 = vmatprep.subr.mxu0 0.0
        %1797 = vmatpush1.msra.mxu0 %v1774
        %1798 = vmatprep.subr.mxu0 0.0
        %1799 = vmatpush1.msra.mxu0 %v1775
        %1800 = vmatprep.subr.mxu0 0.0
        %1801 = vmatpush1.msra.mxu0 0.0
        %1802 = vmatprep.subr.mxu0 0.0
        %1803 = vmatpush1.msra.mxu0 0.0
        %1804 = vmatprep.subr.mxu0 0.0
        %1805 = vmatpush1.msra.mxu0 0.0
        %1806 = vmatprep.subr.mxu0 0.0
        %1807 = vmatpush1.msra.mxu0 0.0
        %1808 = vmatprep.subr.mxu0 0.0
        %1809 = vmatpush1.msra.mxu0 0.0
        %1810 = vmatprep.subr.mxu0 0.0
        %1811 = vmatpush1.msra.mxu0 0.0
        %1812 = vmatprep.subr.mxu0 0.0
        %1813 = vmatpush1.msra.mxu0 0.0
        %1814 = vmatprep.subr.mxu0 0.0
        %1815 = vmatpush1.msra.mxu0 0.0
        %1816 = vmatprep.subr.mxu0 0.0
        %1817 = vmatpush1.msra.mxu0 0.0
        %1818 = vmatprep.subr.mxu0 0.0
        %1819 = vmatpush1.msra.mxu0 0.0
        %1820 = vmatprep.subr.mxu0 0.0
        %1821 = vmatpush1.msra.mxu0 0.0
        %1822 = vmatprep.subr.mxu0 0.0
        %1823 = vmatpush1.msra.mxu0 0.0
        %1824 = vmatprep.subr.mxu0 0.0
        %1825 = vmatpush1.msra.mxu0 0.0
        %1826 = vmatprep.subr.mxu0 0.0
        %1827 = vmatpush1.msra.mxu0 0.0
        %1828 = vmatprep.subr.mxu0 0.0
        %1829 = vmatpush1.msra.mxu0 0.0
        %1830 = vmatprep.subr.mxu0 0.0
        %1831 = vmatpush1.msra.mxu0 0.0
        %1832 = vmatprep.subr.mxu0 0.0
        %1833 = vmatpush1.msra.mxu0 0.0
        %1834 = vmatprep.subr.mxu0 0.0
        %1835 = vmatpush1.msra.mxu0 0.0
        %1836 = vmatprep.subr.mxu0 0.0
        %1837 = vmatpush1.msra.mxu0 0.0
        %1838 = vmatprep.subr.mxu0 0.0
        %1839 = vmatpush1.msra.mxu0 0.0
        %1840 = vmatprep.subr.mxu0 0.0
        %1841 = vmatpush1.msra.mxu0 0.0
        %1842 = vmatprep.subr.mxu0 0.0
        %1843 = vmatpush1.msra.mxu0 0.0
        %1844 = vmatprep.subr.mxu0 0.0
        %1845 = vmatpush1.msra.mxu0 0.0
        %1846 = vmatprep.mubr.f32.mxu0 0.0
        %1847 = vmatmul.mubr.f32.gmra.mrb[0].mxu0 %v1780
        %v1848 = vpop.f32.mrb[0].mxu0
        %v1849 = vadd.f32 0.0, %v1848
        %v1850 = vpop.f32.mrb[0].mxu0
        %1851 = vdwg.mxu0
        %v1852 = vadd.f32 %v1765, %v1849
        %s1853 = scalar_lea.vmem %s3, 288
        %v1854 = vld [vmem:[%s1853] sm:$0xff]
        %v1855 = vld [vmem:[%s1853 + $0x8] sm:$0xff]
        %v1856 = vld [vmem:[%s1853 + $0x10] sm:$0xff]
        %v1857 = vld [vmem:[%s1853 + $0x18] sm:$0xff]
        %v1858 = vld [vmem:[%s1853 + $0x20] sm:$0xff]
        %v1859 = vld [vmem:[%s1853 + $0x28] sm:$0xff]
        %v1860 = vld [vmem:[%s1853 + $0x30] sm:$0xff]
        %v1861 = vld [vmem:[%s1853 + $0x38] sm:$0xff]
        %v1862 = vld [vmem:[%s1853 + $0x40] sm:$0xff]
        %v1863 = vrot.slane %v1507, 4
        %v1864 = vrot.slane %v1508, 4
        %v1865 = vsel %vm579, %v1863, %v1864
        %v1866 = vsel %vm1534, %v1865, 0
        %1868 = vmatprep.subr.mxu0 0.0
        %1869 = vmatpush1.msra.mxu0 %v1854
        %1870 = vmatprep.subr.mxu0 0.0
        %1871 = vmatpush1.msra.mxu0 %v1855
        %1872 = vmatprep.subr.mxu0 0.0
        %1873 = vmatpush1.msra.mxu0 %v1856
        %1874 = vmatprep.subr.mxu0 0.0
        %1875 = vmatpush1.msra.mxu0 %v1857
        %1876 = vmatprep.subr.mxu0 0.0
        %1877 = vmatpush1.msra.mxu0 %v1858
        %1878 = vmatprep.subr.mxu0 0.0
        %1879 = vmatpush1.msra.mxu0 %v1859
        %1880 = vmatprep.subr.mxu0 0.0
        %1881 = vmatpush1.msra.mxu0 %v1860
        %1882 = vmatprep.subr.mxu0 0.0
        %1883 = vmatpush1.msra.mxu0 %v1861
        %1884 = vmatprep.subr.mxu0 0.0
        %1885 = vmatpush1.msra.mxu0 %v1862
        %1886 = vmatprep.subr.mxu0 0.0
        %1887 = vmatpush1.msra.mxu0 0.0
        %1888 = vmatprep.subr.mxu0 0.0
        %1889 = vmatpush1.msra.mxu0 0.0
        %1890 = vmatprep.subr.mxu0 0.0
        %1891 = vmatpush1.msra.mxu0 0.0
        %1892 = vmatprep.subr.mxu0 0.0
        %1893 = vmatpush1.msra.mxu0 0.0
        %1894 = vmatprep.subr.mxu0 0.0
        %1895 = vmatpush1.msra.mxu0 0.0
        %1896 = vmatprep.subr.mxu0 0.0
        %1897 = vmatpush1.msra.mxu0 0.0
        %1898 = vmatprep.subr.mxu0 0.0
        %1899 = vmatpush1.msra.mxu0 0.0
        %1900 = vmatprep.subr.mxu0 0.0
        %1901 = vmatpush1.msra.mxu0 0.0
        %1902 = vmatprep.subr.mxu0 0.0
        %1903 = vmatpush1.msra.mxu0 0.0
        %1904 = vmatprep.subr.mxu0 0.0
        %1905 = vmatpush1.msra.mxu0 0.0
        %1906 = vmatprep.subr.mxu0 0.0
        %1907 = vmatpush1.msra.mxu0 0.0
        %1908 = vmatprep.subr.mxu0 0.0
        %1909 = vmatpush1.msra.mxu0 0.0
        %1910 = vmatprep.subr.mxu0 0.0
        %1911 = vmatpush1.msra.mxu0 0.0
        %1912 = vmatprep.subr.mxu0 0.0
        %1913 = vmatpush1.msra.mxu0 0.0
        %1914 = vmatprep.subr.mxu0 0.0
        %1915 = vmatpush1.msra.mxu0 0.0
        %1916 = vmatprep.subr.mxu0 0.0
        %1917 = vmatpush1.msra.mxu0 0.0
        %1918 = vmatprep.subr.mxu0 0.0
        %1919 = vmatpush1.msra.mxu0 0.0
        %1920 = vmatprep.subr.mxu0 0.0
        %1921 = vmatpush1.msra.mxu0 0.0
        %1922 = vmatprep.subr.mxu0 0.0
        %1923 = vmatpush1.msra.mxu0 0.0
        %1924 = vmatprep.subr.mxu0 0.0
        %1925 = vmatpush1.msra.mxu0 0.0
        %1926 = vmatprep.subr.mxu0 0.0
        %1927 = vmatpush1.msra.mxu0 0.0
        %1928 = vmatprep.subr.mxu0 0.0
        %1929 = vmatpush1.msra.mxu0 0.0
        %1930 = vmatprep.subr.mxu0 0.0
        %1931 = vmatpush1.msra.mxu0 0.0
        %1932 = vmatprep.mubr.f32.mxu0 0.0
        %1933 = vmatmul.mubr.f32.gmra.mrb[0].mxu0 %v1866
        %v1934 = vpop.f32.mrb[0].mxu0
        %v1935 = vadd.f32 0.0, %v1934
        %v1936 = vpop.f32.mrb[0].mxu0
        %1937 = vdwg.mxu0
        %v1938 = vadd.f32 %v1852, %v1935
        %v1939 = vld [vmem:[%s4] sm:$0x1]
        %v1941 = vlaneseq
        %v1942 = vshrl.u32 %v1941, 7
        %v1943 = vsub.s32 0, %v1942
        %v1944 = vrot.slane %v1939, %v1943
        %v1946 = vadd.f32 %v1938, %v1944
        %v1947 = vmax.f32 %v1946, 0.0
        %v1948 = vld [vmem:[%s9] sm:$0xf]
        %vm1949 = vcmask 64512
        %v1951 = vsel %vm1949, %v1948, 0
        %1953 = vmatprep.subr.mxu0 0.0
        %1954 = vmatpush1.msra.mxu0 %v1947
        %1955 = vmatprep.subr.mxu0 0.0
        %1956 = vmatpush1.msra.mxu0 0.0
        %1957 = vmatprep.subr.mxu0 0.0
        %1958 = vmatpush1.msra.mxu0 0.0
        %1959 = vmatprep.subr.mxu0 0.0
        %1960 = vmatpush1.msra.mxu0 0.0
        %1961 = vmatprep.subr.mxu0 0.0
        %1962 = vmatpush1.msra.mxu0 0.0
        %1963 = vmatprep.subr.mxu0 0.0
        %1964 = vmatpush1.msra.mxu0 0.0
        %1965 = vmatprep.subr.mxu0 0.0
        %1966 = vmatpush1.msra.mxu0 0.0
        %1967 = vmatprep.subr.mxu0 0.0
        %1968 = vmatpush1.msra.mxu0 0.0
        %1969 = vmatprep.subr.mxu0 0.0
        %1970 = vmatpush1.msra.mxu0 0.0
        %1971 = vmatprep.subr.mxu0 0.0
        %1972 = vmatpush1.msra.mxu0 0.0
        %1973 = vmatprep.subr.mxu0 0.0
        %1974 = vmatpush1.msra.mxu0 0.0
        %1975 = vmatprep.subr.mxu0 0.0
        %1976 = vmatpush1.msra.mxu0 0.0
        %1977 = vmatprep.subr.mxu0 0.0
        %1978 = vmatpush1.msra.mxu0 0.0
        %1979 = vmatprep.subr.mxu0 0.0
        %1980 = vmatpush1.msra.mxu0 0.0
        %1981 = vmatprep.subr.mxu0 0.0
        %1982 = vmatpush1.msra.mxu0 0.0
        %1983 = vmatprep.subr.mxu0 0.0
        %1984 = vmatpush1.msra.mxu0 0.0
        %1985 = vmatprep.subr.mxu0 0.0
        %1986 = vmatpush1.msra.mxu0 0.0
        %1987 = vmatprep.subr.mxu0 0.0
        %1988 = vmatpush1.msra.mxu0 0.0
        %1989 = vmatprep.subr.mxu0 0.0
        %1990 = vmatpush1.msra.mxu0 0.0
        %1991 = vmatprep.subr.mxu0 0.0
        %1992 = vmatpush1.msra.mxu0 0.0
        %1993 = vmatprep.subr.mxu0 0.0
        %1994 = vmatpush1.msra.mxu0 0.0
        %1995 = vmatprep.subr.mxu0 0.0
        %1996 = vmatpush1.msra.mxu0 0.0
        %1997 = vmatprep.subr.mxu0 0.0
        %1998 = vmatpush1.msra.mxu0 0.0
        %1999 = vmatprep.subr.mxu0 0.0
        %2000 = vmatpush1.msra.mxu0 0.0
        %2001 = vmatprep.subr.mxu0 0.0
        %2002 = vmatpush1.msra.mxu0 0.0
        %2003 = vmatprep.subr.mxu0 0.0
        %2004 = vmatpush1.msra.mxu0 0.0
        %2005 = vmatprep.subr.mxu0 0.0
        %2006 = vmatpush1.msra.mxu0 0.0
        %2007 = vmatprep.subr.mxu0 0.0
        %2008 = vmatpush1.msra.mxu0 0.0
        %2009 = vmatprep.subr.mxu0 0.0
        %2010 = vmatpush1.msra.mxu0 0.0
        %2011 = vmatprep.subr.mxu0 0.0
        %2012 = vmatpush1.msra.mxu0 0.0
        %2013 = vmatprep.subr.mxu0 0.0
        %2014 = vmatpush1.msra.mxu0 0.0
        %2015 = vmatprep.subr.mxu0 0.0
        %2016 = vmatpush1.msra.mxu0 0.0
        %2017 = vmatprep.mubr.f32.mxu0 0.0
        %2018 = vmatmul.mubr.f32.gmra.mrb[0].mxu0 %v1951
        %v2019 = vpop.f32.mrb[0].mxu0
        %v2020 = vadd.f32 0.0, %v2019
        %v2021 = vpop.f32.mrb[0].mxu0
        %2022 = vdwg.mxu0
        %v2023 = vld [vmem:[%s10] sm:$0xf]
        %v2025 = vsel %vm1949, %v2023, 0
        %2027 = vmatprep.subr.mxu0 0.0
        %2028 = vmatpush1.msra.mxu0 %v1947
        %2029 = vmatprep.subr.mxu0 0.0
        %2030 = vmatpush1.msra.mxu0 0.0
        %2031 = vmatprep.subr.mxu0 0.0
        %2032 = vmatpush1.msra.mxu0 0.0
        %2033 = vmatprep.subr.mxu0 0.0
        %2034 = vmatpush1.msra.mxu0 0.0
        %2035 = vmatprep.subr.mxu0 0.0
        %2036 = vmatpush1.msra.mxu0 0.0
        %2037 = vmatprep.subr.mxu0 0.0
        %2038 = vmatpush1.msra.mxu0 0.0
        %2039 = vmatprep.subr.mxu0 0.0
        %2040 = vmatpush1.msra.mxu0 0.0
        %2041 = vmatprep.subr.mxu0 0.0
        %2042 = vmatpush1.msra.mxu0 0.0
        %2043 = vmatprep.subr.mxu0 0.0
        %2044 = vmatpush1.msra.mxu0 0.0
        %2045 = vmatprep.subr.mxu0 0.0
        %2046 = vmatpush1.msra.mxu0 0.0
        %2047 = vmatprep.subr.mxu0 0.0
        %2048 = vmatpush1.msra.mxu0 0.0
        %2049 = vmatprep.subr.mxu0 0.0
        %2050 = vmatpush1.msra.mxu0 0.0
        %2051 = vmatprep.subr.mxu0 0.0
        %2052 = vmatpush1.msra.mxu0 0.0
        %2053 = vmatprep.subr.mxu0 0.0
        %2054 = vmatpush1.msra.mxu0 0.0
        %2055 = vmatprep.subr.mxu0 0.0
        %2056 = vmatpush1.msra.mxu0 0.0
        %2057 = vmatprep.subr.mxu0 0.0
        %2058 = vmatpush1.msra.mxu0 0.0
        %2059 = vmatprep.subr.mxu0 0.0
        %2060 = vmatpush1.msra.mxu0 0.0
        %2061 = vmatprep.subr.mxu0 0.0
        %2062 = vmatpush1.msra.mxu0 0.0
        %2063 = vmatprep.subr.mxu0 0.0
        %2064 = vmatpush1.msra.mxu0 0.0
        %2065 = vmatprep.subr.mxu0 0.0
        %2066 = vmatpush1.msra.mxu0 0.0
        %2067 = vmatprep.subr.mxu0 0.0
        %2068 = vmatpush1.msra.mxu0 0.0
        %2069 = vmatprep.subr.mxu0 0.0
        %2070 = vmatpush1.msra.mxu0 0.0
        %2071 = vmatprep.subr.mxu0 0.0
        %2072 = vmatpush1.msra.mxu0 0.0
        %2073 = vmatprep.subr.mxu0 0.0
        %2074 = vmatpush1.msra.mxu0 0.0
        %2075 = vmatprep.subr.mxu0 0.0
        %2076 = vmatpush1.msra.mxu0 0.0
        %2077 = vmatprep.subr.mxu0 0.0
        %2078 = vmatpush1.msra.mxu0 0.0
        %2079 = vmatprep.subr.mxu0 0.0
        %2080 = vmatpush1.msra.mxu0 0.0
        %2081 = vmatprep.subr.mxu0 0.0
        %2082 = vmatpush1.msra.mxu0 0.0
        %2083 = vmatprep.subr.mxu0 0.0
        %2084 = vmatpush1.msra.mxu0 0.0
        %2085 = vmatprep.subr.mxu0 0.0
        %2086 = vmatpush1.msra.mxu0 0.0
        %2087 = vmatprep.subr.mxu0 0.0
        %2088 = vmatpush1.msra.mxu0 0.0
        %2089 = vmatprep.subr.mxu0 0.0
        %2090 = vmatpush1.msra.mxu0 0.0
        %2091 = vmatprep.mubr.f32.mxu0 0.0
        %2092 = vmatmul.mubr.f32.gmra.mrb[0].mxu0 %v2025
        %v2093 = vpop.f32.mrb[0].mxu0
        %v2094 = vadd.f32 0.0, %v2093
        %v2095 = vpop.f32.mrb[0].mxu0
        %2096 = vdwg.mxu0
        %v2097 = vmax.f32 %v2020, %v2094
        %v2098 = vld [vmem:[%s11] sm:$0xff]
        %v2099 = vld [vmem:[%s11 + $0x8] sm:$0xff]
        %v2100 = vld [vmem:[%s11 + $0x10] sm:$0xff]
        %v2101 = vld [vmem:[%s11 + $0x18] sm:$0xff]
        %v2102 = vld [vmem:[%s11 + $0x20] sm:$0xff]
        %v2103 = vld [vmem:[%s11 + $0x28] sm:$0xff]
        %v2104 = vld [vmem:[%s11 + $0x30] sm:$0xff]
        %v2105 = vld [vmem:[%s11 + $0x38] sm:$0xff]
        %v2106 = vld [vmem:[%s11 + $0x40] sm:$0xff]
        %v2107 = vld [vmem:[%s11 + $0x48] sm:$0xff]
        %v2108 = vld [vmem:[%s11 + $0x50] sm:$0xff]
        %v2109 = vld [vmem:[%s11 + $0x58] sm:$0xff]
        %v2110 = vld [vmem:[%s11 + $0x60] sm:$0xff]
        %v2111 = vld [vmem:[%s11 + $0x68] sm:$0xff]
        %v2112 = vld [vmem:[%s11 + $0x70] sm:$0xff]
        %v2113 = vld [vmem:[%s11 + $0x78] sm:$0xff]
        %2114 = vmatprep.subr.mxu0 0.0
        %2115 = vmatpush1.msra.mxu0 %v2098
        %2116 = vmatprep.subr.mxu0 0.0
        %2117 = vmatpush1.msra.mxu0 %v2099
        %2118 = vmatprep.subr.mxu0 0.0
        %2119 = vmatpush1.msra.mxu0 %v2100
        %2120 = vmatprep.subr.mxu0 0.0
        %2121 = vmatpush1.msra.mxu0 %v2101
        %2122 = vmatprep.subr.mxu0 0.0
        %2123 = vmatpush1.msra.mxu0 %v2102
        %2124 = vmatprep.subr.mxu0 0.0
        %2125 = vmatpush1.msra.mxu0 %v2103
        %2126 = vmatprep.subr.mxu0 0.0
        %2127 = vmatpush1.msra.mxu0 %v2104
        %2128 = vmatprep.subr.mxu0 0.0
        %2129 = vmatpush1.msra.mxu0 %v2105
        %2130 = vmatprep.subr.mxu0 0.0
        %2131 = vmatpush1.msra.mxu0 %v2106
        %2132 = vmatprep.subr.mxu0 0.0
        %2133 = vmatpush1.msra.mxu0 %v2107
        %2134 = vmatprep.subr.mxu0 0.0
        %2135 = vmatpush1.msra.mxu0 %v2108
        %2136 = vmatprep.subr.mxu0 0.0
        %2137 = vmatpush1.msra.mxu0 %v2109
        %2138 = vmatprep.subr.mxu0 0.0
        %2139 = vmatpush1.msra.mxu0 %v2110
        %2140 = vmatprep.subr.mxu0 0.0
        %2141 = vmatpush1.msra.mxu0 %v2111
        %2142 = vmatprep.subr.mxu0 0.0
        %2143 = vmatpush1.msra.mxu0 %v2112
        %2144 = vmatprep.subr.mxu0 0.0
        %2145 = vmatpush1.msra.mxu0 %v2113
        %2146 = vmatprep.subr.mxu0 0.0
        %2147 = vmatpush1.msra.mxu0 0.0
        %2148 = vmatprep.subr.mxu0 0.0
        %2149 = vmatpush1.msra.mxu0 0.0
        %2150 = vmatprep.subr.mxu0 0.0
        %2151 = vmatpush1.msra.mxu0 0.0
        %2152 = vmatprep.subr.mxu0 0.0
        %2153 = vmatpush1.msra.mxu0 0.0
        %2154 = vmatprep.subr.mxu0 0.0
        %2155 = vmatpush1.msra.mxu0 0.0
        %2156 = vmatprep.subr.mxu0 0.0
        %2157 = vmatpush1.msra.mxu0 0.0
        %2158 = vmatprep.subr.mxu0 0.0
        %2159 = vmatpush1.msra.mxu0 0.0
        %2160 = vmatprep.subr.mxu0 0.0
        %2161 = vmatpush1.msra.mxu0 0.0
        %2162 = vmatprep.subr.mxu0 0.0
        %2163 = vmatpush1.msra.mxu0 0.0
        %2164 = vmatprep.subr.mxu0 0.0
        %2165 = vmatpush1.msra.mxu0 0.0
        %2166 = vmatprep.subr.mxu0 0.0
        %2167 = vmatpush1.msra.mxu0 0.0
        %2168 = vmatprep.subr.mxu0 0.0
        %2169 = vmatpush1.msra.mxu0 0.0
        %2170 = vmatprep.subr.mxu0 0.0
        %2171 = vmatpush1.msra.mxu0 0.0
        %2172 = vmatprep.subr.mxu0 0.0
        %2173 = vmatpush1.msra.mxu0 0.0
        %2174 = vmatprep.subr.mxu0 0.0
        %2175 = vmatpush1.msra.mxu0 0.0
        %2176 = vmatprep.subr.mxu0 0.0
        %2177 = vmatpush1.msra.mxu0 0.0
        %2178 = vmatprep.mubr.f32.mxu0 0.0
        %2179 = vmatmul.mubr.f32.gmra.mrb[0].mxu0 %v2097
        %v2180 = vpop.f32.mrb[0].mxu0
        %v2181 = vadd.f32 0.0, %v2180
        %v2182 = vpop.f32.mrb[0].mxu0
        %2183 = vdwg.mxu0
        %v2184 = vld [vmem:[%s12] sm:$0xff]
        %v2185 = vld [vmem:[%s12 + $0x8] sm:$0xff]
        %v2186 = vld [vmem:[%s12 + $0x10] sm:$0xff]
        %v2187 = vld [vmem:[%s12 + $0x18] sm:$0xff]
        %v2188 = vld [vmem:[%s12 + $0x20] sm:$0xff]
        %v2189 = vld [vmem:[%s12 + $0x28] sm:$0xff]
        %v2190 = vld [vmem:[%s12 + $0x30] sm:$0xff]
        %v2191 = vld [vmem:[%s12 + $0x38] sm:$0xff]
        %v2192 = vld [vmem:[%s12 + $0x40] sm:$0xff]
        %v2193 = vld [vmem:[%s12 + $0x48] sm:$0xff]
        %v2194 = vld [vmem:[%s12 + $0x50] sm:$0xff]
        %v2195 = vld [vmem:[%s12 + $0x58] sm:$0xff]
        %v2196 = vld [vmem:[%s12 + $0x60] sm:$0xff]
        %v2197 = vld [vmem:[%s12 + $0x68] sm:$0xff]
        %v2198 = vld [vmem:[%s12 + $0x70] sm:$0xff]
        %v2199 = vld [vmem:[%s12 + $0x78] sm:$0xff]
        %2200 = vmatprep.subr.mxu0 0.0
        %2201 = vmatpush1.msra.mxu0 %v2184
        %2202 = vmatprep.subr.mxu0 0.0
        %2203 = vmatpush1.msra.mxu0 %v2185
        %2204 = vmatprep.subr.mxu0 0.0
        %2205 = vmatpush1.msra.mxu0 %v2186
        %2206 = vmatprep.subr.mxu0 0.0
        %2207 = vmatpush1.msra.mxu0 %v2187
        %2208 = vmatprep.subr.mxu0 0.0
        %2209 = vmatpush1.msra.mxu0 %v2188
        %2210 = vmatprep.subr.mxu0 0.0
        %2211 = vmatpush1.msra.mxu0 %v2189
        %2212 = vmatprep.subr.mxu0 0.0
        %2213 = vmatpush1.msra.mxu0 %v2190
        %2214 = vmatprep.subr.mxu0 0.0
        %2215 = vmatpush1.msra.mxu0 %v2191
        %2216 = vmatprep.subr.mxu0 0.0
        %2217 = vmatpush1.msra.mxu0 %v2192
        %2218 = vmatprep.subr.mxu0 0.0
        %2219 = vmatpush1.msra.mxu0 %v2193
        %2220 = vmatprep.subr.mxu0 0.0
        %2221 = vmatpush1.msra.mxu0 %v2194
        %2222 = vmatprep.subr.mxu0 0.0
        %2223 = vmatpush1.msra.mxu0 %v2195
        %2224 = vmatprep.subr.mxu0 0.0
        %2225 = vmatpush1.msra.mxu0 %v2196
        %2226 = vmatprep.subr.mxu0 0.0
        %2227 = vmatpush1.msra.mxu0 %v2197
        %2228 = vmatprep.subr.mxu0 0.0
        %2229 = vmatpush1.msra.mxu0 %v2198
        %2230 = vmatprep.subr.mxu0 0.0
        %2231 = vmatpush1.msra.mxu0 %v2199
        %2232 = vmatprep.subr.mxu0 0.0
        %2233 = vmatpush1.msra.mxu0 0.0
        %2234 = vmatprep.subr.mxu0 0.0
        %2235 = vmatpush1.msra.mxu0 0.0
        %2236 = vmatprep.subr.mxu0 0.0
        %2237 = vmatpush1.msra.mxu0 0.0
        %2238 = vmatprep.subr.mxu0 0.0
        %2239 = vmatpush1.msra.mxu0 0.0
        %2240 = vmatprep.subr.mxu0 0.0
        %2241 = vmatpush1.msra.mxu0 0.0
        %2242 = vmatprep.subr.mxu0 0.0
        %2243 = vmatpush1.msra.mxu0 0.0
        %2244 = vmatprep.subr.mxu0 0.0
        %2245 = vmatpush1.msra.mxu0 0.0
        %2246 = vmatprep.subr.mxu0 0.0
        %2247 = vmatpush1.msra.mxu0 0.0
        %2248 = vmatprep.subr.mxu0 0.0
        %2249 = vmatpush1.msra.mxu0 0.0
        %2250 = vmatprep.subr.mxu0 0.0
        %2251 = vmatpush1.msra.mxu0 0.0
        %2252 = vmatprep.subr.mxu0 0.0
        %2253 = vmatpush1.msra.mxu0 0.0
        %2254 = vmatprep.subr.mxu0 0.0
        %2255 = vmatpush1.msra.mxu0 0.0
        %2256 = vmatprep.subr.mxu0 0.0
        %2257 = vmatpush1.msra.mxu0 0.0
        %2258 = vmatprep.subr.mxu0 0.0
        %2259 = vmatpush1.msra.mxu0 0.0
        %2260 = vmatprep.subr.mxu0 0.0
        %2261 = vmatpush1.msra.mxu0 0.0
        %2262 = vmatprep.subr.mxu0 0.0
        %2263 = vmatpush1.msra.mxu0 0.0
        %2264 = vmatprep.mubr.f32.mxu0 0.0
        %2265 = vmatmul.mubr.f32.gmra.mrb[0].mxu0 %v2097
        %v2266 = vpop.f32.mrb[0].mxu0
        %v2267 = vadd.f32 0.0, %v2266
        %v2268 = vpop.f32.mrb[0].mxu0
        %2269 = vdwg.mxu0
        %v2270 = vmax.f32 %v2181, %v2267
        %v2271 = vld [vmem:[%s13] sm:$0xff]
        %v2272 = vld [vmem:[%s13 + $0x8] sm:$0xff]
        %v2273 = vld [vmem:[%s13 + $0x10] sm:$0xff]
        %v2274 = vld [vmem:[%s13 + $0x18] sm:$0xff]
        %v2275 = vld [vmem:[%s13 + $0x20] sm:$0xff]
        %v2276 = vld [vmem:[%s13 + $0x28] sm:$0xff]
        %v2277 = vld [vmem:[%s13 + $0x30] sm:$0xff]
        %v2278 = vld [vmem:[%s13 + $0x38] sm:$0xff]
        %s2279 = scalar_lea.vmem %s13, 64
        %v2280 = vld [vmem:[%s2279] sm:$0xff]
        %v2281 = vld [vmem:[%s2279 + $0x8] sm:$0xff]
        %v2282 = vld [vmem:[%s2279 + $0x10] sm:$0xff]
        %v2283 = vld [vmem:[%s2279 + $0x18] sm:$0xff]
        %v2284 = vld [vmem:[%s2279 + $0x20] sm:$0xff]
        %v2285 = vld [vmem:[%s2279 + $0x28] sm:$0xff]
        %v2286 = vld [vmem:[%s2279 + $0x30] sm:$0xff]
        %v2287 = vld [vmem:[%s2279 + $0x38] sm:$0xff]
        %v2289 = vrot.slane %v2270, 1
        %vm2290 = vcmask 523264
        %v2291 = vsel %vm2290, %v2289, 0
        %2293 = vmatprep.subr.mxu0 0.0
        %2294 = vmatpush1.msra.mxu0 %v2280
        %2295 = vmatprep.subr.mxu0 0.0
        %2296 = vmatpush1.msra.mxu0 %v2281
        %2297 = vmatprep.subr.mxu0 0.0
        %2298 = vmatpush1.msra.mxu0 %v2282
        %2299 = vmatprep.subr.mxu0 0.0
        %2300 = vmatpush1.msra.mxu0 %v2283
        %2301 = vmatprep.subr.mxu0 0.0
        %2302 = vmatpush1.msra.mxu0 %v2284
        %2303 = vmatprep.subr.mxu0 0.0
        %2304 = vmatpush1.msra.mxu0 %v2285
        %2305 = vmatprep.subr.mxu0 0.0
        %2306 = vmatpush1.msra.mxu0 %v2286
        %2307 = vmatprep.subr.mxu0 0.0
        %2308 = vmatpush1.msra.mxu0 %v2287
        %2309 = vmatprep.subr.mxu0 0.0
        %2310 = vmatpush1.msra.mxu0 0.0
        %2311 = vmatprep.subr.mxu0 0.0
        %2312 = vmatpush1.msra.mxu0 0.0
        %2313 = vmatprep.subr.mxu0 0.0
        %2314 = vmatpush1.msra.mxu0 0.0
        %2315 = vmatprep.subr.mxu0 0.0
        %2316 = vmatpush1.msra.mxu0 0.0
        %2317 = vmatprep.subr.mxu0 0.0
        %2318 = vmatpush1.msra.mxu0 0.0
        %2319 = vmatprep.subr.mxu0 0.0
        %2320 = vmatpush1.msra.mxu0 0.0
        %2321 = vmatprep.subr.mxu0 0.0
        %2322 = vmatpush1.msra.mxu0 0.0
        %2323 = vmatprep.subr.mxu0 0.0
        %2324 = vmatpush1.msra.mxu0 0.0
        %2325 = vmatprep.subr.mxu0 0.0
        %2326 = vmatpush1.msra.mxu0 0.0
        %2327 = vmatprep.subr.mxu0 0.0
        %2328 = vmatpush1.msra.mxu0 0.0
        %2329 = vmatprep.subr.mxu0 0.0
        %2330 = vmatpush1.msra.mxu0 0.0
        %2331 = vmatprep.subr.mxu0 0.0
        %2332 = vmatpush1.msra.mxu0 0.0
        %2333 = vmatprep.subr.mxu0 0.0
        %2334 = vmatpush1.msra.mxu0 0.0
        %2335 = vmatprep.subr.mxu0 0.0
        %2336 = vmatpush1.msra.mxu0 0.0
        %2337 = vmatprep.subr.mxu0 0.0
        %2338 = vmatpush1.msra.mxu0 0.0
        %2339 = vmatprep.subr.mxu0 0.0
        %2340 = vmatpush1.msra.mxu0 0.0
        %2341 = vmatprep.subr.mxu0 0.0
        %2342 = vmatpush1.msra.mxu0 0.0
        %2343 = vmatprep.subr.mxu0 0.0
        %2344 = vmatpush1.msra.mxu0 0.0
        %2345 = vmatprep.subr.mxu0 0.0
        %2346 = vmatpush1.msra.mxu0 0.0
        %2347 = vmatprep.subr.mxu0 0.0
        %2348 = vmatpush1.msra.mxu0 0.0
        %2349 = vmatprep.subr.mxu0 0.0
        %2350 = vmatpush1.msra.mxu0 0.0
        %2351 = vmatprep.subr.mxu0 0.0
        %2352 = vmatpush1.msra.mxu0 0.0
        %2353 = vmatprep.subr.mxu0 0.0
        %2354 = vmatpush1.msra.mxu0 0.0
        %2355 = vmatprep.subr.mxu0 0.0
        %2356 = vmatpush1.msra.mxu0 0.0
        %2357 = vmatprep.mubr.f32.mxu0 0.0
        %2358 = vmatmul.mubr.f32.gmra.mrb[0].mxu0 %v2291
        %v2359 = vpop.f32.mrb[0].mxu0
        %v2360 = vadd.f32 0.0, %v2359
        %v2361 = vpop.f32.mrb[0].mxu0
        %2362 = vdwg.mxu0
        %v2363 = vsel %vm2290, %v2270, 0
        %2365 = vmatprep.subr.mxu0 0.0
        %2366 = vmatpush1.msra.mxu0 %v2271
        %2367 = vmatprep.subr.mxu0 0.0
        %2368 = vmatpush1.msra.mxu0 %v2272
        %2369 = vmatprep.subr.mxu0 0.0
        %2370 = vmatpush1.msra.mxu0 %v2273
        %2371 = vmatprep.subr.mxu0 0.0
        %2372 = vmatpush1.msra.mxu0 %v2274
        %2373 = vmatprep.subr.mxu0 0.0
        %2374 = vmatpush1.msra.mxu0 %v2275
        %2375 = vmatprep.subr.mxu0 0.0
        %2376 = vmatpush1.msra.mxu0 %v2276
        %2377 = vmatprep.subr.mxu0 0.0
        %2378 = vmatpush1.msra.mxu0 %v2277
        %2379 = vmatprep.subr.mxu0 0.0
        %2380 = vmatpush1.msra.mxu0 %v2278
        %2381 = vmatprep.subr.mxu0 0.0
        %2382 = vmatpush1.msra.mxu0 0.0
        %2383 = vmatprep.subr.mxu0 0.0
        %2384 = vmatpush1.msra.mxu0 0.0
        %2385 = vmatprep.subr.mxu0 0.0
        %2386 = vmatpush1.msra.mxu0 0.0
        %2387 = vmatprep.subr.mxu0 0.0
        %2388 = vmatpush1.msra.mxu0 0.0
        %2389 = vmatprep.subr.mxu0 0.0
        %2390 = vmatpush1.msra.mxu0 0.0
        %2391 = vmatprep.subr.mxu0 0.0
        %2392 = vmatpush1.msra.mxu0 0.0
        %2393 = vmatprep.subr.mxu0 0.0
        %2394 = vmatpush1.msra.mxu0 0.0
        %2395 = vmatprep.subr.mxu0 0.0
        %2396 = vmatpush1.msra.mxu0 0.0
        %2397 = vmatprep.subr.mxu0 0.0
        %2398 = vmatpush1.msra.mxu0 0.0
        %2399 = vmatprep.subr.mxu0 0.0
        %2400 = vmatpush1.msra.mxu0 0.0
        %2401 = vmatprep.subr.mxu0 0.0
        %2402 = vmatpush1.msra.mxu0 0.0
        %2403 = vmatprep.subr.mxu0 0.0
        %2404 = vmatpush1.msra.mxu0 0.0
        %2405 = vmatprep.subr.mxu0 0.0
        %2406 = vmatpush1.msra.mxu0 0.0
        %2407 = vmatprep.subr.mxu0 0.0
        %2408 = vmatpush1.msra.mxu0 0.0
        %2409 = vmatprep.subr.mxu0 0.0
        %2410 = vmatpush1.msra.mxu0 0.0
        %2411 = vmatprep.subr.mxu0 0.0
        %2412 = vmatpush1.msra.mxu0 0.0
        %2413 = vmatprep.subr.mxu0 0.0
        %2414 = vmatpush1.msra.mxu0 0.0
        %2415 = vmatprep.subr.mxu0 0.0
        %2416 = vmatpush1.msra.mxu0 0.0
        %2417 = vmatprep.subr.mxu0 0.0
        %2418 = vmatpush1.msra.mxu0 0.0
        %2419 = vmatprep.subr.mxu0 0.0
        %2420 = vmatpush1.msra.mxu0 0.0
        %2421 = vmatprep.subr.mxu0 0.0
        %2422 = vmatpush1.msra.mxu0 0.0
        %2423 = vmatprep.subr.mxu0 0.0
        %2424 = vmatpush1.msra.mxu0 0.0
        %2425 = vmatprep.subr.mxu0 0.0
        %2426 = vmatpush1.msra.mxu0 0.0
        %2427 = vmatprep.subr.mxu0 0.0
        %2428 = vmatpush1.msra.mxu0 0.0
        %2429 = vmatprep.mubr.f32.mxu0 0.0
        %2430 = vmatmul.mubr.f32.gmra.mrb[0].mxu0 %v2363
        %v2431 = vpop.f32.mrb[0].mxu0
        %v2432 = vadd.f32 %v2360, %v2431
        %v2433 = vpop.f32.mrb[0].mxu0
        %2434 = vdwg.mxu0
        %s2435 = scalar_lea.vmem %s13, 128
        %v2436 = vld [vmem:[%s2435] sm:$0xff]
        %v2437 = vld [vmem:[%s2435 + $0x8] sm:$0xff]
        %v2438 = vld [vmem:[%s2435 + $0x10] sm:$0xff]
        %v2439 = vld [vmem:[%s2435 + $0x18] sm:$0xff]
        %v2440 = vld [vmem:[%s2435 + $0x20] sm:$0xff]
        %v2441 = vld [vmem:[%s2435 + $0x28] sm:$0xff]
        %v2442 = vld [vmem:[%s2435 + $0x30] sm:$0xff]
        %v2443 = vld [vmem:[%s2435 + $0x38] sm:$0xff]
        %v2444 = vrot.slane %v2270, 2
        %v2445 = vsel %vm2290, %v2444, 0
        %2447 = vmatprep.subr.mxu0 0.0
        %2448 = vmatpush1.msra.mxu0 %v2436
        %2449 = vmatprep.subr.mxu0 0.0
        %2450 = vmatpush1.msra.mxu0 %v2437
        %2451 = vmatprep.subr.mxu0 0.0
        %2452 = vmatpush1.msra.mxu0 %v2438
        %2453 = vmatprep.subr.mxu0 0.0
        %2454 = vmatpush1.msra.mxu0 %v2439
        %2455 = vmatprep.subr.mxu0 0.0
        %2456 = vmatpush1.msra.mxu0 %v2440
        %2457 = vmatprep.subr.mxu0 0.0
        %2458 = vmatpush1.msra.mxu0 %v2441
        %2459 = vmatprep.subr.mxu0 0.0
        %2460 = vmatpush1.msra.mxu0 %v2442
        %2461 = vmatprep.subr.mxu0 0.0
        %2462 = vmatpush1.msra.mxu0 %v2443
        %2463 = vmatprep.subr.mxu0 0.0
        %2464 = vmatpush1.msra.mxu0 0.0
        %2465 = vmatprep.subr.mxu0 0.0
        %2466 = vmatpush1.msra.mxu0 0.0
        %2467 = vmatprep.subr.mxu0 0.0
        %2468 = vmatpush1.msra.mxu0 0.0
        %2469 = vmatprep.subr.mxu0 0.0
        %2470 = vmatpush1.msra.mxu0 0.0
        %2471 = vmatprep.subr.mxu0 0.0
        %2472 = vmatpush1.msra.mxu0 0.0
        %2473 = vmatprep.subr.mxu0 0.0
        %2474 = vmatpush1.msra.mxu0 0.0
        %2475 = vmatprep.subr.mxu0 0.0
        %2476 = vmatpush1.msra.mxu0 0.0
        %2477 = vmatprep.subr.mxu0 0.0
        %2478 = vmatpush1.msra.mxu0 0.0
        %2479 = vmatprep.subr.mxu0 0.0
        %2480 = vmatpush1.msra.mxu0 0.0
        %2481 = vmatprep.subr.mxu0 0.0
        %2482 = vmatpush1.msra.mxu0 0.0
        %2483 = vmatprep.subr.mxu0 0.0
        %2484 = vmatpush1.msra.mxu0 0.0
        %2485 = vmatprep.subr.mxu0 0.0
        %2486 = vmatpush1.msra.mxu0 0.0
        %2487 = vmatprep.subr.mxu0 0.0
        %2488 = vmatpush1.msra.mxu0 0.0
        %2489 = vmatprep.subr.mxu0 0.0
        %2490 = vmatpush1.msra.mxu0 0.0
        %2491 = vmatprep.subr.mxu0 0.0
        %2492 = vmatpush1.msra.mxu0 0.0
        %2493 = vmatprep.subr.mxu0 0.0
        %2494 = vmatpush1.msra.mxu0 0.0
        %2495 = vmatprep.subr.mxu0 0.0
        %2496 = vmatpush1.msra.mxu0 0.0
        %2497 = vmatprep.subr.mxu0 0.0
        %2498 = vmatpush1.msra.mxu0 0.0
        %2499 = vmatprep.subr.mxu0 0.0
        %2500 = vmatpush1.msra.mxu0 0.0
        %2501 = vmatprep.subr.mxu0 0.0
        %2502 = vmatpush1.msra.mxu0 0.0
        %2503 = vmatprep.subr.mxu0 0.0
        %2504 = vmatpush1.msra.mxu0 0.0
        %2505 = vmatprep.subr.mxu0 0.0
        %2506 = vmatpush1.msra.mxu0 0.0
        %2507 = vmatprep.subr.mxu0 0.0
        %2508 = vmatpush1.msra.mxu0 0.0
        %2509 = vmatprep.subr.mxu0 0.0
        %2510 = vmatpush1.msra.mxu0 0.0
        %2511 = vmatprep.mubr.f32.mxu0 0.0
        %2512 = vmatmul.mubr.f32.gmra.mrb[0].mxu0 %v2445
        %v2513 = vpop.f32.mrb[0].mxu0
        %v2514 = vadd.f32 0.0, %v2513
        %v2515 = vpop.f32.mrb[0].mxu0
        %2516 = vdwg.mxu0
        %v2517 = vadd.f32 %v2432, %v2514
        %s2518 = scalar_lea.vmem %s13, 192
        %v2519 = vld [vmem:[%s2518] sm:$0xff]
        %v2520 = vld [vmem:[%s2518 + $0x8] sm:$0xff]
        %v2521 = vld [vmem:[%s2518 + $0x10] sm:$0xff]
        %v2522 = vld [vmem:[%s2518 + $0x18] sm:$0xff]
        %v2523 = vld [vmem:[%s2518 + $0x20] sm:$0xff]
        %v2524 = vld [vmem:[%s2518 + $0x28] sm:$0xff]
        %v2525 = vld [vmem:[%s2518 + $0x30] sm:$0xff]
        %v2526 = vld [vmem:[%s2518 + $0x38] sm:$0xff]
        %v2527 = vrot.slane %v2270, 3
        %v2528 = vsel %vm2290, %v2527, 0
        %2530 = vmatprep.subr.mxu0 0.0
        %2531 = vmatpush1.msra.mxu0 %v2519
        %2532 = vmatprep.subr.mxu0 0.0
        %2533 = vmatpush1.msra.mxu0 %v2520
        %2534 = vmatprep.subr.mxu0 0.0
        %2535 = vmatpush1.msra.mxu0 %v2521
        %2536 = vmatprep.subr.mxu0 0.0
        %2537 = vmatpush1.msra.mxu0 %v2522
        %2538 = vmatprep.subr.mxu0 0.0
        %2539 = vmatpush1.msra.mxu0 %v2523
        %2540 = vmatprep.subr.mxu0 0.0
        %2541 = vmatpush1.msra.mxu0 %v2524
        %2542 = vmatprep.subr.mxu0 0.0
        %2543 = vmatpush1.msra.mxu0 %v2525
        %2544 = vmatprep.subr.mxu0 0.0
        %2545 = vmatpush1.msra.mxu0 %v2526
        %2546 = vmatprep.subr.mxu0 0.0
        %2547 = vmatpush1.msra.mxu0 0.0
        %2548 = vmatprep.subr.mxu0 0.0
        %2549 = vmatpush1.msra.mxu0 0.0
        %2550 = vmatprep.subr.mxu0 0.0
        %2551 = vmatpush1.msra.mxu0 0.0
        %2552 = vmatprep.subr.mxu0 0.0
        %2553 = vmatpush1.msra.mxu0 0.0
        %2554 = vmatprep.subr.mxu0 0.0
        %2555 = vmatpush1.msra.mxu0 0.0
        %2556 = vmatprep.subr.mxu0 0.0
        %2557 = vmatpush1.msra.mxu0 0.0
        %2558 = vmatprep.subr.mxu0 0.0
        %2559 = vmatpush1.msra.mxu0 0.0
        %2560 = vmatprep.subr.mxu0 0.0
        %2561 = vmatpush1.msra.mxu0 0.0
        %2562 = vmatprep.subr.mxu0 0.0
        %2563 = vmatpush1.msra.mxu0 0.0
        %2564 = vmatprep.subr.mxu0 0.0
        %2565 = vmatpush1.msra.mxu0 0.0
        %2566 = vmatprep.subr.mxu0 0.0
        %2567 = vmatpush1.msra.mxu0 0.0
        %2568 = vmatprep.subr.mxu0 0.0
        %2569 = vmatpush1.msra.mxu0 0.0
        %2570 = vmatprep.subr.mxu0 0.0
        %2571 = vmatpush1.msra.mxu0 0.0
        %2572 = vmatprep.subr.mxu0 0.0
        %2573 = vmatpush1.msra.mxu0 0.0
        %2574 = vmatprep.subr.mxu0 0.0
        %2575 = vmatpush1.msra.mxu0 0.0
        %2576 = vmatprep.subr.mxu0 0.0
        %2577 = vmatpush1.msra.mxu0 0.0
        %2578 = vmatprep.subr.mxu0 0.0
        %2579 = vmatpush1.msra.mxu0 0.0
        %2580 = vmatprep.subr.mxu0 0.0
        %2581 = vmatpush1.msra.mxu0 0.0
        %2582 = vmatprep.subr.mxu0 0.0
        %2583 = vmatpush1.msra.mxu0 0.0
        %2584 = vmatprep.subr.mxu0 0.0
        %2585 = vmatpush1.msra.mxu0 0.0
        %2586 = vmatprep.subr.mxu0 0.0
        %2587 = vmatpush1.msra.mxu0 0.0
        %2588 = vmatprep.subr.mxu0 0.0
        %2589 = vmatpush1.msra.mxu0 0.0
        %2590 = vmatprep.subr.mxu0 0.0
        %2591 = vmatpush1.msra.mxu0 0.0
        %2592 = vmatprep.subr.mxu0 0.0
        %2593 = vmatpush1.msra.mxu0 0.0
        %2594 = vmatprep.mubr.f32.mxu0 0.0
        %2595 = vmatmul.mubr.f32.gmra.mrb[0].mxu0 %v2528
        %v2596 = vpop.f32.mrb[0].mxu0
        %v2597 = vadd.f32 0.0, %v2596
        %v2598 = vpop.f32.mrb[0].mxu0
        %2599 = vdwg.mxu0
        %v2600 = vadd.f32 %v2517, %v2597
        %v2601 = vld [vmem:[%s14] sm:$0x1]
        %v2602 = vadd.f32 %v2600, %v2601
        %v2603 = vmax.f32 %v2602, 0.0
        %v2604 = vld [vmem:[%s15] sm:$0xff]
        %v2605 = vld [vmem:[%s15 + $0x8] sm:$0xff]
        %v2606 = vld [vmem:[%s15 + $0x10] sm:$0xff]
        %v2607 = vld [vmem:[%s15 + $0x18] sm:$0xff]
        %v2608 = vld [vmem:[%s15 + $0x20] sm:$0xff]
        %v2609 = vld [vmem:[%s15 + $0x28] sm:$0xff]
        %v2610 = vld [vmem:[%s15 + $0x30] sm:$0xff]
        %v2611 = vld [vmem:[%s15 + $0x38] sm:$0xff]
        %v2612 = vld [vmem:[%s15 + $0x40] sm:$0xff]
        %v2613 = vld [vmem:[%s15 + $0x48] sm:$0xff]
        %v2614 = vld [vmem:[%s15 + $0x50] sm:$0xff]
        %v2615 = vld [vmem:[%s15 + $0x58] sm:$0xff]
        %v2616 = vld [vmem:[%s15 + $0x60] sm:$0xff]
        %v2617 = vld [vmem:[%s15 + $0x68] sm:$0xff]
        %v2618 = vld [vmem:[%s15 + $0x70] sm:$0xff]
        %v2619 = vld [vmem:[%s16] sm:$0x1]
        %vm2620 = vcmask 982016
        %v2622 = vsel %vm2620, %v2603, 0
        %2624 = vmatprep.subr.mxu0 0.0
        %2625 = vmatpush1.msra.mxu0 %v2604
        %2626 = vmatprep.subr.mxu0 0.0
        %2627 = vmatpush1.msra.mxu0 %v2605
        %2628 = vmatprep.subr.mxu0 0.0
        %2629 = vmatpush1.msra.mxu0 %v2606
        %2630 = vmatprep.subr.mxu0 0.0
        %2631 = vmatpush1.msra.mxu0 %v2607
        %2632 = vmatprep.subr.mxu0 0.0
        %2633 = vmatpush1.msra.mxu0 %v2608
        %2634 = vmatprep.subr.mxu0 0.0
        %2635 = vmatpush1.msra.mxu0 %v2609
        %2636 = vmatprep.subr.mxu0 0.0
        %2637 = vmatpush1.msra.mxu0 %v2610
        %2638 = vmatprep.subr.mxu0 0.0
        %2639 = vmatpush1.msra.mxu0 %v2611
        %2640 = vmatprep.subr.mxu0 0.0
        %2641 = vmatpush1.msra.mxu0 %v2612
        %2642 = vmatprep.subr.mxu0 0.0
        %2643 = vmatpush1.msra.mxu0 %v2613
        %2644 = vmatprep.subr.mxu0 0.0
        %2645 = vmatpush1.msra.mxu0 %v2614
        %2646 = vmatprep.subr.mxu0 0.0
        %2647 = vmatpush1.msra.mxu0 %v2615
        %2648 = vmatprep.subr.mxu0 0.0
        %2649 = vmatpush1.msra.mxu0 %v2616
        %2650 = vmatprep.subr.mxu0 0.0
        %2651 = vmatpush1.msra.mxu0 %v2617
        %2652 = vmatprep.subr.mxu0 0.0
        %2653 = vmatpush1.msra.mxu0 %v2618
        %2654 = vmatprep.subr.mxu0 0.0
        %2655 = vmatpush1.msra.mxu0 0.0
        %2656 = vmatprep.subr.mxu0 0.0
        %2657 = vmatpush1.msra.mxu0 0.0
        %2658 = vmatprep.subr.mxu0 0.0
        %2659 = vmatpush1.msra.mxu0 0.0
        %2660 = vmatprep.subr.mxu0 0.0
        %2661 = vmatpush1.msra.mxu0 0.0
        %2662 = vmatprep.subr.mxu0 0.0
        %2663 = vmatpush1.msra.mxu0 0.0
        %2664 = vmatprep.subr.mxu0 0.0
        %2665 = vmatpush1.msra.mxu0 0.0
        %2666 = vmatprep.subr.mxu0 0.0
        %2667 = vmatpush1.msra.mxu0 0.0
        %2668 = vmatprep.subr.mxu0 0.0
        %2669 = vmatpush1.msra.mxu0 0.0
        %2670 = vmatprep.subr.mxu0 0.0
        %2671 = vmatpush1.msra.mxu0 0.0
        %2672 = vmatprep.subr.mxu0 0.0
        %2673 = vmatpush1.msra.mxu0 0.0
        %2674 = vmatprep.subr.mxu0 0.0
        %2675 = vmatpush1.msra.mxu0 0.0
        %2676 = vmatprep.subr.mxu0 0.0
        %2677 = vmatpush1.msra.mxu0 0.0
        %2678 = vmatprep.subr.mxu0 0.0
        %2679 = vmatpush1.msra.mxu0 0.0
        %2680 = vmatprep.subr.mxu0 0.0
        %2681 = vmatpush1.msra.mxu0 0.0
        %2682 = vmatprep.subr.mxu0 0.0
        %2683 = vmatpush1.msra.mxu0 0.0
        %2684 = vmatprep.subr.mxu0 0.0
        %2685 = vmatpush1.msra.mxu0 0.0
        %2686 = vmatprep.subr.mxu0 0.0
        %2687 = vmatpush1.msra.mxu0 0.0
        %2688 = vmatprep.mubr.f32.mxu0 0.0
        %2689 = vmatmul.mubr.f32.gmra.mrb[0].mxu0 %v2622
        %v2690 = vpop.f32.mrb[0].mxu0
        %v2691 = vadd.f32 %v2619, %v2690
        %v2692 = vpop.f32.mrb[0].mxu0
        %2693 = vdwg.mxu0
        %v2694 = vmax.f32 %v2691, 0.0
        %vm2695 = vcmask 679936
        %2696 = vst.msk [vmem:[%s540] sm:$0x1] %vm2695, %v2694
        %s2697 = sand.u32 %s401, 1
        %s2698 = scalar_lea.sflag [#allocation3], %s2697
        %s2699 = sand.u32 %s401, 1
        %s2700 = scalar_lea.vmem [#allocation2], %s2699
        // Predicated region
        $region89: #{cnn_forward.1} parent=87 // pred_check
          %p2701 = pneg %p411
        $region90: #{cnn_forward.1} parent=87 // pred_check_branch
          %2703 = sbr.rel (%p2701) target = $region92
        $region91: #{cnn_forward.1} parent=87 // pred_region
          %s2705 = ssub.s32 16, 16
          %2706 = vsyncadd %s2698, %s2705
          %s2707 = smul.addr %s31, 16
          %s2708 = scalar_lea.hbm %s17, %s2707
          %s2710 = sshll.u32 %s2700, 4
          %s2711 = int_to_ptr.vmem [resolvable:$true] %s2710
          %2713 = dma.vmem_to_hbm [thread:$0]  %s2711, 16, %s2708, %s2698
        $region92: #{cnn_forward.1} parent=87 // pred_fallthru
          _
      $region88: #{cnn_forward.1} parent=5 // pred_fallthru
        _
      %p2714 = scmp.le.s32.totalorder 2, %s26
      // Predicated region
      $region93: #{cnn_forward.1} parent=5 // pred_check
        %p2715 = pneg %p2714
      $region94: #{cnn_forward.1} parent=5 // pred_check_branch
        %2717 = sbr.rel (%p2715) target = $region96
      $region95: #{cnn_forward.1} parent=5 // pred_region
        %s2718 = ssub.s32 %s26, 2
        // Predicated region
        $region97: #{cnn_forward.1} parent=95 // pred_check
          %p2719 = pneg %p417
        $region98: #{cnn_forward.1} parent=95 // pred_check_branch
          %2721 = sbr.rel (%p2719) target = $region100
        $region99: #{cnn_forward.1} parent=95 // pred_region
          %s2722 = sand.u32 %s402, 1
          %s2723 = scalar_lea.sflag [#allocation3], %s2722
          %s2724 = sand.u32 %s402, 1
          %s2725 = scalar_lea.vmem [#allocation2], %s2724
          %2726 = dma.done %s2723, 16
        $region100: #{cnn_forward.1} parent=95 // pred_fallthru
          _
      $region96: #{cnn_forward.1} parent=5 // pred_fallthru
        _
    $region6: #{cnn_forward.1} parent=1 // loop_footer
      %s30 = sadd.s32 1, %s26
    $region7: #{cnn_forward.1} parent=1 // loop_footer_branch
      %25 = sbr.rel target = $region3
    $region8: #{cnn_forward.1} parent=1 // loop_exit
      _
    %2727 = vsyncpa [#allocation3], 1
    %s2728 = scalar_lea.sflag [#allocation3], 1
    %2729 = vsyncpa %s2728, 1

</llo_original>
